<compile_context>
chip_gen: v7x
topology: tpu7x:2x2x1
jax: 0.10.0
libtpu: 0.0.40
codegen_flags: <defaults>
</compile_context>

<pallas_src>
import math

import jax
import jax.numpy as jnp
from jax.experimental import pallas as pl
from jax.experimental.pallas import tpu as pltpu

# ---- model hyper-parameters (small but (8,128)-aligned) ----------------------
B, S, H = 2, 16, 128        # batch, sequence length, hidden (embedding_dim)
NH, HD = 4, 32              # attention heads, head dim
DM = NH * HD                # = 128, lane-dense head-concat width
QKV = 3 * DM                # fused Q|K|V projection width = 384
FF = 256                    # FFN inner dim
VOCAB = 100
N_LAYERS = 2
SCALE = 1.0 / math.sqrt(HD)
EPS = 1e-12                 # BERT-style layernorm eps


# ---- in-kernel helpers (all f32) ---------------------------------------------
def _layernorm(x, g, b):
    mu = jnp.mean(x, axis=-1, keepdims=True)
    var = jnp.mean((x - mu) ** 2, axis=-1, keepdims=True)
    return (x - mu) * jax.lax.rsqrt(var + EPS) * g + b


def _gelu(x):
    # TODO(synk): HF BERT-family checkpoints use exact erf GELU; tanh approx is
    # used here (EUP-friendly), differs by <1e-3.
    return 0.5 * x * (1.0 + jnp.tanh(0.7978845608028654 * (x + 0.044715 * x * x * x)))


# ---- fused per-(batch, layer) kernel -----------------------------------------
# vecs layout per layer (6, H): [bo, ln1_gamma, ln1_beta, b2, ln2_gamma, ln2_beta]
def encoder_kernel(x_emb_ref, amask_ref,
                   wqkv_ref, bqkv_ref, wo_ref,
                   w1_ref, b1_ref, w2_ref, vecs_ref,
                   out_ref, x_scr):
    l = pl.program_id(1)

    # residual stream (S, H) f32 lives in VMEM scratch across the layer axis
    @pl.when(l == 0)
    def _init():
        x_scr[...] = x_emb_ref[...]

    x = x_scr[...]                                   # (S, H) f32
    mask = amask_ref[...]                            # (1, S) f32: 1 real / 0 pad
    neg = ((mask - 1.0) * 1e9).reshape(1, 1, S)      # additive key mask, hoisted

    # ---- fused QKV projection: one lane-dense bf16 MXU matmul, f32 accum ----
    xb = x.astype(jnp.bfloat16)
    qkv = jnp.dot(xb, wqkv_ref[...],
                  preferred_element_type=jnp.float32) + bqkv_ref[...]   # (S, 3*DM)

    # static 128-lane-aligned splits, heads made the leading (batch) einsum dim
    q = jnp.transpose(qkv[:, 0 * DM:1 * DM].reshape(S, NH, HD), (1, 0, 2))  # (NH,S,HD)
    k = jnp.transpose(qkv[:, 1 * DM:2 * DM].reshape(S, NH, HD), (1, 0, 2))
    v = jnp.transpose(qkv[:, 2 * DM:3 * DM].reshape(S, NH, HD), (1, 0, 2))

    # ---- all heads batched in one score einsum ----
    s = jnp.einsum('hqd,hkd->hqk', q.astype(jnp.bfloat16), k.astype(jnp.bfloat16),
                   preferred_element_type=jnp.float32) * SCALE + neg    # (NH, S, S)
    # NOTE: fully-padded query rows become uniform attention; harmless, they are
    # dropped by the pooling mask below (matches HF behaviour).
    s = s - jnp.max(s, axis=-1, keepdims=True)
    p = jnp.exp(s)
    p = p / jnp.sum(p, axis=-1, keepdims=True)       # exact softmax (fidelity vs HF)

    o = jnp.einsum('hqk,hkd->hqd', p.astype(jnp.bfloat16), v.astype(jnp.bfloat16),
                   preferred_element_type=jnp.float32)                  # (NH, S, HD)
    o = jnp.transpose(o, (1, 0, 2)).reshape(S, DM)                      # (S, NH*HD)

    # ---- single dense output projection over the concatenated heads ----
    attn = jnp.dot(o.astype(jnp.bfloat16), wo_ref[...],
                   preferred_element_type=jnp.float32) + vecs_ref[0]    # + bo
    h1 = _layernorm(x + attn, vecs_ref[1], vecs_ref[2])

    # ---- feed-forward (bf16 MXU, f32 elementwise) ----
    ff = _gelu(jnp.dot(h1.astype(jnp.bfloat16), w1_ref[...],
                       preferred_element_type=jnp.float32) + b1_ref[...])
    ff = jnp.dot(ff.astype(jnp.bfloat16), w2_ref[...],
                 preferred_element_type=jnp.float32) + vecs_ref[3]      # + b2
    x_new = _layernorm(h1 + ff, vecs_ref[4], vecs_ref[5])
    x_scr[...] = x_new

    # ---- last layer: masked mean pooling + L2 normalize (lane-dense output) --
    @pl.when(l == pl.num_programs(1) - 1)
    def _finalize():
        summed = jnp.dot(mask, x_new, preferred_element_type=jnp.float32)  # (1, H)
        cnt = jnp.maximum(jnp.sum(mask, axis=-1, keepdims=True), 1e-9)     # (1, 1)
        mean = summed / cnt
        sq = jnp.sum(mean * mean, axis=-1, keepdims=True)
        out_ref[...] = mean * jax.lax.rsqrt(jnp.maximum(sq, 1e-24))


# ---- wrapper (mirrors SentenceTransformerToHF.forward) -----------------------
@jax.jit
def sentence_transformer_forward(input_ids, attention_mask,
                                 emb_table, wqkv, bqkv, wo, w1, b1, w2, vecs):
    # it == 0: HF backbone. The embedding-table gather stays in XLA glue
    # (TODO(synk): could be fused via PrefetchScalarGridSpec + pl.Element gather);
    # encoder stack + Pooling + Normalize run inside ONE pallas_call with a
    # (batch-parallel, layer-arbitrary) grid and streamed per-layer weights.
    x = jnp.take(emb_table, input_ids, axis=0)                    # (B, S, H) f32
    amask = attention_mask.astype(jnp.float32).reshape(B, 1, S)   # attn + pooling mask

    in_specs = [
        pl.BlockSpec((None, S, H), lambda b, l: (b, 0, 0)),       # token embeddings
        pl.BlockSpec((None, 1, S), lambda b, l: (b, 0, 0)),       # mask
        pl.BlockSpec((None, H, QKV), lambda b, l: (l, 0, 0)),     # wqkv  (bf16)
        pl.BlockSpec((None, 1, QKV), lambda b, l: (l, 0, 0)),     # bqkv  (f32)
        pl.BlockSpec((None, DM, H), lambda b, l: (l, 0, 0)),      # wo    (bf16)
        pl.BlockSpec((None, H, FF), lambda b, l: (l, 0, 0)),      # w1    (bf16)
        pl.BlockSpec((None, 1, FF), lambda b, l: (l, 0, 0)),      # b1    (f32)
        pl.BlockSpec((None, FF, H), lambda b, l: (l, 0, 0)),      # w2    (bf16)
        pl.BlockSpec((None, 6, H), lambda b, l: (l, 0, 0)),       # packed vecs (f32)
    ]
    out = pl.pallas_call(
        encoder_kernel,
        out_shape=jax.ShapeDtypeStruct((B, 1, H), jnp.float32),
        grid=(B, N_LAYERS),
        in_specs=in_specs,
        out_specs=pl.BlockSpec((None, 1, H), lambda b, l: (b, 0, 0)),
        scratch_shapes=[pltpu.VMEM((S, H), jnp.float32)],          # residual stream
        compiler_params=pltpu.CompilerParams(
            dimension_semantics=("parallel", "arbitrary"),
            vmem_limit_bytes=64 * 1024 * 1024),
    )(x, amask, wqkv, bqkv, wo, w1, b1, w2, vecs)

    sentence_embedding = out.reshape(B, H)
    return [sentence_embedding]


# ---- parameter init (deterministic, synthetic, pre-fused / bf16 weights) -----
def init_params(key):
    ks = jax.random.split(key, 5)
    emb_table = jax.random.normal(ks[0], (VOCAB, H), jnp.float32) * 0.02

    # fused Q|K|V projection per layer, stored bf16 for the MXU
    wqkv = (jax.random.normal(ks[1], (N_LAYERS, H, QKV), jnp.float32) * 0.02
            ).astype(jnp.bfloat16)
    bqkv = jnp.zeros((N_LAYERS, 1, QKV), jnp.float32)
    # dense attention output projection over concatenated heads
    wo = (jax.random.normal(ks[2], (N_LAYERS, DM, H), jnp.float32) * 0.02
          ).astype(jnp.bfloat16)
    # FFN
    w1 = (jax.random.normal(ks[3], (N_LAYERS, H, FF), jnp.float32) * 0.02
          ).astype(jnp.bfloat16)
    b1 = jnp.zeros((N_LAYERS, 1, FF), jnp.float32)
    w2 = (jax.random.normal(ks[4], (N_LAYERS, FF, H), jnp.float32) * 0.02
          ).astype(jnp.bfloat16)
    # packed (6, H) f32 vectors per layer: [bo, ln1_g, ln1_b, b2, ln2_g, ln2_b]
    per_layer = jnp.stack([
        jnp.zeros(H), jnp.ones(H), jnp.zeros(H),
        jnp.zeros(H), jnp.ones(H), jnp.zeros(H),
    ]).astype(jnp.float32)                                        # (6, H)
    vecs = jnp.tile(per_layer[None], (N_LAYERS, 1, 1))            # (L, 6, H)

    return emb_table, wqkv, bqkv, wo, w1, b1, w2, vecs


if __name__ == "__main__":
    key = jax.random.PRNGKey(0)
    k_par, k_ids = jax.random.split(key)
    params = init_params(k_par)

    input_ids = jax.random.randint(k_ids, (B, S), 0, VOCAB, dtype=jnp.int32)
    # batch 0 fully valid, batch 1 has 11 real tokens + 5 pad
    attention_mask = jnp.array([[1] * S, [1] * 11 + [0] * (S - 11)], dtype=jnp.int32)

    # TODO(synk): HF tokenizer / pretrained checkpoint loading has no Pallas
    # equivalent; synthetic deterministic weights stand in for the backbone.
    out = sentence_transformer_forward(input_ids, attention_mask, *params)
    jax.block_until_ready(out[0])
    assert out[0].shape == (B, H)
    norms = jnp.linalg.norm(out[0], axis=-1)
    assert bool(jnp.all(jnp.abs(norms - 1.0) < 1e-3))   # L2-normalized embeddings
    print("KERNEL_OK")
</pallas_src>

<mosaic_0001>
module attributes {stable_mosaic.version = 11 : i64} {
  func.func @encoder_kernel(%arg0: i32, %arg1: i32, %arg2: memref<1x16x128xf32, #tpu.memory_space<vmem>>, %arg3: memref<1x1x16xf32, #tpu.memory_space<vmem>>, %arg4: memref<1x128x384xbf16, #tpu.memory_space<vmem>>, %arg5: memref<1x1x384xf32, #tpu.memory_space<vmem>>, %arg6: memref<1x128x128xbf16, #tpu.memory_space<vmem>>, %arg7: memref<1x128x256xbf16, #tpu.memory_space<vmem>>, %arg8: memref<1x1x256xf32, #tpu.memory_space<vmem>>, %arg9: memref<1x256x128xbf16, #tpu.memory_space<vmem>>, %arg10: memref<1x6x128xf32, #tpu.memory_space<vmem>>, %arg11: memref<1x1x128xf32, #tpu.memory_space<vmem>>, %arg12: memref<16x128xf32, #tpu.memory_space<vmem>>) attributes {dimension_semantics = [#tpu.dimension_semantics<parallel>, #tpu.dimension_semantics<arbitrary>], iteration_bounds = array<i64: 2, 2>, scalar_prefetch = 0 : i64, scratch_operands = 1 : i64, tpu.core_type = #tpu.core_type<tc>, window_params = [{transform_indices = @transform_0, window_bounds = array<i64: 1, 16, 128>}, {transform_indices = @transform_1, window_bounds = array<i64: 1, 1, 16>}, {transform_indices = @transform_2, window_bounds = array<i64: 1, 128, 384>}, {transform_indices = @transform_3, window_bounds = array<i64: 1, 1, 384>}, {transform_indices = @transform_4, window_bounds = array<i64: 1, 128, 128>}, {transform_indices = @transform_5, window_bounds = array<i64: 1, 128, 256>}, {transform_indices = @transform_6, window_bounds = array<i64: 1, 1, 256>}, {transform_indices = @transform_7, window_bounds = array<i64: 1, 256, 128>}, {transform_indices = @transform_8, window_bounds = array<i64: 1, 6, 128>}, {transform_indices = @transform_9, window_bounds = array<i64: 1, 1, 128>}]} {
    %c0_i32 = arith.constant 0 : i32
    %0 = arith.cmpi eq, %arg1, %c0_i32 : i32
    %1 = arith.extui %0 : i1 to i32
    %c0_i32_0 = arith.constant 0 : i32
    %2 = arith.cmpi ne, %1, %c0_i32_0 : i32
    scf.if %2 {
      %c0_63 = arith.constant 0 : index
      %c0_64 = arith.constant 0 : index
      %c0_65 = arith.constant 0 : index
      %150 = vector.load %arg2[%c0_63, %c0_64, %c0_65] : memref<1x16x128xf32, #tpu.memory_space<vmem>>, vector<1x16x128xf32>
      %151 = vector.shape_cast %150 : vector<1x16x128xf32> to vector<16x128xf32>
      %c0_66 = arith.constant 0 : index
      %c0_67 = arith.constant 0 : index
      %152 = vector.load %arg12[%c0_66, %c0_67] : memref<16x128xf32, #tpu.memory_space<vmem>>, vector<16x128xf32>
      tpu.vector_store %arg12[%c0_66, %c0_67], %151 {strides = array<i32>} : memref<16x128xf32, #tpu.memory_space<vmem>>, vector<16x128xf32>,
    } else {
    }
    %c0 = arith.constant 0 : index
    %c0_1 = arith.constant 0 : index
    %3 = vector.load %arg12[%c0, %c0_1] : memref<16x128xf32, #tpu.memory_space<vmem>>, vector<16x128xf32>
    %c0_2 = arith.constant 0 : index
    %c0_3 = arith.constant 0 : index
    %c0_4 = arith.constant 0 : index
    %4 = vector.load %arg3[%c0_2, %c0_3, %c0_4] : memref<1x1x16xf32, #tpu.memory_space<vmem>>, vector<1x1x16xf32>
    %5 = vector.shape_cast %4 : vector<1x1x16xf32> to vector<1x16xf32>
    %cst = arith.constant 1.000000e+00 : f32
    %6 = vector.broadcast %cst : f32 to vector<1x16xf32>
    %7 = arith.subf %5, %6 : vector<1x16xf32>
    %cst_5 = arith.constant 1.000000e+09 : f32
    %8 = vector.broadcast %cst_5 : f32 to vector<1x16xf32>
    %9 = arith.mulf %7, %8 : vector<1x16xf32>
    %10 = vector.shape_cast %9 : vector<1x16xf32> to vector<1x1x16xf32>
    %11 = arith.truncf %3 : vector<16x128xf32> to vector<16x128xbf16>
    %c0_6 = arith.constant 0 : index
    %c0_7 = arith.constant 0 : index
    %c0_8 = arith.constant 0 : index
    %12 = vector.load %arg4[%c0_6, %c0_7, %c0_8] : memref<1x128x384xbf16, #tpu.memory_space<vmem>>, vector<1x128x384xbf16>
    %13 = vector.shape_cast %12 : vector<1x128x384xbf16> to vector<128x384xbf16>
    %cst_9 = arith.constant dense<0.000000e+00> : vector<16x384xf32>
    %14 = tpu.matmul %11, %13, %cst_9 {dimension_numbers = #tpu.dot_dimension_numbers<[1], [0], [0], [1], [0, 0, 1, 1], [], []>} : vector<16x128xbf16>, vector<128x384xbf16>, vector<16x384xf32> -> vector<16x384xf32>
    %c0_10 = arith.constant 0 : index
    %c0_11 = arith.constant 0 : index
    %c0_12 = arith.constant 0 : index
    %15 = vector.load %arg5[%c0_10, %c0_11, %c0_12] : memref<1x1x384xf32, #tpu.memory_space<vmem>>, vector<1x1x384xf32>
    %16 = vector.shape_cast %15 : vector<1x1x384xf32> to vector<1x384xf32>
    %17 = vector.broadcast %16 : vector<1x384xf32> to vector<16x384xf32>
    %18 = arith.addf %14, %17 : vector<16x384xf32>
    %19 = vector.extract_strided_slice %18 {offsets = [0, 0], sizes = [16, 128], strides = [1, 1]} : vector<16x384xf32> to vector<16x128xf32>
    %20 = vector.shape_cast %19 : vector<16x128xf32> to vector<16x4x32xf32>
    %21 = tpu.transpose %20, [1, 0, 2] : vector<16x4x32xf32> -> vector<4x16x32xf32>
    %22 = vector.extract_strided_slice %18 {offsets = [0, 128], sizes = [16, 128], strides = [1, 1]} : vector<16x384xf32> to vector<16x128xf32>
    %23 = vector.shape_cast %22 : vector<16x128xf32> to vector<16x4x32xf32>
    %24 = tpu.transpose %23, [1, 0, 2] : vector<16x4x32xf32> -> vector<4x16x32xf32>
    %25 = vector.extract_strided_slice %18 {offsets = [0, 256], sizes = [16, 128], strides = [1, 1]} : vector<16x384xf32> to vector<16x128xf32>
    %26 = vector.shape_cast %25 : vector<16x128xf32> to vector<16x4x32xf32>
    %27 = tpu.transpose %26, [1, 0, 2] : vector<16x4x32xf32> -> vector<4x16x32xf32>
    %28 = arith.truncf %21 : vector<4x16x32xf32> to vector<4x16x32xbf16>
    %29 = arith.truncf %24 : vector<4x16x32xf32> to vector<4x16x32xbf16>
    "tpu.trace_start"() <{level = 10 : i32, message = "hqd,hkd->hqk"}> : () -> ()
    %cst_13 = arith.constant dense<0.000000e+00> : vector<4x16x16xf32>
    %30 = tpu.matmul %28, %29, %cst_13 {dimension_numbers = #tpu.dot_dimension_numbers<[2], [2], [1], [1], [0, 0, 0, 1, 1, 1], [0], [0]>} : vector<4x16x32xbf16>, vector<4x16x32xbf16>, vector<4x16x16xf32> -> vector<4x16x16xf32>
    "tpu.trace_stop"() : () -> ()
    %cst_14 = arith.constant 0.176776692 : f32
    %31 = vector.broadcast %cst_14 : f32 to vector<4x16x16xf32>
    %32 = arith.mulf %30, %31 : vector<4x16x16xf32>
    %33 = vector.broadcast %10 : vector<1x1x16xf32> to vector<4x16x16xf32>
    %34 = arith.addf %32, %33 : vector<4x16x16xf32>
    %cst_15 = arith.constant dense<0xFF800000> : vector<4x16xf32>
    %35 = vector.multi_reduction <maximumf>, %34, %cst_15 [2] : vector<4x16x16xf32> to vector<4x16xf32>
    %36 = vector.shape_cast %35 : vector<4x16xf32> to vector<4x16x1xf32>
    %37 = vector.broadcast %36 : vector<4x16x1xf32> to vector<4x16x16xf32>
    %38 = arith.subf %34, %37 : vector<4x16x16xf32>
    %39 = math.exp %38 : vector<4x16x16xf32>
    %cst_16 = arith.constant dense<0.000000e+00> : vector<4x16xf32>
    %40 = vector.multi_reduction <add>, %39, %cst_16 [2] : vector<4x16x16xf32> to vector<4x16xf32>
    %41 = vector.shape_cast %40 : vector<4x16xf32> to vector<4x16x1xf32>
    %42 = vector.broadcast %41 : vector<4x16x1xf32> to vector<4x16x16xf32>
    %43 = arith.divf %39, %42 : vector<4x16x16xf32>
    %44 = arith.truncf %43 : vector<4x16x16xf32> to vector<4x16x16xbf16>
    %45 = arith.truncf %27 : vector<4x16x32xf32> to vector<4x16x32xbf16>
    "tpu.trace_start"() <{level = 10 : i32, message = "hqk,hkd->hqd"}> : () -> ()
    %cst_17 = arith.constant dense<0.000000e+00> : vector<4x16x32xf32>
    %46 = tpu.matmul %44, %45, %cst_17 {dimension_numbers = #tpu.dot_dimension_numbers<[2], [1], [1], [2], [0, 0, 0, 1, 1, 2], [0], [0]>} : vector<4x16x16xbf16>, vector<4x16x32xbf16>, vector<4x16x32xf32> -> vector<4x16x32xf32>
    "tpu.trace_stop"() : () -> ()
    %47 = tpu.transpose %46, [1, 0, 2] : vector<4x16x32xf32> -> vector<16x4x32xf32>
    %48 = vector.shape_cast %47 : vector<16x4x32xf32> to vector<16x128xf32>
    %49 = arith.truncf %48 : vector<16x128xf32> to vector<16x128xbf16>
    %c0_18 = arith.constant 0 : index
    %c0_19 = arith.constant 0 : index
    %c0_20 = arith.constant 0 : index
    %50 = vector.load %arg6[%c0_18, %c0_19, %c0_20] : memref<1x128x128xbf16, #tpu.memory_space<vmem>>, vector<1x128x128xbf16>
    %51 = vector.shape_cast %50 : vector<1x128x128xbf16> to vector<128x128xbf16>
    %cst_21 = arith.constant dense<0.000000e+00> : vector<16x128xf32>
    %52 = tpu.matmul %49, %51, %cst_21 {dimension_numbers = #tpu.dot_dimension_numbers<[1], [0], [0], [1], [0, 0, 1, 1], [], []>} : vector<16x128xbf16>, vector<128x128xbf16>, vector<16x128xf32> -> vector<16x128xf32>
    %c0_22 = arith.constant 0 : index
    %c0_23 = arith.constant 0 : index
    %c0_24 = arith.constant 0 : index
    %53 = vector.load %arg10[%c0_22, %c0_23, %c0_24] : memref<1x6x128xf32, #tpu.memory_space<vmem>>, vector<1x1x128xf32>
    %54 = vector.shape_cast %53 : vector<1x1x128xf32> to vector<128xf32>
    %55 = vector.shape_cast %54 : vector<128xf32> to vector<1x128xf32>
    %56 = vector.broadcast %55 : vector<1x128xf32> to vector<16x128xf32>
    %57 = arith.addf %52, %56 : vector<16x128xf32>
    %58 = arith.addf %3, %57 : vector<16x128xf32>
    %c0_25 = arith.constant 0 : index
    %c1 = arith.constant 1 : index
    %c0_26 = arith.constant 0 : index
    %59 = vector.load %arg10[%c0_25, %c1, %c0_26] : memref<1x6x128xf32, #tpu.memory_space<vmem>>, vector<1x1x128xf32>
    %60 = vector.shape_cast %59 : vector<1x1x128xf32> to vector<128xf32>
    %c0_27 = arith.constant 0 : index
    %c2 = arith.constant 2 : index
    %c0_28 = arith.constant 0 : index
    %61 = vector.load %arg10[%c0_27, %c2, %c0_28] : memref<1x6x128xf32, #tpu.memory_space<vmem>>, vector<1x1x128xf32>
    %62 = vector.shape_cast %61 : vector<1x1x128xf32> to vector<128xf32>
    %cst_29 = arith.constant dense<0.000000e+00> : vector<16xf32>
    %63 = vector.multi_reduction <add>, %58, %cst_29 [1] : vector<16x128xf32> to vector<16xf32>
    %64 = vector.shape_cast %63 : vector<16xf32> to vector<16x1xf32>
    %cst_30 = arith.constant 1.280000e+02 : f32
    %65 = vector.broadcast %cst_30 : f32 to vector<16x1xf32>
    %66 = arith.divf %64, %65 : vector<16x1xf32>
    %67 = vector.broadcast %66 : vector<16x1xf32> to vector<16x128xf32>
    %68 = arith.subf %58, %67 : vector<16x128xf32>
    %69 = arith.mulf %68, %68 : vector<16x128xf32>
    %cst_31 = arith.constant dense<0.000000e+00> : vector<16xf32>
    %70 = vector.multi_reduction <add>, %69, %cst_31 [1] : vector<16x128xf32> to vector<16xf32>
    %71 = vector.shape_cast %70 : vector<16xf32> to vector<16x1xf32>
    %cst_32 = arith.constant 1.280000e+02 : f32
    %72 = vector.broadcast %cst_32 : f32 to vector<16x1xf32>
    %73 = arith.divf %71, %72 : vector<16x1xf32>
    %74 = vector.broadcast %66 : vector<16x1xf32> to vector<16x128xf32>
    %75 = arith.subf %58, %74 : vector<16x128xf32>
    %cst_33 = arith.constant 9.99999996E-13 : f32
    %76 = vector.broadcast %cst_33 : f32 to vector<16x1xf32>
    %77 = arith.addf %73, %76 : vector<16x1xf32>
    %78 = math.rsqrt %77 : vector<16x1xf32>
    %79 = vector.broadcast %78 : vector<16x1xf32> to vector<16x128xf32>
    %80 = arith.mulf %75, %79 : vector<16x128xf32>
    %81 = vector.shape_cast %60 : vector<128xf32> to vector<1x128xf32>
    %82 = vector.broadcast %81 : vector<1x128xf32> to vector<16x128xf32>
    %83 = arith.mulf %80, %82 : vector<16x128xf32>
    %84 = vector.shape_cast %62 : vector<128xf32> to vector<1x128xf32>
    %85 = vector.broadcast %84 : vector<1x128xf32> to vector<16x128xf32>
    %86 = arith.addf %83, %85 : vector<16x128xf32>
    %87 = arith.truncf %86 : vector<16x128xf32> to vector<16x128xbf16>
    %c0_34 = arith.constant 0 : index
    %c0_35 = arith.constant 0 : index
    %c0_36 = arith.constant 0 : index
    %88 = vector.load %arg7[%c0_34, %c0_35, %c0_36] : memref<1x128x256xbf16, #tpu.memory_space<vmem>>, vector<1x128x256xbf16>
    %89 = vector.shape_cast %88 : vector<1x128x256xbf16> to vector<128x256xbf16>
    %cst_37 = arith.constant dense<0.000000e+00> : vector<16x256xf32>
    %90 = tpu.matmul %87, %89, %cst_37 {dimension_numbers = #tpu.dot_dimension_numbers<[1], [0], [0], [1], [0, 0, 1, 1], [], []>} : vector<16x128xbf16>, vector<128x256xbf16>, vector<16x256xf32> -> vector<16x256xf32>
    %c0_38 = arith.constant 0 : index
    %c0_39 = arith.constant 0 : index
    %c0_40 = arith.constant 0 : index
    %91 = vector.load %arg8[%c0_38, %c0_39, %c0_40] : memref<1x1x256xf32, #tpu.memory_space<vmem>>, vector<1x1x256xf32>
    %92 = vector.shape_cast %91 : vector<1x1x256xf32> to vector<1x256xf32>
    %93 = vector.broadcast %92 : vector<1x256xf32> to vector<16x256xf32>
    %94 = arith.addf %90, %93 : vector<16x256xf32>
    %cst_41 = arith.constant 5.000000e-01 : f32
    %95 = vector.broadcast %cst_41 : f32 to vector<16x256xf32>
    %96 = arith.mulf %95, %94 : vector<16x256xf32>
    %cst_42 = arith.constant 4.471500e-02 : f32
    %97 = vector.broadcast %cst_42 : f32 to vector<16x256xf32>
    %98 = arith.mulf %97, %94 : vector<16x256xf32>
    %99 = arith.mulf %98, %94 : vector<16x256xf32>
    %100 = arith.mulf %99, %94 : vector<16x256xf32>
    %101 = arith.addf %94, %100 : vector<16x256xf32>
    %cst_43 = arith.constant 0.797884583 : f32
    %102 = vector.broadcast %cst_43 : f32 to vector<16x256xf32>
    %103 = arith.mulf %102, %101 : vector<16x256xf32>
    %104 = math.tanh %103 : vector<16x256xf32>
    %cst_44 = arith.constant 1.000000e+00 : f32
    %105 = vector.broadcast %cst_44 : f32 to vector<16x256xf32>
    %106 = arith.addf %105, %104 : vector<16x256xf32>
    %107 = arith.mulf %96, %106 : vector<16x256xf32>
    %108 = arith.truncf %107 : vector<16x256xf32> to vector<16x256xbf16>
    %c0_45 = arith.constant 0 : index
    %c0_46 = arith.constant 0 : index
    %c0_47 = arith.constant 0 : index
    %109 = vector.load %arg9[%c0_45, %c0_46, %c0_47] : memref<1x256x128xbf16, #tpu.memory_space<vmem>>, vector<1x256x128xbf16>
    %110 = vector.shape_cast %109 : vector<1x256x128xbf16> to vector<256x128xbf16>
    %cst_48 = arith.constant dense<0.000000e+00> : vector<16x128xf32>
    %111 = tpu.matmul %108, %110, %cst_48 {dimension_numbers = #tpu.dot_dimension_numbers<[1], [0], [0], [1], [0, 0, 1, 1], [], []>} : vector<16x256xbf16>, vector<256x128xbf16>, vector<16x128xf32> -> vector<16x128xf32>
    %c0_49 = arith.constant 0 : index
    %c3 = arith.constant 3 : index
    %c0_50 = arith.constant 0 : index
    %112 = vector.load %arg10[%c0_49, %c3, %c0_50] : memref<1x6x128xf32, #tpu.memory_space<vmem>>, vector<1x1x128xf32>
    %113 = vector.shape_cast %112 : vector<1x1x128xf32> to vector<128xf32>
    %114 = vector.shape_cast %113 : vector<128xf32> to vector<1x128xf32>
    %115 = vector.broadcast %114 : vector<1x128xf32> to vector<16x128xf32>
    %116 = arith.addf %111, %115 : vector<16x128xf32>
    %117 = arith.addf %86, %116 : vector<16x128xf32>
    %c0_51 = arith.constant 0 : index
    %c4 = arith.constant 4 : index
    %c0_52 = arith.constant 0 : index
    %118 = vector.load %arg10[%c0_51, %c4, %c0_52] : memref<1x6x128xf32, #tpu.memory_space<vmem>>, vector<1x1x128xf32>
    %119 = vector.shape_cast %118 : vector<1x1x128xf32> to vector<128xf32>
    %c0_53 = arith.constant 0 : index
    %c5 = arith.constant 5 : index
    %c0_54 = arith.constant 0 : index
    %120 = vector.load %arg10[%c0_53, %c5, %c0_54] : memref<1x6x128xf32, #tpu.memory_space<vmem>>, vector<1x1x128xf32>
    %121 = vector.shape_cast %120 : vector<1x1x128xf32> to vector<128xf32>
    %cst_55 = arith.constant dense<0.000000e+00> : vector<16xf32>
    %122 = vector.multi_reduction <add>, %117, %cst_55 [1] : vector<16x128xf32> to vector<16xf32>
    %123 = vector.shape_cast %122 : vector<16xf32> to vector<16x1xf32>
    %cst_56 = arith.constant 1.280000e+02 : f32
    %124 = vector.broadcast %cst_56 : f32 to vector<16x1xf32>
    %125 = arith.divf %123, %124 : vector<16x1xf32>
    %126 = vector.broadcast %125 : vector<16x1xf32> to vector<16x128xf32>
    %127 = arith.subf %117, %126 : vector<16x128xf32>
    %128 = arith.mulf %127, %127 : vector<16x128xf32>
    %cst_57 = arith.constant dense<0.000000e+00> : vector<16xf32>
    %129 = vector.multi_reduction <add>, %128, %cst_57 [1] : vector<16x128xf32> to vector<16xf32>
    %130 = vector.shape_cast %129 : vector<16xf32> to vector<16x1xf32>
    %cst_58 = arith.constant 1.280000e+02 : f32
    %131 = vector.broadcast %cst_58 : f32 to vector<16x1xf32>
    %132 = arith.divf %130, %131 : vector<16x1xf32>
    %133 = vector.broadcast %125 : vector<16x1xf32> to vector<16x128xf32>
    %134 = arith.subf %117, %133 : vector<16x128xf32>
    %cst_59 = arith.constant 9.99999996E-13 : f32
    %135 = vector.broadcast %cst_59 : f32 to vector<16x1xf32>
    %136 = arith.addf %132, %135 : vector<16x1xf32>
    %137 = math.rsqrt %136 : vector<16x1xf32>
    %138 = vector.broadcast %137 : vector<16x1xf32> to vector<16x128xf32>
    %139 = arith.mulf %134, %138 : vector<16x128xf32>
    %140 = vector.shape_cast %119 : vector<128xf32> to vector<1x128xf32>
    %141 = vector.broadcast %140 : vector<1x128xf32> to vector<16x128xf32>
    %142 = arith.mulf %139, %141 : vector<16x128xf32>
    %143 = vector.shape_cast %121 : vector<128xf32> to vector<1x128xf32>
    %144 = vector.broadcast %143 : vector<1x128xf32> to vector<16x128xf32>
    %145 = arith.addf %142, %144 : vector<16x128xf32>
    %c0_60 = arith.constant 0 : index
    %c0_61 = arith.constant 0 : index
    %146 = vector.load %arg12[%c0_60, %c0_61] : memref<16x128xf32, #tpu.memory_space<vmem>>, vector<16x128xf32>
    tpu.vector_store %arg12[%c0_60, %c0_61], %145 {strides = array<i32>} : memref<16x128xf32, #tpu.memory_space<vmem>>, vector<16x128xf32>,
    %c1_i32 = arith.constant 1 : i32
    %147 = arith.cmpi eq, %arg1, %c1_i32 : i32
    %148 = arith.extui %147 : i1 to i32
    %c0_i32_62 = arith.constant 0 : i32
    %149 = arith.cmpi ne, %148, %c0_i32_62 : i32
    scf.if %149 {
      %cst_63 = arith.constant dense<0.000000e+00> : vector<1x128xf32>
      %150 = tpu.matmul %5, %145, %cst_63 {dimension_numbers = #tpu.dot_dimension_numbers<[1], [0], [0], [1], [0, 0, 1, 1], [], []>} : vector<1x16xf32>, vector<16x128xf32>, vector<1x128xf32> -> vector<1x128xf32>
      %cst_64 = arith.constant dense<0.000000e+00> : vector<1xf32>
      %151 = vector.multi_reduction <add>, %5, %cst_64 [1] : vector<1x16xf32> to vector<1xf32>
      %152 = vector.shape_cast %151 : vector<1xf32> to vector<1x1xf32>
      %cst_65 = arith.constant 9.99999971E-10 : f32
      %153 = vector.broadcast %cst_65 : f32 to vector<1x1xf32>
      %154 = arith.maximumf %152, %153 : vector<1x1xf32>
      %155 = vector.broadcast %154 : vector<1x1xf32> to vector<1x128xf32>
      %156 = arith.divf %150, %155 : vector<1x128xf32>
      %157 = arith.mulf %156, %156 : vector<1x128xf32>
      %cst_66 = arith.constant dense<0.000000e+00> : vector<1xf32>
      %158 = vector.multi_reduction <add>, %157, %cst_66 [1] : vector<1x128xf32> to vector<1xf32>
      %159 = vector.shape_cast %158 : vector<1xf32> to vector<1x1xf32>
      %cst_67 = arith.constant 1.000000e-24 : f32
      %160 = vector.broadcast %cst_67 : f32 to vector<1x1xf32>
      %161 = arith.maximumf %159, %160 : vector<1x1xf32>
      %162 = math.rsqrt %161 : vector<1x1xf32>
      %163 = vector.broadcast %162 : vector<1x1xf32> to vector<1x128xf32>
      %164 = arith.mulf %156, %163 : vector<1x128xf32>
      %c0_68 = arith.constant 0 : index
      %c0_69 = arith.constant 0 : index
      %c0_70 = arith.constant 0 : index
      %165 = vector.load %arg11[%c0_68, %c0_69, %c0_70] : memref<1x1x128xf32, #tpu.memory_space<vmem>>, vector<1x1x128xf32>
      %166 = vector.shape_cast %165 : vector<1x1x128xf32> to vector<1x128xf32>
      %167 = vector.shape_cast %164 : vector<1x128xf32> to vector<1x1x128xf32>
      tpu.vector_store %arg11[%c0_68, %c0_69, %c0_70], %167 {strides = array<i32>} : memref<1x1x128xf32, #tpu.memory_space<vmem>>, vector<1x1x128xf32>,
    } else {
    }
    return
  }
  func.func @transform_0(%arg0: i32, %arg1: i32) -> (i32, i32, i32) {
    %c0_i32 = arith.constant 0 : i32
    %c0_i32_0 = arith.constant 0 : i32
    %c0_i32_1 = arith.constant 0 : i32
    return %arg0, %c0_i32, %c0_i32_0 : i32, i32, i32
  }
  func.func @transform_1(%arg0: i32, %arg1: i32) -> (i32, i32, i32) {
    %c0_i32 = arith.constant 0 : i32
    %c0_i32_0 = arith.constant 0 : i32
    %c0_i32_1 = arith.constant 0 : i32
    return %arg0, %c0_i32, %c0_i32_0 : i32, i32, i32
  }
  func.func @transform_2(%arg0: i32, %arg1: i32) -> (i32, i32, i32) {
    %c0_i32 = arith.constant 0 : i32
    %c0_i32_0 = arith.constant 0 : i32
    %c0_i32_1 = arith.constant 0 : i32
    return %arg1, %c0_i32, %c0_i32_0 : i32, i32, i32
  }
  func.func @transform_3(%arg0: i32, %arg1: i32) -> (i32, i32, i32) {
    %c0_i32 = arith.constant 0 : i32
    %c0_i32_0 = arith.constant 0 : i32
    %c0_i32_1 = arith.constant 0 : i32
    return %arg1, %c0_i32, %c0_i32_0 : i32, i32, i32
  }
  func.func @transform_4(%arg0: i32, %arg1: i32) -> (i32, i32, i32) {
    %c0_i32 = arith.constant 0 : i32
    %c0_i32_0 = arith.constant 0 : i32
    %c0_i32_1 = arith.constant 0 : i32
    return %arg1, %c0_i32, %c0_i32_0 : i32, i32, i32
  }
  func.func @transform_5(%arg0: i32, %arg1: i32) -> (i32, i32, i32) {
    %c0_i32 = arith.constant 0 : i32
    %c0_i32_0 = arith.constant 0 : i32
    %c0_i32_1 = arith.constant 0 : i32
    return %arg1, %c0_i32, %c0_i32_0 : i32, i32, i32
  }
  func.func @transform_6(%arg0: i32, %arg1: i32) -> (i32, i32, i32) {
    %c0_i32 = arith.constant 0 : i32
    %c0_i32_0 = arith.constant 0 : i32
    %c0_i32_1 = arith.constant 0 : i32
    return %arg1, %c0_i32, %c0_i32_0 : i32, i32, i32
  }
  func.func @transform_7(%arg0: i32, %arg1: i32) -> (i32, i32, i32) {
    %c0_i32 = arith.constant 0 : i32
    %c0_i32_0 = arith.constant 0 : i32
    %c0_i32_1 = arith.constant 0 : i32
    return %arg1, %c0_i32, %c0_i32_0 : i32, i32, i32
  }
  func.func @transform_8(%arg0: i32, %arg1: i32) -> (i32, i32, i32) {
    %c0_i32 = arith.constant 0 : i32
    %c0_i32_0 = arith.constant 0 : i32
    %c0_i32_1 = arith.constant 0 : i32
    return %arg1, %c0_i32, %c0_i32_0 : i32, i32, i32
  }
  func.func @transform_9(%arg0: i32, %arg1: i32) -> (i32, i32, i32) {
    %c0_i32 = arith.constant 0 : i32
    %c0_i32_0 = arith.constant 0 : i32
    %c0_i32_1 = arith.constant 0 : i32
    return %arg0, %c0_i32, %c0_i32_0 : i32, i32, i32
  }
}

</mosaic_0001>

<llo_original>
// kernel: sentence_transformer_forward.1
$region0: #{sentence_transformer_forward.1}
  #allocation0 [shape = 'u32[]', space=smem, size = 0x4, offset = 0x4, fixed_abs, tag = 'smem constant byte address 0x4 - core index']
  #allocation1 [shape = 'u32[144,128]{1,0:T(1,128)}', space=vmem, size = 0x12000, scoped, tag = 'internal scratch']
  #allocation2 [shape = 'f32[16,128]{1,0:T(8,128)}', space=vmem, size = 0x2000, scoped, tag = 'scratch operand']
  %s0 = inlined_call_operand.hbm [shape: f32[2,16,128], index: 0, kind: input, shape index: {}]
  %s1 = inlined_call_operand.hbm [shape: f32[2,1,16], index: 1, kind: input, shape index: {}]
  %s2 = inlined_call_operand.hbm [shape: bf16[2,128,384], index: 2, kind: input, shape index: {}]
  %s3 = inlined_call_operand.hbm [shape: f32[2,1,384], index: 3, kind: input, shape index: {}]
  %s4 = inlined_call_operand.hbm [shape: bf16[2,128,128], index: 4, kind: input, shape index: {}]
  %s5 = inlined_call_operand.hbm [shape: bf16[2,128,256], index: 5, kind: input, shape index: {}]
  %s6 = inlined_call_operand.hbm [shape: f32[2,1,256], index: 6, kind: input, shape index: {}]
  %s7 = inlined_call_operand.hbm [shape: bf16[2,256,128], index: 7, kind: input, shape index: {}]
  %s8 = inlined_call_operand.hbm [shape: f32[2,6,128], index: 8, kind: input, shape index: {}]
  %s9 = inlined_call_operand.hbm [shape: f32[2,1,128], index: 9, kind: output, shape index: {}]
  %s10 = sld [smem:[#allocation0]]
  $region113: #{sentence_transformer_forward.1} parent=0
    _
  %s12 = ssub.s32 1, %s10
  %s13 = scalar_select 0, %s12, %s10
  $region1: #{sentence_transformer_forward.1} parent=0
    #allocation3 [shape = 'u8[16384]{0}', space=vmem, size = 0x4000, scoped, tag = 'input window, operand 0']
    #allocation4 [shape = 's32[2]{0}', space=sflag, size = 0x8, scoped, tag = 'scoped memory for sentence_transformer_forward.1']
    #allocation5 [shape = 's32[2]{0}', space=sflag, size = 0x8, scoped, tag = 'scoped memory for sentence_transformer_forward.1']
    #allocation6 [shape = 'u8[1024]{0}', space=vmem, size = 0x400, scoped, tag = 'input window, operand 1']
    #allocation7 [shape = 's32[2]{0}', space=sflag, size = 0x8, scoped, tag = 'scoped memory for sentence_transformer_forward.1']
    #allocation8 [shape = 'u8[196608]{0}', space=vmem, size = 0x30000, scoped, tag = 'input window, operand 2']
    #allocation9 [shape = 'u8[3072]{0}', space=vmem, size = 0xc00, scoped, tag = 'input window, operand 3']
    #allocation10 [shape = 's32[2]{0}', space=sflag, size = 0x8, scoped, tag = 'scoped memory for sentence_transformer_forward.1']
    #allocation11 [shape = 'u8[65536]{0}', space=vmem, size = 0x10000, scoped, tag = 'input window, operand 4']
    #allocation12 [shape = 'u8[131072]{0}', space=vmem, size = 0x20000, scoped, tag = 'input window, operand 5']
    #allocation13 [shape = 's32[2]{0}', space=sflag, size = 0x8, scoped, tag = 'scoped memory for sentence_transformer_forward.1']
    #allocation14 [shape = 'u8[2048]{0}', space=vmem, size = 0x800, scoped, tag = 'input window, operand 6']
    #allocation15 [shape = 'u8[131072]{0}', space=vmem, size = 0x20000, scoped, tag = 'input window, operand 7']
    #allocation16 [shape = 's32[2]{0}', space=sflag, size = 0x8, scoped, tag = 'scoped memory for sentence_transformer_forward.1']
    #allocation17 [shape = 'u8[8192]{0}', space=vmem, size = 0x2000, scoped, tag = 'input window, operand 8']
    #allocation18 [shape = 'u8[1024]{0}', space=vmem, size = 0x400, scoped, tag = 'output window, operand 0']
    %14 = vsyncpa [#allocation4], 0
    %s15 = scalar_lea.sflag [#allocation4], 1
    %16 = vsyncpa %s15, 0
    %17 = vsyncpa [#allocation7], 0
    %s18 = scalar_lea.sflag [#allocation7], 1
    %19 = vsyncpa %s18, 0
    %20 = vsyncpa [#allocation10], 0
    %s21 = scalar_lea.sflag [#allocation10], 1
    %22 = vsyncpa %s21, 0
    %23 = vsyncpa [#allocation13], 0
    %s24 = scalar_lea.sflag [#allocation13], 1
    %25 = vsyncpa %s24, 0
    %26 = vsyncpa [#allocation16], 0
    %s27 = scalar_lea.sflag [#allocation16], 1
    %28 = vsyncpa %s27, 0
    %29 = vsyncpa [#allocation5], 0
    %s30 = scalar_lea.sflag [#allocation5], 1
    %31 = vsyncpa %s30, 0
    loop: start=0, step=1, limit=6
    $region2: #{sentence_transformer_forward.1} parent=1 // loop_pre_header
      _
    $region3: #{sentence_transformer_forward.1} parent=1 // loop_header
      %s33 = sphi 0, %s37
      %p34 = scmp.ge.s32.totalorder %s33, 6
      %s40 = sphi 0, %s52
      %s41 = sphi 0, %s48
      %s42 = sphi 0, %s40
      %s43 = sphi 0, %s41
      %s44 = sphi 0, %s42
      %s45 = sphi 0, %s43
      %s55 = sphi 0, %s57
      %s58 = sphi 0, %s55
      %s59 = sphi 0, %s58
      %s75 = sphi 0, %s59
      %s81 = sphi 0, %s83
      %s84 = sphi 0, %s81
      %s85 = sphi 0, %s84
      %s101 = sphi 0, %s85
      %s107 = sphi 0, %s109
      %s110 = sphi 0, %s107
      %s111 = sphi 0, %s110
      %s127 = sphi 0, %s111
      %s133 = sphi 0, %s135
      %s136 = sphi 0, %s133
      %s137 = sphi 0, %s136
      %s153 = sphi 0, %s137
      %s159 = sphi 0, %s161
      %s162 = sphi 0, %s159
      %s163 = sphi 0, %s162
      %s179 = sphi 0, %s163
      %s185 = sphi 0, %s187
      %s188 = sphi 0, %s185
      %s189 = sphi 0, %s188
      %s205 = sphi 0, %s189
      %s211 = sphi 0, %s213
      %s214 = sphi 0, %s211
      %s215 = sphi 0, %s214
      %s231 = sphi 0, %s215
      %s237 = sphi 0, %s239
      %s240 = sphi 0, %s237
      %s241 = sphi 0, %s240
      %s257 = sphi 0, %s241
      %s263 = sphi 0, %s265
      %s266 = sphi 0, %s263
      %s267 = sphi 0, %s266
      %s283 = sphi 0, %s267
      %s289 = sphi 0, %s291
      %s292 = sphi 0, %s289
      %s293 = sphi 0, %s292
      %s309 = sphi 0, %s293
    $region4: #{sentence_transformer_forward.1} parent=1 // loop_header_branch
      %36 = sbr.rel (%p34) target = $region8
    $region5: #{sentence_transformer_forward.1} parent=1 // loop_body
      %s38 = ssub.s32 %s33, 1
      %s39 = ssub.s32 %s33, 2
      %s46 = sadd.s32 1, %s41
      %p47 = scmp.ge.s32.totalorder %s46, 2
      %s48 = scalar_select %p47, 0, %s46
      %s49 = sadd.s32 1, %s40
      %s50 = scalar_select %p47, %s49, %s40
      %p51 = scmp.ge.s32.totalorder %s50, 2
      %s52 = scalar_select %p51, 0, %s50
      %s53 = ssub.s32 %s40, %s52
      %p54 = scmp.eq.s32.totalorder %s53, 0
      %s56 = sadd.s32 %s55, 1
      %s57 = scalar_select %p54, %s55, %s56
      %p60 = pneg %p54
      %p61 = scmp.eq.s32.totalorder %s33, 3
      %p62 = por %p60, %p61
      %p63 = scmp.ne.s32.totalorder %s55, %s58
      %p64 = scmp.eq.s32.totalorder %s33, 0
      %p65 = por %p63, %p64
      %p66 = scmp.ne.s32.totalorder %s55, %s58
      %p67 = scmp.eq.s32.totalorder %s38, 3
      %p68 = por %p66, %p67
      %p69 = scmp.ne.s32.totalorder %s58, %s59
      %p70 = scmp.eq.s32.totalorder %s38, 0
      %p71 = por %p69, %p70
      %p72 = scmp.ne.s32.totalorder %s58, %s59
      %p73 = scmp.eq.s32.totalorder %s39, 3
      %p74 = por %p72, %p73
      %p76 = scmp.ne.s32.totalorder %s59, %s75
      %p77 = scmp.eq.s32.totalorder %s39, 0
      %p78 = por %p76, %p77
      %s79 = ssub.s32 %s40, %s52
      %p80 = scmp.eq.s32.totalorder %s79, 0
      %s82 = sadd.s32 %s81, 1
      %s83 = scalar_select %p80, %s81, %s82
      %p86 = pneg %p80
      %p87 = scmp.eq.s32.totalorder %s33, 3
      %p88 = por %p86, %p87
      %p89 = scmp.ne.s32.totalorder %s81, %s84
      %p90 = scmp.eq.s32.totalorder %s33, 0
      %p91 = por %p89, %p90
      %p92 = scmp.ne.s32.totalorder %s81, %s84
      %p93 = scmp.eq.s32.totalorder %s38, 3
      %p94 = por %p92, %p93
      %p95 = scmp.ne.s32.totalorder %s84, %s85
      %p96 = scmp.eq.s32.totalorder %s38, 0
      %p97 = por %p95, %p96
      %p98 = scmp.ne.s32.totalorder %s84, %s85
      %p99 = scmp.eq.s32.totalorder %s39, 3
      %p100 = por %p98, %p99
      %p102 = scmp.ne.s32.totalorder %s85, %s101
      %p103 = scmp.eq.s32.totalorder %s39, 0
      %p104 = por %p102, %p103
      %s105 = ssub.s32 %s41, %s48
      %p106 = scmp.eq.s32.totalorder %s105, 0
      %s108 = sadd.s32 %s107, 1
      %s109 = scalar_select %p106, %s107, %s108
      %p112 = pneg %p106
      %p113 = scmp.eq.s32.totalorder %s33, 3
      %p114 = por %p112, %p113
      %p115 = scmp.ne.s32.totalorder %s107, %s110
      %p116 = scmp.eq.s32.totalorder %s33, 0
      %p117 = por %p115, %p116
      %p118 = scmp.ne.s32.totalorder %s107, %s110
      %p119 = scmp.eq.s32.totalorder %s38, 3
      %p120 = por %p118, %p119
      %p121 = scmp.ne.s32.totalorder %s110, %s111
      %p122 = scmp.eq.s32.totalorder %s38, 0
      %p123 = por %p121, %p122
      %p124 = scmp.ne.s32.totalorder %s110, %s111
      %p125 = scmp.eq.s32.totalorder %s39, 3
      %p126 = por %p124, %p125
      %p128 = scmp.ne.s32.totalorder %s111, %s127
      %p129 = scmp.eq.s32.totalorder %s39, 0
      %p130 = por %p128, %p129
      %s131 = ssub.s32 %s41, %s48
      %p132 = scmp.eq.s32.totalorder %s131, 0
      %s134 = sadd.s32 %s133, 1
      %s135 = scalar_select %p132, %s133, %s134
      %p138 = pneg %p132
      %p139 = scmp.eq.s32.totalorder %s33, 3
      %p140 = por %p138, %p139
      %p141 = scmp.ne.s32.totalorder %s133, %s136
      %p142 = scmp.eq.s32.totalorder %s33, 0
      %p143 = por %p141, %p142
      %p144 = scmp.ne.s32.totalorder %s133, %s136
      %p145 = scmp.eq.s32.totalorder %s38, 3
      %p146 = por %p144, %p145
      %p147 = scmp.ne.s32.totalorder %s136, %s137
      %p148 = scmp.eq.s32.totalorder %s38, 0
      %p149 = por %p147, %p148
      %p150 = scmp.ne.s32.totalorder %s136, %s137
      %p151 = scmp.eq.s32.totalorder %s39, 3
      %p152 = por %p150, %p151
      %p154 = scmp.ne.s32.totalorder %s137, %s153
      %p155 = scmp.eq.s32.totalorder %s39, 0
      %p156 = por %p154, %p155
      %s157 = ssub.s32 %s41, %s48
      %p158 = scmp.eq.s32.totalorder %s157, 0
      %s160 = sadd.s32 %s159, 1
      %s161 = scalar_select %p158, %s159, %s160
      %p164 = pneg %p158
      %p165 = scmp.eq.s32.totalorder %s33, 3
      %p166 = por %p164, %p165
      %p167 = scmp.ne.s32.totalorder %s159, %s162
      %p168 = scmp.eq.s32.totalorder %s33, 0
      %p169 = por %p167, %p168
      %p170 = scmp.ne.s32.totalorder %s159, %s162
      %p171 = scmp.eq.s32.totalorder %s38, 3
      %p172 = por %p170, %p171
      %p173 = scmp.ne.s32.totalorder %s162, %s163
      %p174 = scmp.eq.s32.totalorder %s38, 0
      %p175 = por %p173, %p174
      %p176 = scmp.ne.s32.totalorder %s162, %s163
      %p177 = scmp.eq.s32.totalorder %s39, 3
      %p178 = por %p176, %p177
      %p180 = scmp.ne.s32.totalorder %s163, %s179
      %p181 = scmp.eq.s32.totalorder %s39, 0
      %p182 = por %p180, %p181
      %s183 = ssub.s32 %s41, %s48
      %p184 = scmp.eq.s32.totalorder %s183, 0
      %s186 = sadd.s32 %s185, 1
      %s187 = scalar_select %p184, %s185, %s186
      %p190 = pneg %p184
      %p191 = scmp.eq.s32.totalorder %s33, 3
      %p192 = por %p190, %p191
      %p193 = scmp.ne.s32.totalorder %s185, %s188
      %p194 = scmp.eq.s32.totalorder %s33, 0
      %p195 = por %p193, %p194
      %p196 = scmp.ne.s32.totalorder %s185, %s188
      %p197 = scmp.eq.s32.totalorder %s38, 3
      %p198 = por %p196, %p197
      %p199 = scmp.ne.s32.totalorder %s188, %s189
      %p200 = scmp.eq.s32.totalorder %s38, 0
      %p201 = por %p199, %p200
      %p202 = scmp.ne.s32.totalorder %s188, %s189
      %p203 = scmp.eq.s32.totalorder %s39, 3
      %p204 = por %p202, %p203
      %p206 = scmp.ne.s32.totalorder %s189, %s205
      %p207 = scmp.eq.s32.totalorder %s39, 0
      %p208 = por %p206, %p207
      %s209 = ssub.s32 %s41, %s48
      %p210 = scmp.eq.s32.totalorder %s209, 0
      %s212 = sadd.s32 %s211, 1
      %s213 = scalar_select %p210, %s211, %s212
      %p216 = pneg %p210
      %p217 = scmp.eq.s32.totalorder %s33, 3
      %p218 = por %p216, %p217
      %p219 = scmp.ne.s32.totalorder %s211, %s214
      %p220 = scmp.eq.s32.totalorder %s33, 0
      %p221 = por %p219, %p220
      %p222 = scmp.ne.s32.totalorder %s211, %s214
      %p223 = scmp.eq.s32.totalorder %s38, 3
      %p224 = por %p222, %p223
      %p225 = scmp.ne.s32.totalorder %s214, %s215
      %p226 = scmp.eq.s32.totalorder %s38, 0
      %p227 = por %p225, %p226
      %p228 = scmp.ne.s32.totalorder %s214, %s215
      %p229 = scmp.eq.s32.totalorder %s39, 3
      %p230 = por %p228, %p229
      %p232 = scmp.ne.s32.totalorder %s215, %s231
      %p233 = scmp.eq.s32.totalorder %s39, 0
      %p234 = por %p232, %p233
      %s235 = ssub.s32 %s41, %s48
      %p236 = scmp.eq.s32.totalorder %s235, 0
      %s238 = sadd.s32 %s237, 1
      %s239 = scalar_select %p236, %s237, %s238
      %p242 = pneg %p236
      %p243 = scmp.eq.s32.totalorder %s33, 3
      %p244 = por %p242, %p243
      %p245 = scmp.ne.s32.totalorder %s237, %s240
      %p246 = scmp.eq.s32.totalorder %s33, 0
      %p247 = por %p245, %p246
      %p248 = scmp.ne.s32.totalorder %s237, %s240
      %p249 = scmp.eq.s32.totalorder %s38, 3
      %p250 = por %p248, %p249
      %p251 = scmp.ne.s32.totalorder %s240, %s241
      %p252 = scmp.eq.s32.totalorder %s38, 0
      %p253 = por %p251, %p252
      %p254 = scmp.ne.s32.totalorder %s240, %s241
      %p255 = scmp.eq.s32.totalorder %s39, 3
      %p256 = por %p254, %p255
      %p258 = scmp.ne.s32.totalorder %s241, %s257
      %p259 = scmp.eq.s32.totalorder %s39, 0
      %p260 = por %p258, %p259
      %s261 = ssub.s32 %s41, %s48
      %p262 = scmp.eq.s32.totalorder %s261, 0
      %s264 = sadd.s32 %s263, 1
      %s265 = scalar_select %p262, %s263, %s264
      %p268 = pneg %p262
      %p269 = scmp.eq.s32.totalorder %s33, 3
      %p270 = por %p268, %p269
      %p271 = scmp.ne.s32.totalorder %s263, %s266
      %p272 = scmp.eq.s32.totalorder %s33, 0
      %p273 = por %p271, %p272
      %p274 = scmp.ne.s32.totalorder %s263, %s266
      %p275 = scmp.eq.s32.totalorder %s38, 3
      %p276 = por %p274, %p275
      %p277 = scmp.ne.s32.totalorder %s266, %s267
      %p278 = scmp.eq.s32.totalorder %s38, 0
      %p279 = por %p277, %p278
      %p280 = scmp.ne.s32.totalorder %s266, %s267
      %p281 = scmp.eq.s32.totalorder %s39, 3
      %p282 = por %p280, %p281
      %p284 = scmp.ne.s32.totalorder %s267, %s283
      %p285 = scmp.eq.s32.totalorder %s39, 0
      %p286 = por %p284, %p285
      %s287 = ssub.s32 %s40, %s52
      %p288 = scmp.eq.s32.totalorder %s287, 0
      %s290 = sadd.s32 %s289, 1
      %s291 = scalar_select %p288, %s289, %s290
      %p294 = pneg %p288
      %p295 = scmp.eq.s32.totalorder %s33, 3
      %p296 = por %p294, %p295
      %p297 = scmp.ne.s32.totalorder %s289, %s292
      %p298 = scmp.eq.s32.totalorder %s33, 0
      %p299 = por %p297, %p298
      %p300 = scmp.ne.s32.totalorder %s289, %s292
      %p301 = scmp.eq.s32.totalorder %s38, 3
      %p302 = por %p300, %p301
      %p303 = scmp.ne.s32.totalorder %s292, %s293
      %p304 = scmp.eq.s32.totalorder %s38, 0
      %p305 = por %p303, %p304
      %p306 = scmp.ne.s32.totalorder %s292, %s293
      %p307 = scmp.eq.s32.totalorder %s39, 3
      %p308 = por %p306, %p307
      %p310 = scmp.ne.s32.totalorder %s293, %s309
      %p311 = scmp.eq.s32.totalorder %s39, 0
      %p312 = por %p310, %p311
      %p313 = scmp.le.s32.totalorder 1, %s33
      %p314 = scmp.lt.s32.totalorder %s33, 5
      %p315 = pnand %p313, %p314
      %p316 = pneg %p315
      // Predicated region
      $region9: #{sentence_transformer_forward.1} parent=5 // pred_check
        _
      $region10: #{sentence_transformer_forward.1} parent=5 // pred_check_branch
        %318 = sbr.rel (%p315) target = $region12
      $region11: #{sentence_transformer_forward.1} parent=5 // pred_region
        %s319 = ssub.s32 %s33, 1
      $region12: #{sentence_transformer_forward.1} parent=5 // pred_fallthru
        _
      %p320 = scmp.lt.s32.totalorder %s33, 4
      // Predicated region
      $region13: #{sentence_transformer_forward.1} parent=5 // pred_check
        %p321 = pneg %p320
      $region14: #{sentence_transformer_forward.1} parent=5 // pred_check_branch
        %323 = sbr.rel (%p321) target = $region16
      $region15: #{sentence_transformer_forward.1} parent=5 // pred_region
        // Predicated region
        $region17: #{sentence_transformer_forward.1} parent=15 // pred_check
          %p324 = pneg %p65
        $region18: #{sentence_transformer_forward.1} parent=15 // pred_check_branch
          %326 = sbr.rel (%p324) target = $region20
        $region19: #{sentence_transformer_forward.1} parent=15 // pred_region
          %s327 = sand.u32 %s55, 1
          %s328 = scalar_lea.sflag [#allocation4], %s327
          %s329 = sand.u32 %s55, 1
          %s330 = smul.addr %s329, 16
          %s331 = scalar_lea.vmem [#allocation3], %s330
          %s333 = ssub.s32 256, 256
          %334 = vsyncadd %s328, %s333
          %s335 = smul.addr %s40, 2
          %s336 = smul.addr %s335, 128
          %s337 = scalar_lea.hbm %s0, %s336
          %s338 = sshll.u32 %s331, 4
          %s339 = int_to_ptr.vmem [resolvable:$true] %s338
          %344 = dma.hbm_to_vmem [thread:$0]  %s337, 256, %s339, %s328, 128, 128, 8
        $region20: #{sentence_transformer_forward.1} parent=15 // pred_fallthru
          _
        // Predicated region
        $region21: #{sentence_transformer_forward.1} parent=15 // pred_check
          %p345 = pneg %p91
        $region22: #{sentence_transformer_forward.1} parent=15 // pred_check_branch
          %347 = sbr.rel (%p345) target = $region24
        $region23: #{sentence_transformer_forward.1} parent=15 // pred_region
          %s348 = sand.u32 %s33, 1
          %s349 = scalar_lea.sflag [#allocation7], %s348
          %s350 = sand.u32 %s81, 1
          %s351 = scalar_lea.vmem [#allocation6], %s350
          %s353 = ssub.s32 16, 16
          %354 = vsyncadd %s349, %s353
          %s355 = smul.addr %s40, 16
          %s356 = scalar_lea.hbm %s1, %s355
          %s358 = sshll.u32 %s351, 4
          %s359 = int_to_ptr.vmem [resolvable:$true] %s358
          %361 = dma.hbm_to_vmem [thread:$0]  %s356, 16, %s359, %s349
        $region24: #{sentence_transformer_forward.1} parent=15 // pred_fallthru
          _
        // Predicated region
        $region25: #{sentence_transformer_forward.1} parent=15 // pred_check
          %p362 = pneg %p117
        $region26: #{sentence_transformer_forward.1} parent=15 // pred_check_branch
          %364 = sbr.rel (%p362) target = $region28
        $region27: #{sentence_transformer_forward.1} parent=15 // pred_region
          %s365 = sand.u32 %s33, 1
          %s366 = scalar_lea.sflag [#allocation7], %s365
          %s367 = sand.u32 %s107, 1
          %s368 = smul.addr %s367, 192
          %s369 = scalar_lea.vmem [#allocation8], %s368
          %s371 = ssub.s32 3072, 3072
          %372 = vsyncadd %s366, %s371
          %s373 = smul.addr %s41, 48
          %s374 = smul.addr %s373, 64
          %s375 = scalar_lea.hbm %s2, %s374
          %s376 = sshll.u32 %s369, 4
          %s377 = int_to_ptr.vmem [resolvable:$true] %s376
          %382 = dma.hbm_to_vmem [thread:$0]  %s375, 3072, %s377, %s366, 192, 192, 12
        $region28: #{sentence_transformer_forward.1} parent=15 // pred_fallthru
          _
        // Predicated region
        $region29: #{sentence_transformer_forward.1} parent=15 // pred_check
          %p383 = pneg %p143
        $region30: #{sentence_transformer_forward.1} parent=15 // pred_check_branch
          %385 = sbr.rel (%p383) target = $region32
        $region31: #{sentence_transformer_forward.1} parent=15 // pred_region
          %s386 = sand.u32 %s33, 1
          %s387 = scalar_lea.sflag [#allocation10], %s386
          %s388 = sand.u32 %s133, 1
          %s389 = smul.addr %s388, 3
          %s390 = scalar_lea.vmem [#allocation9], %s389
          %s392 = ssub.s32 48, 48
          %393 = vsyncadd %s387, %s392
          %s394 = smul.addr %s41, 3
          %s395 = smul.addr %s394, 16
          %s396 = scalar_lea.hbm %s3, %s395
          %s398 = sshll.u32 %s390, 4
          %s399 = int_to_ptr.vmem [resolvable:$true] %s398
          %401 = dma.hbm_to_vmem [thread:$0]  %s396, 48, %s399, %s387
        $region32: #{sentence_transformer_forward.1} parent=15 // pred_fallthru
          _
        // Predicated region
        $region33: #{sentence_transformer_forward.1} parent=15 // pred_check
          %p402 = pneg %p169
        $region34: #{sentence_transformer_forward.1} parent=15 // pred_check_branch
          %404 = sbr.rel (%p402) target = $region36
        $region35: #{sentence_transformer_forward.1} parent=15 // pred_region
          %s405 = sand.u32 %s33, 1
          %s406 = scalar_lea.sflag [#allocation10], %s405
          %s407 = sand.u32 %s159, 1
          %s408 = smul.addr %s407, 64
          %s409 = scalar_lea.vmem [#allocation11], %s408
          %s411 = ssub.s32 1024, 1024
          %412 = vsyncadd %s406, %s411
          %s413 = smul.addr %s41, 16
          %s414 = smul.addr %s413, 64
          %s415 = scalar_lea.hbm %s4, %s414
          %s416 = sshll.u32 %s409, 4
          %s417 = int_to_ptr.vmem [resolvable:$true] %s416
          %422 = dma.hbm_to_vmem [thread:$0]  %s415, 1024, %s417, %s406, 64, 64, 4
        $region36: #{sentence_transformer_forward.1} parent=15 // pred_fallthru
          _
        // Predicated region
        $region37: #{sentence_transformer_forward.1} parent=15 // pred_check
          %p423 = pneg %p195
        $region38: #{sentence_transformer_forward.1} parent=15 // pred_check_branch
          %425 = sbr.rel (%p423) target = $region40
        $region39: #{sentence_transformer_forward.1} parent=15 // pred_region
          %s426 = sand.u32 %s33, 1
          %s427 = scalar_lea.sflag [#allocation13], %s426
          %s428 = sand.u32 %s185, 1
          %s429 = smul.addr %s428, 128
          %s430 = scalar_lea.vmem [#allocation12], %s429
          %s432 = ssub.s32 2048, 2048
          %433 = vsyncadd %s427, %s432
          %s434 = smul.addr %s41, 32
          %s435 = smul.addr %s434, 64
          %s436 = scalar_lea.hbm %s5, %s435
          %s437 = sshll.u32 %s430, 4
          %s438 = int_to_ptr.vmem [resolvable:$true] %s437
          %443 = dma.hbm_to_vmem [thread:$0]  %s436, 2048, %s438, %s427, 128, 128, 8
        $region40: #{sentence_transformer_forward.1} parent=15 // pred_fallthru
          _
        // Predicated region
        $region41: #{sentence_transformer_forward.1} parent=15 // pred_check
          %p444 = pneg %p221
        $region42: #{sentence_transformer_forward.1} parent=15 // pred_check_branch
          %446 = sbr.rel (%p444) target = $region44
        $region43: #{sentence_transformer_forward.1} parent=15 // pred_region
          %s447 = sand.u32 %s33, 1
          %s448 = scalar_lea.sflag [#allocation13], %s447
          %s449 = sand.u32 %s211, 1
          %s450 = smul.addr %s449, 2
          %s451 = scalar_lea.vmem [#allocation14], %s450
          %s453 = ssub.s32 32, 32
          %454 = vsyncadd %s448, %s453
          %s455 = smul.addr %s41, 2
          %s456 = smul.addr %s455, 16
          %s457 = scalar_lea.hbm %s6, %s456
          %s459 = sshll.u32 %s451, 4
          %s460 = int_to_ptr.vmem [resolvable:$true] %s459
          %462 = dma.hbm_to_vmem [thread:$0]  %s457, 32, %s460, %s448
        $region44: #{sentence_transformer_forward.1} parent=15 // pred_fallthru
          _
        // Predicated region
        $region45: #{sentence_transformer_forward.1} parent=15 // pred_check
          %p463 = pneg %p247
        $region46: #{sentence_transformer_forward.1} parent=15 // pred_check_branch
          %465 = sbr.rel (%p463) target = $region48
        $region47: #{sentence_transformer_forward.1} parent=15 // pred_region
          %s466 = sand.u32 %s33, 1
          %s467 = scalar_lea.sflag [#allocation16], %s466
          %s468 = sand.u32 %s237, 1
          %s469 = smul.addr %s468, 128
          %s470 = scalar_lea.vmem [#allocation15], %s469
          %s472 = ssub.s32 2048, 2048
          %473 = vsyncadd %s467, %s472
          %s474 = smul.addr %s41, 32
          %s475 = smul.addr %s474, 64
          %s476 = scalar_lea.hbm %s7, %s475
          %s477 = sshll.u32 %s470, 4
          %s478 = int_to_ptr.vmem [resolvable:$true] %s477
          %483 = dma.hbm_to_vmem [thread:$0]  %s476, 2048, %s478, %s467, 64, 64, 4
        $region48: #{sentence_transformer_forward.1} parent=15 // pred_fallthru
          _
        // Predicated region
        $region49: #{sentence_transformer_forward.1} parent=15 // pred_check
          %p484 = pneg %p273
        $region50: #{sentence_transformer_forward.1} parent=15 // pred_check_branch
          %486 = sbr.rel (%p484) target = $region52
        $region51: #{sentence_transformer_forward.1} parent=15 // pred_region
          %s487 = sand.u32 %s33, 1
          %s488 = scalar_lea.sflag [#allocation16], %s487
          %s489 = sand.u32 %s263, 1
          %s490 = smul.addr %s489, 8
          %s491 = scalar_lea.vmem [#allocation17], %s490
          %s493 = ssub.s32 128, 128
          %494 = vsyncadd %s488, %s493
          %s495 = smul.addr %s41, 128
          %s496 = scalar_lea.hbm %s8, %s495
          %s498 = sshll.u32 %s491, 4
          %s499 = int_to_ptr.vmem [resolvable:$true] %s498
          %501 = dma.hbm_to_vmem [thread:$0]  %s496, 128, %s499, %s488
        $region52: #{sentence_transformer_forward.1} parent=15 // pred_fallthru
          _
      $region16: #{sentence_transformer_forward.1} parent=5 // pred_fallthru
        _
      %p502 = scmp.le.s32.totalorder 1, %s33
      %p503 = scmp.lt.s32.totalorder %s33, 5
      %p504 = pnand %p502, %p503
      %p505 = pneg %p504
      // Predicated region
      $region53: #{sentence_transformer_forward.1} parent=5 // pred_check
        _
      $region54: #{sentence_transformer_forward.1} parent=5 // pred_check_branch
        %507 = sbr.rel (%p504) target = $region56
      $region55: #{sentence_transformer_forward.1} parent=5 // pred_region
        %s508 = ssub.s32 %s33, 1
        %s509 = sand.u32 %s58, 1
        %s510 = scalar_lea.sflag [#allocation4], %s509
        %s511 = sand.u32 %s58, 1
        %s512 = smul.addr %s511, 16
        %s513 = scalar_lea.vmem [#allocation3], %s512
        // Predicated region
        $region57: #{sentence_transformer_forward.1} parent=55 // pred_check
          %p514 = pneg %p71
        $region58: #{sentence_transformer_forward.1} parent=55 // pred_check_branch
          %516 = sbr.rel (%p514) target = $region60
        $region59: #{sentence_transformer_forward.1} parent=55 // pred_region
          %517 = dma.done %s510, 256
        $region60: #{sentence_transformer_forward.1} parent=55 // pred_fallthru
          _
        %s518 = sand.u32 %s38, 1
        %s519 = scalar_lea.sflag [#allocation7], %s518
        %s520 = sand.u32 %s84, 1
        %s521 = scalar_lea.vmem [#allocation6], %s520
        // Predicated region
        $region61: #{sentence_transformer_forward.1} parent=55 // pred_check
          %p522 = pneg %p97
        $region62: #{sentence_transformer_forward.1} parent=55 // pred_check_branch
          %524 = sbr.rel (%p522) target = $region64
        $region63: #{sentence_transformer_forward.1} parent=55 // pred_region
          %525 = dma.done %s519, 16
        $region64: #{sentence_transformer_forward.1} parent=55 // pred_fallthru
          _
        %s526 = sand.u32 %s38, 1
        %s527 = scalar_lea.sflag [#allocation7], %s526
        %s528 = sand.u32 %s110, 1
        %s529 = smul.addr %s528, 192
        %s530 = scalar_lea.vmem [#allocation8], %s529
        // Predicated region
        $region65: #{sentence_transformer_forward.1} parent=55 // pred_check
          %p531 = pneg %p123
        $region66: #{sentence_transformer_forward.1} parent=55 // pred_check_branch
          %533 = sbr.rel (%p531) target = $region68
        $region67: #{sentence_transformer_forward.1} parent=55 // pred_region
          %534 = dma.done %s527, 3072
        $region68: #{sentence_transformer_forward.1} parent=55 // pred_fallthru
          _
        %s535 = sand.u32 %s38, 1
        %s536 = scalar_lea.sflag [#allocation10], %s535
        %s537 = sand.u32 %s136, 1
        %s538 = smul.addr %s537, 3
        %s539 = scalar_lea.vmem [#allocation9], %s538
        // Predicated region
        $region69: #{sentence_transformer_forward.1} parent=55 // pred_check
          %p540 = pneg %p149
        $region70: #{sentence_transformer_forward.1} parent=55 // pred_check_branch
          %542 = sbr.rel (%p540) target = $region72
        $region71: #{sentence_transformer_forward.1} parent=55 // pred_region
          %543 = dma.done %s536, 48
        $region72: #{sentence_transformer_forward.1} parent=55 // pred_fallthru
          _
        %s544 = sand.u32 %s38, 1
        %s545 = scalar_lea.sflag [#allocation10], %s544
        %s546 = sand.u32 %s162, 1
        %s547 = smul.addr %s546, 64
        %s548 = scalar_lea.vmem [#allocation11], %s547
        // Predicated region
        $region73: #{sentence_transformer_forward.1} parent=55 // pred_check
          %p549 = pneg %p175
        $region74: #{sentence_transformer_forward.1} parent=55 // pred_check_branch
          %551 = sbr.rel (%p549) target = $region76
        $region75: #{sentence_transformer_forward.1} parent=55 // pred_region
          %552 = dma.done %s545, 1024
        $region76: #{sentence_transformer_forward.1} parent=55 // pred_fallthru
          _
        %s553 = sand.u32 %s38, 1
        %s554 = scalar_lea.sflag [#allocation13], %s553
        %s555 = sand.u32 %s188, 1
        %s556 = smul.addr %s555, 128
        %s557 = scalar_lea.vmem [#allocation12], %s556
        // Predicated region
        $region77: #{sentence_transformer_forward.1} parent=55 // pred_check
          %p558 = pneg %p201
        $region78: #{sentence_transformer_forward.1} parent=55 // pred_check_branch
          %560 = sbr.rel (%p558) target = $region80
        $region79: #{sentence_transformer_forward.1} parent=55 // pred_region
          %561 = dma.done %s554, 2048
        $region80: #{sentence_transformer_forward.1} parent=55 // pred_fallthru
          _
        %s562 = sand.u32 %s38, 1
        %s563 = scalar_lea.sflag [#allocation13], %s562
        %s564 = sand.u32 %s214, 1
        %s565 = smul.addr %s564, 2
        %s566 = scalar_lea.vmem [#allocation14], %s565
        // Predicated region
        $region81: #{sentence_transformer_forward.1} parent=55 // pred_check
          %p567 = pneg %p227
        $region82: #{sentence_transformer_forward.1} parent=55 // pred_check_branch
          %569 = sbr.rel (%p567) target = $region84
        $region83: #{sentence_transformer_forward.1} parent=55 // pred_region
          %570 = dma.done %s563, 32
        $region84: #{sentence_transformer_forward.1} parent=55 // pred_fallthru
          _
        %s571 = sand.u32 %s38, 1
        %s572 = scalar_lea.sflag [#allocation16], %s571
        %s573 = sand.u32 %s240, 1
        %s574 = smul.addr %s573, 128
        %s575 = scalar_lea.vmem [#allocation15], %s574
        // Predicated region
        $region85: #{sentence_transformer_forward.1} parent=55 // pred_check
          %p576 = pneg %p253
        $region86: #{sentence_transformer_forward.1} parent=55 // pred_check_branch
          %578 = sbr.rel (%p576) target = $region88
        $region87: #{sentence_transformer_forward.1} parent=55 // pred_region
          %579 = dma.done %s572, 2048
        $region88: #{sentence_transformer_forward.1} parent=55 // pred_fallthru
          _
        %s580 = sand.u32 %s38, 1
        %s581 = scalar_lea.sflag [#allocation16], %s580
        %s582 = sand.u32 %s266, 1
        %s583 = smul.addr %s582, 8
        %s584 = scalar_lea.vmem [#allocation17], %s583
        // Predicated region
        $region89: #{sentence_transformer_forward.1} parent=55 // pred_check
          %p585 = pneg %p279
        $region90: #{sentence_transformer_forward.1} parent=55 // pred_check_branch
          %587 = sbr.rel (%p585) target = $region92
        $region91: #{sentence_transformer_forward.1} parent=55 // pred_region
          %588 = dma.done %s581, 128
        $region92: #{sentence_transformer_forward.1} parent=55 // pred_fallthru
          _
        %s589 = sand.u32 %s58, 1
        %s590 = scalar_lea.sflag [#allocation4], %s589
        %s591 = sand.u32 %s58, 1
        %s592 = smul.addr %s591, 16
        %s593 = scalar_lea.vmem [#allocation3], %s592
        %p594 = pneg %p71
        %p595 = pneg %p68
        %s596 = sand.u32 %s38, 1
        %s597 = scalar_lea.sflag [#allocation7], %s596
        %s598 = sand.u32 %s84, 1
        %s599 = scalar_lea.vmem [#allocation6], %s598
        %p600 = pneg %p97
        %p601 = pneg %p94
        %s602 = sand.u32 %s38, 1
        %s603 = scalar_lea.sflag [#allocation7], %s602
        %s604 = sand.u32 %s110, 1
        %s605 = smul.addr %s604, 192
        %s606 = scalar_lea.vmem [#allocation8], %s605
        %p607 = pneg %p123
        %p608 = pneg %p120
        %s609 = sand.u32 %s38, 1
        %s610 = scalar_lea.sflag [#allocation10], %s609
        %s611 = sand.u32 %s136, 1
        %s612 = smul.addr %s611, 3
        %s613 = scalar_lea.vmem [#allocation9], %s612
        %p614 = pneg %p149
        %p615 = pneg %p146
        %s616 = sand.u32 %s38, 1
        %s617 = scalar_lea.sflag [#allocation10], %s616
        %s618 = sand.u32 %s162, 1
        %s619 = smul.addr %s618, 64
        %s620 = scalar_lea.vmem [#allocation11], %s619
        %p621 = pneg %p175
        %p622 = pneg %p172
        %s623 = sand.u32 %s38, 1
        %s624 = scalar_lea.sflag [#allocation13], %s623
        %s625 = sand.u32 %s188, 1
        %s626 = smul.addr %s625, 128
        %s627 = scalar_lea.vmem [#allocation12], %s626
        %p628 = pneg %p201
        %p629 = pneg %p198
        %s630 = sand.u32 %s38, 1
        %s631 = scalar_lea.sflag [#allocation13], %s630
        %s632 = sand.u32 %s214, 1
        %s633 = smul.addr %s632, 2
        %s634 = scalar_lea.vmem [#allocation14], %s633
        %p635 = pneg %p227
        %p636 = pneg %p224
        %s637 = sand.u32 %s38, 1
        %s638 = scalar_lea.sflag [#allocation16], %s637
        %s639 = sand.u32 %s240, 1
        %s640 = smul.addr %s639, 128
        %s641 = scalar_lea.vmem [#allocation15], %s640
        %p642 = pneg %p253
        %p643 = pneg %p250
        %s644 = sand.u32 %s38, 1
        %s645 = scalar_lea.sflag [#allocation16], %s644
        %s646 = sand.u32 %s266, 1
        %s647 = smul.addr %s646, 8
        %s648 = scalar_lea.vmem [#allocation17], %s647
        %p649 = pneg %p279
        %p650 = pneg %p276
        %p651 = pneg %p305
        %p652 = pneg %p302
        %s653 = sand.u32 %s292, 1
        %s654 = scalar_lea.sflag [#allocation5], %s653
        %s655 = sand.u32 %s292, 1
        %s656 = scalar_lea.vmem [#allocation18], %s655
        %p658 = scmp.eq.s32.totalorder %s43, 0
        // Predicated region
        $region93: #{sentence_transformer_forward.1} parent=55 // pred_check
          %p659 = pneg %p658
        $region94: #{sentence_transformer_forward.1} parent=55 // pred_check_branch
          %661 = sbr.rel (%p659) target = $region96
        $region95: #{sentence_transformer_forward.1} parent=55 // pred_region
          %v662 = vld [vmem:[%s513] sm:$0xff]
          %v663 = vld [vmem:[%s513 + $0x8] sm:$0xff]
          %664 = vst [vmem:[#allocation2] sm:$0xff] %v662
          %665 = vst [vmem:[#allocation2 + $0x8] sm:$0xff] %v663
        $region96: #{sentence_transformer_forward.1} parent=55 // pred_fallthru
          _
        %v666 = vld [vmem:[#allocation2] sm:$0xff]
        %v667 = vld [vmem:[#allocation2 + $0x8] sm:$0xff]
        %v668 = vld [vmem:[%s521] sm:$0x1]
        %v669 = vsub.f32 %v668, 1.0
        %v670 = vmul.f32 %v669, 1e+09
        %v671 = vpack.c.bf16 %v667, %v666
        %v672 = vld [vmem:[%s530] sm:$0xff]
        %v673 = vld [vmem:[%s530 + $0x8] sm:$0xf]
        %v674 = vld [vmem:[%s530 + $0xc] sm:$0xff]
        %v675 = vld [vmem:[%s530 + $0x14] sm:$0xf]
        %v676 = vld [vmem:[%s530 + $0x18] sm:$0xff]
        %v677 = vld [vmem:[%s530 + $0x20] sm:$0xf]
        %v678 = vld [vmem:[%s530 + $0x24] sm:$0xff]
        %v679 = vld [vmem:[%s530 + $0x2c] sm:$0xf]
        %v680 = vld [vmem:[%s530 + $0x30] sm:$0xff]
        %v681 = vld [vmem:[%s530 + $0x38] sm:$0xf]
        %v682 = vld [vmem:[%s530 + $0x3c] sm:$0xff]
        %v683 = vld [vmem:[%s530 + $0x44] sm:$0xf]
        %v684 = vld [vmem:[%s530 + $0x48] sm:$0xff]
        %v685 = vld [vmem:[%s530 + $0x50] sm:$0xf]
        %v686 = vld [vmem:[%s530 + $0x54] sm:$0xff]
        %v687 = vld [vmem:[%s530 + $0x5c] sm:$0xf]
        %v688 = vld [vmem:[%s530 + $0x60] sm:$0xff]
        %v689 = vld [vmem:[%s530 + $0x68] sm:$0xf]
        %v690 = vld [vmem:[%s530 + $0x6c] sm:$0xff]
        %v691 = vld [vmem:[%s530 + $0x74] sm:$0xf]
        %v692 = vld [vmem:[%s530 + $0x78] sm:$0xff]
        %v693 = vld [vmem:[%s530 + $0x80] sm:$0xf]
        %v694 = vld [vmem:[%s530 + $0x84] sm:$0xff]
        %v695 = vld [vmem:[%s530 + $0x8c] sm:$0xf]
        %v696 = vld [vmem:[%s530 + $0x90] sm:$0xff]
        %v697 = vld [vmem:[%s530 + $0x98] sm:$0xf]
        %v698 = vld [vmem:[%s530 + $0x9c] sm:$0xff]
        %v699 = vld [vmem:[%s530 + $0xa4] sm:$0xf]
        %v700 = vld [vmem:[%s530 + $0xa8] sm:$0xff]
        %v701 = vld [vmem:[%s530 + $0xb0] sm:$0xf]
        %v702 = vld [vmem:[%s530 + $0xb4] sm:$0xff]
        %v703 = vld [vmem:[%s530 + $0xbc] sm:$0xf]
        %v704 = vld [vmem:[%s539] sm:$0x7]
        %v706 = vlaneseq
        %v707 = vshrl.u32 %v706, 7
        %v708 = vsub.s32 0, %v707
        %v709 = vrot.slane %v704, %v708
        %v710 = vlaneseq
        %v711 = vshrl.u32 %v710, 7
        %v712 = vsub.s32 1, %v711
        %v713 = vrot.slane %v704, %v712
        %v714 = vlaneseq
        %v715 = vshrl.u32 %v714, 7
        %v716 = vsub.s32 2, %v715
        %v717 = vrot.slane %v704, %v716
        %v753 = vunpack.c.l.b16 %v672
        %v754 = vunpack.c.h.b16 %v672
        %v755 = vunpack.c.l.b16 %v673
        %v756 = vunpack.c.l.b16 %v674
        %v757 = vunpack.c.h.b16 %v674
        %v758 = vunpack.c.l.b16 %v675
        %v759 = vunpack.c.l.b16 %v676
        %v760 = vunpack.c.h.b16 %v676
        %v761 = vunpack.c.l.b16 %v677
        %v762 = vunpack.c.l.b16 %v678
        %v763 = vunpack.c.h.b16 %v678
        %v764 = vunpack.c.l.b16 %v679
        %v765 = vunpack.c.l.b16 %v680
        %v766 = vunpack.c.h.b16 %v680
        %v767 = vunpack.c.l.b16 %v681
        %v768 = vunpack.c.l.b16 %v682
        %v769 = vunpack.c.h.b16 %v682
        %v770 = vunpack.c.l.b16 %v683
        %v771 = vunpack.c.l.b16 %v684
        %v772 = vunpack.c.h.b16 %v684
        %v773 = vunpack.c.l.b16 %v685
        %v774 = vunpack.c.l.b16 %v686
        %v775 = vunpack.c.h.b16 %v686
        %v776 = vunpack.c.l.b16 %v687
        %v777 = vunpack.c.l.b16 %v688
        %v778 = vunpack.c.h.b16 %v688
        %v779 = vunpack.c.l.b16 %v689
        %v780 = vunpack.c.l.b16 %v690
        %v781 = vunpack.c.h.b16 %v690
        %v782 = vunpack.c.l.b16 %v691
        %v783 = vunpack.c.l.b16 %v692
        %v784 = vunpack.c.h.b16 %v692
        %v785 = vunpack.c.l.b16 %v693
        %v786 = vunpack.c.l.b16 %v694
        %v787 = vunpack.c.h.b16 %v694
        %v788 = vunpack.c.l.b16 %v695
        %v789 = vunpack.c.l.b16 %v696
        %v790 = vunpack.c.h.b16 %v696
        %v791 = vunpack.c.l.b16 %v697
        %v792 = vunpack.c.l.b16 %v698
        %v793 = vunpack.c.h.b16 %v698
        %v794 = vunpack.c.l.b16 %v699
        %v795 = vunpack.c.l.b16 %v700
        %v796 = vunpack.c.h.b16 %v700
        %v797 = vunpack.c.l.b16 %v701
        %v798 = vunpack.c.l.b16 %v702
        %v799 = vunpack.c.h.b16 %v702
        %v800 = vunpack.c.l.b16 %v703
        %v801 = vpack.c.b16 %v756, %v753
        %v802 = vpack.c.b16 %v757, %v754
        %v803 = vpack.c.b16 %v758, %v755
        %v804 = vpack.c.b16 %v762, %v759
        %v805 = vpack.c.b16 %v763, %v760
        %v806 = vpack.c.b16 %v764, %v761
        %v807 = vpack.c.b16 %v768, %v765
        %v808 = vpack.c.b16 %v769, %v766
        %v809 = vpack.c.b16 %v770, %v767
        %v810 = vpack.c.b16 %v774, %v771
        %v811 = vpack.c.b16 %v775, %v772
        %v812 = vpack.c.b16 %v776, %v773
        %v813 = vpack.c.b16 %v780, %v777
        %v814 = vpack.c.b16 %v781, %v778
        %v815 = vpack.c.b16 %v782, %v779
        %v816 = vpack.c.b16 %v786, %v783
        %v817 = vpack.c.b16 %v787, %v784
        %v818 = vpack.c.b16 %v788, %v785
        %v819 = vpack.c.b16 %v792, %v789
        %v820 = vpack.c.b16 %v793, %v790
        %v821 = vpack.c.b16 %v794, %v791
        %v822 = vpack.c.b16 %v798, %v795
        %v823 = vpack.c.b16 %v799, %v796
        %v824 = vpack.c.b16 %v800, %v797
        %849 = vmatprep.subr.bf16.mxu0 %v802
        %850 = vmatpush1.bf16.msra.mxu0 %v801
        %851 = vmatprep.subr.bf16.mxu0 %v805
        %852 = vmatpush1.bf16.msra.mxu0 %v804
        %853 = vmatprep.subr.bf16.mxu0 %v808
        %854 = vmatpush1.bf16.msra.mxu0 %v807
        %855 = vmatprep.subr.bf16.mxu0 %v811
        %856 = vmatpush1.bf16.msra.mxu0 %v810
        %857 = vmatprep.subr.bf16.mxu0 %v814
        %858 = vmatpush1.bf16.msra.mxu0 %v813
        %859 = vmatprep.subr.bf16.mxu0 %v817
        %860 = vmatpush1.bf16.msra.mxu0 %v816
        %861 = vmatprep.subr.bf16.mxu0 %v820
        %862 = vmatpush1.bf16.msra.mxu0 %v819
        %863 = vmatprep.subr.bf16.mxu0 %v823
        %864 = vmatpush1.bf16.msra.mxu0 %v822
        %865 = vmatprep.subr.bf16.mxu0 0
        %866 = vmatpush1.bf16.msra.mxu0 0
        %867 = vmatprep.subr.bf16.mxu0 0
        %868 = vmatpush1.bf16.msra.mxu0 0
        %869 = vmatprep.subr.bf16.mxu0 0
        %870 = vmatpush1.bf16.msra.mxu0 0
        %871 = vmatprep.subr.bf16.mxu0 0
        %872 = vmatpush1.bf16.msra.mxu0 0
        %873 = vmatprep.subr.bf16.mxu0 0
        %874 = vmatpush1.bf16.msra.mxu0 0
        %875 = vmatprep.subr.bf16.mxu0 0
        %876 = vmatpush1.bf16.msra.mxu0 0
        %877 = vmatprep.subr.bf16.mxu0 0
        %878 = vmatpush1.bf16.msra.mxu0 0
        %879 = vmatprep.subr.bf16.mxu0 0
        %880 = vmatpush1.bf16.msra.mxu0 0
        %881 = vmatprep.mubr.bf16.mxu0 0
        %882 = vmatmul.mubr.bf16.gmra.mrb[0].mxu0 %v671
        %v883 = vpop.f32.mrb[0].mxu0
        %v884 = vadd.f32 %v709, %v883
        %v885 = vpop.f32.mrb[0].mxu0
        %v886 = vadd.f32 %v713, %v885
        %v887 = vpop.f32.mrb[0].mxu0
        %v888 = vadd.f32 %v709, %v887
        %v889 = vpop.f32.mrb[0].mxu0
        %v890 = vadd.f32 %v713, %v889
        %891 = vdwg.mxu0
        %892 = vmatprep.subr.bf16.mxu0 0
        %893 = vmatpush1.bf16.msra.mxu0 %v803
        %894 = vmatprep.subr.bf16.mxu0 0
        %895 = vmatpush1.bf16.msra.mxu0 %v806
        %896 = vmatprep.subr.bf16.mxu0 0
        %897 = vmatpush1.bf16.msra.mxu0 %v809
        %898 = vmatprep.subr.bf16.mxu0 0
        %899 = vmatpush1.bf16.msra.mxu0 %v812
        %900 = vmatprep.subr.bf16.mxu0 0
        %901 = vmatpush1.bf16.msra.mxu0 %v815
        %902 = vmatprep.subr.bf16.mxu0 0
        %903 = vmatpush1.bf16.msra.mxu0 %v818
        %904 = vmatprep.subr.bf16.mxu0 0
        %905 = vmatpush1.bf16.msra.mxu0 %v821
        %906 = vmatprep.subr.bf16.mxu0 0
        %907 = vmatpush1.bf16.msra.mxu0 %v824
        %908 = vmatprep.subr.bf16.mxu0 0
        %909 = vmatpush1.bf16.msra.mxu0 0
        %910 = vmatprep.subr.bf16.mxu0 0
        %911 = vmatpush1.bf16.msra.mxu0 0
        %912 = vmatprep.subr.bf16.mxu0 0
        %913 = vmatpush1.bf16.msra.mxu0 0
        %914 = vmatprep.subr.bf16.mxu0 0
        %915 = vmatpush1.bf16.msra.mxu0 0
        %916 = vmatprep.subr.bf16.mxu0 0
        %917 = vmatpush1.bf16.msra.mxu0 0
        %918 = vmatprep.subr.bf16.mxu0 0
        %919 = vmatpush1.bf16.msra.mxu0 0
        %920 = vmatprep.subr.bf16.mxu0 0
        %921 = vmatpush1.bf16.msra.mxu0 0
        %922 = vmatprep.subr.bf16.mxu0 0
        %923 = vmatpush1.bf16.msra.mxu0 0
        %924 = vmatprep.mubr.bf16.mxu0 0
        %925 = vmatmul.mubr.bf16.gmra.mrb[0].mxu0 %v671
        %v926 = vpop.f32.mrb[0].mxu0
        %v927 = vadd.f32 %v717, %v926
        %v928 = vpop.f32.mrb[0].mxu0
        %v929 = vpop.f32.mrb[0].mxu0
        %v930 = vadd.f32 %v717, %v929
        %v931 = vpop.f32.mrb[0].mxu0
        %932 = vdwg.mxu0
        %935 = vrot.lane.b32.xlu0 %v884, 96
        %v936 = vpop.permute.xlu0 %935
        %937 = vrot.lane.b32.xlu0 %v888, 96
        %v938 = vpop.permute.xlu0 %937
        %941 = vrot.lane.b32.xlu0 %v884, 64
        %v942 = vpop.permute.xlu0 %941
        %943 = vrot.lane.b32.xlu0 %v888, 64
        %v944 = vpop.permute.xlu0 %943
        %947 = vrot.lane.b32.xlu0 %v884, 32
        %v948 = vpop.permute.xlu0 %947
        %949 = vrot.lane.b32.xlu0 %v888, 32
        %v950 = vpop.permute.xlu0 %949
        %v953 = vcombine.low %v884, %v942
        %v954 = vcombine.high %v884, %v942
        %v956 = vunpack.c.l.s4 1983009808
        %v957 = vunpack.c.0.s8 %v956
        %v958 = vlaneseq
        %v959 = vshrl.u32 %v958, 7
        %v960 = vsub.s32 %v957, %v959
        %v961 = vrot.slane %v953, %v960
        %v963 = vunpack.c.l.s4 1983009808
        %v964 = vunpack.c.0.s8 %v963
        %v965 = vlaneseq
        %v966 = vshrl.u32 %v965, 7
        %v967 = vsub.s32 %v964, %v966
        %v968 = vrot.slane %v954, %v967
        %v969 = vcombine.low %v936, %v948
        %v970 = vcombine.high %v936, %v948
        %v972 = vunpack.c.l.s4 1983009808
        %v973 = vunpack.c.0.s8 %v972
        %v974 = vlaneseq
        %v975 = vshrl.u32 %v974, 7
        %v976 = vsub.s32 %v973, %v975
        %v977 = vrot.slane %v969, %v976
        %v979 = vunpack.c.l.s4 1983009808
        %v980 = vunpack.c.0.s8 %v979
        %v981 = vlaneseq
        %v982 = vshrl.u32 %v981, 7
        %v983 = vsub.s32 %v980, %v982
        %v984 = vrot.slane %v970, %v983
        %v985 = vcombine.low %v961, %v977
        %v986 = vcombine.high %v961, %v977
        %v988 = vunpack.c.l.s4 1934713408
        %v989 = vunpack.c.0.s8 %v988
        %v990 = vlaneseq
        %v991 = vshrl.u32 %v990, 7
        %v992 = vsub.s32 %v989, %v991
        %v993 = vrot.slane %v985, %v992
        %v995 = vunpack.c.l.s4 1934713408
        %v996 = vunpack.c.0.s8 %v995
        %v997 = vlaneseq
        %v998 = vshrl.u32 %v997, 7
        %v999 = vsub.s32 %v996, %v998
        %v1000 = vrot.slane %v986, %v999
        %v1001 = vcombine.low %v968, %v984
        %v1002 = vcombine.high %v968, %v984
        %v1004 = vunpack.c.l.s4 1934713408
        %v1005 = vunpack.c.0.s8 %v1004
        %v1006 = vlaneseq
        %v1007 = vshrl.u32 %v1006, 7
        %v1008 = vsub.s32 %v1005, %v1007
        %v1009 = vrot.slane %v1001, %v1008
        %v1011 = vunpack.c.l.s4 1934713408
        %v1012 = vunpack.c.0.s8 %v1011
        %v1013 = vlaneseq
        %v1014 = vshrl.u32 %v1013, 7
        %v1015 = vsub.s32 %v1012, %v1014
        %v1016 = vrot.slane %v1002, %v1015
        %v1017 = vcombine.high %v993, 0.0
        %v1018 = vcombine.high %v1000, 0.0
        %v1019 = vcombine.high %v1009, 0.0
        %v1020 = vcombine.high %v1016, 0.0
        %v1021 = vcombine.low %v888, %v944
        %v1022 = vcombine.high %v888, %v944
        %v1024 = vunpack.c.l.s4 1983009808
        %v1025 = vunpack.c.0.s8 %v1024
        %v1026 = vlaneseq
        %v1027 = vshrl.u32 %v1026, 7
        %v1028 = vsub.s32 %v1025, %v1027
        %v1029 = vrot.slane %v1021, %v1028
        %v1031 = vunpack.c.l.s4 1983009808
        %v1032 = vunpack.c.0.s8 %v1031
        %v1033 = vlaneseq
        %v1034 = vshrl.u32 %v1033, 7
        %v1035 = vsub.s32 %v1032, %v1034
        %v1036 = vrot.slane %v1022, %v1035
        %v1037 = vcombine.low %v938, %v950
        %v1038 = vcombine.high %v938, %v950
        %v1040 = vunpack.c.l.s4 1983009808
        %v1041 = vunpack.c.0.s8 %v1040
        %v1042 = vlaneseq
        %v1043 = vshrl.u32 %v1042, 7
        %v1044 = vsub.s32 %v1041, %v1043
        %v1045 = vrot.slane %v1037, %v1044
        %v1047 = vunpack.c.l.s4 1983009808
        %v1048 = vunpack.c.0.s8 %v1047
        %v1049 = vlaneseq
        %v1050 = vshrl.u32 %v1049, 7
        %v1051 = vsub.s32 %v1048, %v1050
        %v1052 = vrot.slane %v1038, %v1051
        %v1053 = vcombine.low %v1029, %v1045
        %v1054 = vcombine.high %v1029, %v1045
        %v1056 = vunpack.c.l.s4 1934713408
        %v1057 = vunpack.c.0.s8 %v1056
        %v1058 = vlaneseq
        %v1059 = vshrl.u32 %v1058, 7
        %v1060 = vsub.s32 %v1057, %v1059
        %v1061 = vrot.slane %v1053, %v1060
        %v1063 = vunpack.c.l.s4 1934713408
        %v1064 = vunpack.c.0.s8 %v1063
        %v1065 = vlaneseq
        %v1066 = vshrl.u32 %v1065, 7
        %v1067 = vsub.s32 %v1064, %v1066
        %v1068 = vrot.slane %v1054, %v1067
        %v1069 = vcombine.low %v1036, %v1052
        %v1070 = vcombine.high %v1036, %v1052
        %v1072 = vunpack.c.l.s4 1934713408
        %v1073 = vunpack.c.0.s8 %v1072
        %v1074 = vlaneseq
        %v1075 = vshrl.u32 %v1074, 7
        %v1076 = vsub.s32 %v1073, %v1075
        %v1077 = vrot.slane %v1069, %v1076
        %v1079 = vunpack.c.l.s4 1934713408
        %v1080 = vunpack.c.0.s8 %v1079
        %v1081 = vlaneseq
        %v1082 = vshrl.u32 %v1081, 7
        %v1083 = vsub.s32 %v1080, %v1082
        %v1084 = vrot.slane %v1070, %v1083
        %v1085 = vcombine.high %v1061, 0.0
        %v1086 = vcombine.high %v1068, 0.0
        %v1087 = vcombine.high %v1077, 0.0
        %v1088 = vcombine.high %v1084, 0.0
        %v1089 = vcombine.low %v993, %v1000
        %v1091 = vunpack.c.l.s4 1983009808
        %v1092 = vunpack.c.0.s8 %v1091
        %v1093 = vlaneseq
        %v1094 = vshrl.u32 %v1093, 7
        %v1095 = vsub.s32 %v1092, %v1094
        %v1096 = vrot.slane %v1089, %v1095
        %v1097 = vcombine.low %v1017, %v1018
        %v1099 = vunpack.c.l.s4 1983009808
        %v1100 = vunpack.c.0.s8 %v1099
        %v1101 = vlaneseq
        %v1102 = vshrl.u32 %v1101, 7
        %v1103 = vsub.s32 %v1100, %v1102
        %v1104 = vrot.slane %v1097, %v1103
        %v1105 = vcombine.low %v1009, %v1016
        %v1107 = vunpack.c.l.s4 1983009808
        %v1108 = vunpack.c.0.s8 %v1107
        %v1109 = vlaneseq
        %v1110 = vshrl.u32 %v1109, 7
        %v1111 = vsub.s32 %v1108, %v1110
        %v1112 = vrot.slane %v1105, %v1111
        %v1113 = vcombine.low %v1019, %v1020
        %v1115 = vunpack.c.l.s4 1983009808
        %v1116 = vunpack.c.0.s8 %v1115
        %v1117 = vlaneseq
        %v1118 = vshrl.u32 %v1117, 7
        %v1119 = vsub.s32 %v1116, %v1118
        %v1120 = vrot.slane %v1113, %v1119
        %v1121 = vcombine.low %v1096, %v1104
        %v1122 = vcombine.high %v1096, %v1104
        %v1124 = vunpack.c.l.s4 1934713408
        %v1125 = vunpack.c.0.s8 %v1124
        %v1126 = vlaneseq
        %v1127 = vshrl.u32 %v1126, 7
        %v1128 = vsub.s32 %v1125, %v1127
        %v1129 = vrot.slane %v1121, %v1128
        %v1131 = vunpack.c.l.s4 1934713408
        %v1132 = vunpack.c.0.s8 %v1131
        %v1133 = vlaneseq
        %v1134 = vshrl.u32 %v1133, 7
        %v1135 = vsub.s32 %v1132, %v1134
        %v1136 = vrot.slane %v1122, %v1135
        %v1137 = vcombine.low %v1112, %v1120
        %v1138 = vcombine.high %v1112, %v1120
        %v1140 = vunpack.c.l.s4 1934713408
        %v1141 = vunpack.c.0.s8 %v1140
        %v1142 = vlaneseq
        %v1143 = vshrl.u32 %v1142, 7
        %v1144 = vsub.s32 %v1141, %v1143
        %v1145 = vrot.slane %v1137, %v1144
        %v1147 = vunpack.c.l.s4 1934713408
        %v1148 = vunpack.c.0.s8 %v1147
        %v1149 = vlaneseq
        %v1150 = vshrl.u32 %v1149, 7
        %v1151 = vsub.s32 %v1148, %v1150
        %v1152 = vrot.slane %v1138, %v1151
        %v1153 = vcombine.low %v1129, %v1145
        %v1154 = vcombine.high %v1129, %v1145
        %v1155 = vcombine.low %v1136, %v1152
        %v1156 = vcombine.high %v1136, %v1152
        %v1157 = vcombine.low %v1061, %v1068
        %v1159 = vunpack.c.l.s4 1983009808
        %v1160 = vunpack.c.0.s8 %v1159
        %v1161 = vlaneseq
        %v1162 = vshrl.u32 %v1161, 7
        %v1163 = vsub.s32 %v1160, %v1162
        %v1164 = vrot.slane %v1157, %v1163
        %v1165 = vcombine.low %v1085, %v1086
        %v1167 = vunpack.c.l.s4 1983009808
        %v1168 = vunpack.c.0.s8 %v1167
        %v1169 = vlaneseq
        %v1170 = vshrl.u32 %v1169, 7
        %v1171 = vsub.s32 %v1168, %v1170
        %v1172 = vrot.slane %v1165, %v1171
        %v1173 = vcombine.low %v1077, %v1084
        %v1175 = vunpack.c.l.s4 1983009808
        %v1176 = vunpack.c.0.s8 %v1175
        %v1177 = vlaneseq
        %v1178 = vshrl.u32 %v1177, 7
        %v1179 = vsub.s32 %v1176, %v1178
        %v1180 = vrot.slane %v1173, %v1179
        %v1181 = vcombine.low %v1087, %v1088
        %v1183 = vunpack.c.l.s4 1983009808
        %v1184 = vunpack.c.0.s8 %v1183
        %v1185 = vlaneseq
        %v1186 = vshrl.u32 %v1185, 7
        %v1187 = vsub.s32 %v1184, %v1186
        %v1188 = vrot.slane %v1181, %v1187
        %v1189 = vcombine.low %v1164, %v1172
        %v1190 = vcombine.high %v1164, %v1172
        %v1192 = vunpack.c.l.s4 1934713408
        %v1193 = vunpack.c.0.s8 %v1192
        %v1194 = vlaneseq
        %v1195 = vshrl.u32 %v1194, 7
        %v1196 = vsub.s32 %v1193, %v1195
        %v1197 = vrot.slane %v1189, %v1196
        %v1199 = vunpack.c.l.s4 1934713408
        %v1200 = vunpack.c.0.s8 %v1199
        %v1201 = vlaneseq
        %v1202 = vshrl.u32 %v1201, 7
        %v1203 = vsub.s32 %v1200, %v1202
        %v1204 = vrot.slane %v1190, %v1203
        %v1205 = vcombine.low %v1180, %v1188
        %v1206 = vcombine.high %v1180, %v1188
        %v1208 = vunpack.c.l.s4 1934713408
        %v1209 = vunpack.c.0.s8 %v1208
        %v1210 = vlaneseq
        %v1211 = vshrl.u32 %v1210, 7
        %v1212 = vsub.s32 %v1209, %v1211
        %v1213 = vrot.slane %v1205, %v1212
        %v1215 = vunpack.c.l.s4 1934713408
        %v1216 = vunpack.c.0.s8 %v1215
        %v1217 = vlaneseq
        %v1218 = vshrl.u32 %v1217, 7
        %v1219 = vsub.s32 %v1216, %v1218
        %v1220 = vrot.slane %v1206, %v1219
        %v1221 = vcombine.low %v1197, %v1213
        %v1222 = vcombine.high %v1197, %v1213
        %v1223 = vcombine.low %v1204, %v1220
        %v1224 = vcombine.high %v1204, %v1220
        %1227 = vrot.lane.b32.xlu0 %v886, 96
        %v1228 = vpop.permute.xlu0 %1227
        %1229 = vrot.lane.b32.xlu0 %v890, 96
        %v1230 = vpop.permute.xlu0 %1229
        %1233 = vrot.lane.b32.xlu0 %v886, 64
        %v1234 = vpop.permute.xlu0 %1233
        %1235 = vrot.lane.b32.xlu0 %v890, 64
        %v1236 = vpop.permute.xlu0 %1235
        %1239 = vrot.lane.b32.xlu0 %v886, 32
        %v1240 = vpop.permute.xlu0 %1239
        %1241 = vrot.lane.b32.xlu0 %v890, 32
        %v1242 = vpop.permute.xlu0 %1241
        %v1245 = vcombine.low %v886, %v1234
        %v1246 = vcombine.high %v886, %v1234
        %v1248 = vunpack.c.l.s4 1983009808
        %v1249 = vunpack.c.0.s8 %v1248
        %v1250 = vlaneseq
        %v1251 = vshrl.u32 %v1250, 7
        %v1252 = vsub.s32 %v1249, %v1251
        %v1253 = vrot.slane %v1245, %v1252
        %v1255 = vunpack.c.l.s4 1983009808
        %v1256 = vunpack.c.0.s8 %v1255
        %v1257 = vlaneseq
        %v1258 = vshrl.u32 %v1257, 7
        %v1259 = vsub.s32 %v1256, %v1258
        %v1260 = vrot.slane %v1246, %v1259
        %v1261 = vcombine.low %v1228, %v1240
        %v1262 = vcombine.high %v1228, %v1240
        %v1264 = vunpack.c.l.s4 1983009808
        %v1265 = vunpack.c.0.s8 %v1264
        %v1266 = vlaneseq
        %v1267 = vshrl.u32 %v1266, 7
        %v1268 = vsub.s32 %v1265, %v1267
        %v1269 = vrot.slane %v1261, %v1268
        %v1271 = vunpack.c.l.s4 1983009808
        %v1272 = vunpack.c.0.s8 %v1271
        %v1273 = vlaneseq
        %v1274 = vshrl.u32 %v1273, 7
        %v1275 = vsub.s32 %v1272, %v1274
        %v1276 = vrot.slane %v1262, %v1275
        %v1277 = vcombine.low %v1253, %v1269
        %v1278 = vcombine.high %v1253, %v1269
        %v1280 = vunpack.c.l.s4 1934713408
        %v1281 = vunpack.c.0.s8 %v1280
        %v1282 = vlaneseq
        %v1283 = vshrl.u32 %v1282, 7
        %v1284 = vsub.s32 %v1281, %v1283
        %v1285 = vrot.slane %v1277, %v1284
        %v1287 = vunpack.c.l.s4 1934713408
        %v1288 = vunpack.c.0.s8 %v1287
        %v1289 = vlaneseq
        %v1290 = vshrl.u32 %v1289, 7
        %v1291 = vsub.s32 %v1288, %v1290
        %v1292 = vrot.slane %v1278, %v1291
        %v1293 = vcombine.low %v1260, %v1276
        %v1294 = vcombine.high %v1260, %v1276
        %v1296 = vunpack.c.l.s4 1934713408
        %v1297 = vunpack.c.0.s8 %v1296
        %v1298 = vlaneseq
        %v1299 = vshrl.u32 %v1298, 7
        %v1300 = vsub.s32 %v1297, %v1299
        %v1301 = vrot.slane %v1293, %v1300
        %v1303 = vunpack.c.l.s4 1934713408
        %v1304 = vunpack.c.0.s8 %v1303
        %v1305 = vlaneseq
        %v1306 = vshrl.u32 %v1305, 7
        %v1307 = vsub.s32 %v1304, %v1306
        %v1308 = vrot.slane %v1294, %v1307
        %v1309 = vcombine.high %v1285, 0.0
        %v1310 = vcombine.high %v1292, 0.0
        %v1311 = vcombine.high %v1301, 0.0
        %v1312 = vcombine.high %v1308, 0.0
        %v1313 = vcombine.low %v890, %v1236
        %v1314 = vcombine.high %v890, %v1236
        %v1316 = vunpack.c.l.s4 1983009808
        %v1317 = vunpack.c.0.s8 %v1316
        %v1318 = vlaneseq
        %v1319 = vshrl.u32 %v1318, 7
        %v1320 = vsub.s32 %v1317, %v1319
        %v1321 = vrot.slane %v1313, %v1320
        %v1323 = vunpack.c.l.s4 1983009808
        %v1324 = vunpack.c.0.s8 %v1323
        %v1325 = vlaneseq
        %v1326 = vshrl.u32 %v1325, 7
        %v1327 = vsub.s32 %v1324, %v1326
        %v1328 = vrot.slane %v1314, %v1327
        %v1329 = vcombine.low %v1230, %v1242
        %v1330 = vcombine.high %v1230, %v1242
        %v1332 = vunpack.c.l.s4 1983009808
        %v1333 = vunpack.c.0.s8 %v1332
        %v1334 = vlaneseq
        %v1335 = vshrl.u32 %v1334, 7
        %v1336 = vsub.s32 %v1333, %v1335
        %v1337 = vrot.slane %v1329, %v1336
        %v1339 = vunpack.c.l.s4 1983009808
        %v1340 = vunpack.c.0.s8 %v1339
        %v1341 = vlaneseq
        %v1342 = vshrl.u32 %v1341, 7
        %v1343 = vsub.s32 %v1340, %v1342
        %v1344 = vrot.slane %v1330, %v1343
        %v1345 = vcombine.low %v1321, %v1337
        %v1346 = vcombine.high %v1321, %v1337
        %v1348 = vunpack.c.l.s4 1934713408
        %v1349 = vunpack.c.0.s8 %v1348
        %v1350 = vlaneseq
        %v1351 = vshrl.u32 %v1350, 7
        %v1352 = vsub.s32 %v1349, %v1351
        %v1353 = vrot.slane %v1345, %v1352
        %v1355 = vunpack.c.l.s4 1934713408
        %v1356 = vunpack.c.0.s8 %v1355
        %v1357 = vlaneseq
        %v1358 = vshrl.u32 %v1357, 7
        %v1359 = vsub.s32 %v1356, %v1358
        %v1360 = vrot.slane %v1346, %v1359
        %v1361 = vcombine.low %v1328, %v1344
        %v1362 = vcombine.high %v1328, %v1344
        %v1364 = vunpack.c.l.s4 1934713408
        %v1365 = vunpack.c.0.s8 %v1364
        %v1366 = vlaneseq
        %v1367 = vshrl.u32 %v1366, 7
        %v1368 = vsub.s32 %v1365, %v1367
        %v1369 = vrot.slane %v1361, %v1368
        %v1371 = vunpack.c.l.s4 1934713408
        %v1372 = vunpack.c.0.s8 %v1371
        %v1373 = vlaneseq
        %v1374 = vshrl.u32 %v1373, 7
        %v1375 = vsub.s32 %v1372, %v1374
        %v1376 = vrot.slane %v1362, %v1375
        %v1377 = vcombine.high %v1353, 0.0
        %v1378 = vcombine.high %v1360, 0.0
        %v1379 = vcombine.high %v1369, 0.0
        %v1380 = vcombine.high %v1376, 0.0
        %v1381 = vcombine.low %v1285, %v1292
        %v1383 = vunpack.c.l.s4 1983009808
        %v1384 = vunpack.c.0.s8 %v1383
        %v1385 = vlaneseq
        %v1386 = vshrl.u32 %v1385, 7
        %v1387 = vsub.s32 %v1384, %v1386
        %v1388 = vrot.slane %v1381, %v1387
        %v1389 = vcombine.low %v1309, %v1310
        %v1391 = vunpack.c.l.s4 1983009808
        %v1392 = vunpack.c.0.s8 %v1391
        %v1393 = vlaneseq
        %v1394 = vshrl.u32 %v1393, 7
        %v1395 = vsub.s32 %v1392, %v1394
        %v1396 = vrot.slane %v1389, %v1395
        %v1397 = vcombine.low %v1301, %v1308
        %v1399 = vunpack.c.l.s4 1983009808
        %v1400 = vunpack.c.0.s8 %v1399
        %v1401 = vlaneseq
        %v1402 = vshrl.u32 %v1401, 7
        %v1403 = vsub.s32 %v1400, %v1402
        %v1404 = vrot.slane %v1397, %v1403
        %v1405 = vcombine.low %v1311, %v1312
        %v1407 = vunpack.c.l.s4 1983009808
        %v1408 = vunpack.c.0.s8 %v1407
        %v1409 = vlaneseq
        %v1410 = vshrl.u32 %v1409, 7
        %v1411 = vsub.s32 %v1408, %v1410
        %v1412 = vrot.slane %v1405, %v1411
        %v1413 = vcombine.low %v1388, %v1396
        %v1414 = vcombine.high %v1388, %v1396
        %v1416 = vunpack.c.l.s4 1934713408
        %v1417 = vunpack.c.0.s8 %v1416
        %v1418 = vlaneseq
        %v1419 = vshrl.u32 %v1418, 7
        %v1420 = vsub.s32 %v1417, %v1419
        %v1421 = vrot.slane %v1413, %v1420
        %v1423 = vunpack.c.l.s4 1934713408
        %v1424 = vunpack.c.0.s8 %v1423
        %v1425 = vlaneseq
        %v1426 = vshrl.u32 %v1425, 7
        %v1427 = vsub.s32 %v1424, %v1426
        %v1428 = vrot.slane %v1414, %v1427
        %v1429 = vcombine.low %v1404, %v1412
        %v1430 = vcombine.high %v1404, %v1412
        %v1432 = vunpack.c.l.s4 1934713408
        %v1433 = vunpack.c.0.s8 %v1432
        %v1434 = vlaneseq
        %v1435 = vshrl.u32 %v1434, 7
        %v1436 = vsub.s32 %v1433, %v1435
        %v1437 = vrot.slane %v1429, %v1436
        %v1439 = vunpack.c.l.s4 1934713408
        %v1440 = vunpack.c.0.s8 %v1439
        %v1441 = vlaneseq
        %v1442 = vshrl.u32 %v1441, 7
        %v1443 = vsub.s32 %v1440, %v1442
        %v1444 = vrot.slane %v1430, %v1443
        %v1445 = vcombine.low %v1421, %v1437
        %v1446 = vcombine.high %v1421, %v1437
        %v1447 = vcombine.low %v1428, %v1444
        %v1448 = vcombine.high %v1428, %v1444
        %v1449 = vcombine.low %v1353, %v1360
        %v1451 = vunpack.c.l.s4 1983009808
        %v1452 = vunpack.c.0.s8 %v1451
        %v1453 = vlaneseq
        %v1454 = vshrl.u32 %v1453, 7
        %v1455 = vsub.s32 %v1452, %v1454
        %v1456 = vrot.slane %v1449, %v1455
        %v1457 = vcombine.low %v1377, %v1378
        %v1459 = vunpack.c.l.s4 1983009808
        %v1460 = vunpack.c.0.s8 %v1459
        %v1461 = vlaneseq
        %v1462 = vshrl.u32 %v1461, 7
        %v1463 = vsub.s32 %v1460, %v1462
        %v1464 = vrot.slane %v1457, %v1463
        %v1465 = vcombine.low %v1369, %v1376
        %v1467 = vunpack.c.l.s4 1983009808
        %v1468 = vunpack.c.0.s8 %v1467
        %v1469 = vlaneseq
        %v1470 = vshrl.u32 %v1469, 7
        %v1471 = vsub.s32 %v1468, %v1470
        %v1472 = vrot.slane %v1465, %v1471
        %v1473 = vcombine.low %v1379, %v1380
        %v1475 = vunpack.c.l.s4 1983009808
        %v1476 = vunpack.c.0.s8 %v1475
        %v1477 = vlaneseq
        %v1478 = vshrl.u32 %v1477, 7
        %v1479 = vsub.s32 %v1476, %v1478
        %v1480 = vrot.slane %v1473, %v1479
        %v1481 = vcombine.low %v1456, %v1464
        %v1482 = vcombine.high %v1456, %v1464
        %v1484 = vunpack.c.l.s4 1934713408
        %v1485 = vunpack.c.0.s8 %v1484
        %v1486 = vlaneseq
        %v1487 = vshrl.u32 %v1486, 7
        %v1488 = vsub.s32 %v1485, %v1487
        %v1489 = vrot.slane %v1481, %v1488
        %v1491 = vunpack.c.l.s4 1934713408
        %v1492 = vunpack.c.0.s8 %v1491
        %v1493 = vlaneseq
        %v1494 = vshrl.u32 %v1493, 7
        %v1495 = vsub.s32 %v1492, %v1494
        %v1496 = vrot.slane %v1482, %v1495
        %v1497 = vcombine.low %v1472, %v1480
        %v1498 = vcombine.high %v1472, %v1480
        %v1500 = vunpack.c.l.s4 1934713408
        %v1501 = vunpack.c.0.s8 %v1500
        %v1502 = vlaneseq
        %v1503 = vshrl.u32 %v1502, 7
        %v1504 = vsub.s32 %v1501, %v1503
        %v1505 = vrot.slane %v1497, %v1504
        %v1507 = vunpack.c.l.s4 1934713408
        %v1508 = vunpack.c.0.s8 %v1507
        %v1509 = vlaneseq
        %v1510 = vshrl.u32 %v1509, 7
        %v1511 = vsub.s32 %v1508, %v1510
        %v1512 = vrot.slane %v1498, %v1511
        %v1513 = vcombine.low %v1489, %v1505
        %v1514 = vcombine.high %v1489, %v1505
        %v1515 = vcombine.low %v1496, %v1512
        %v1516 = vcombine.high %v1496, %v1512
        %1519 = vrot.lane.b32.xlu0 %v927, 96
        %v1520 = vpop.permute.xlu0 %1519
        %1521 = vrot.lane.b32.xlu0 %v930, 96
        %v1522 = vpop.permute.xlu0 %1521
        %1525 = vrot.lane.b32.xlu0 %v927, 64
        %v1526 = vpop.permute.xlu0 %1525
        %1527 = vrot.lane.b32.xlu0 %v930, 64
        %v1528 = vpop.permute.xlu0 %1527
        %1531 = vrot.lane.b32.xlu0 %v927, 32
        %v1532 = vpop.permute.xlu0 %1531
        %1533 = vrot.lane.b32.xlu0 %v930, 32
        %v1534 = vpop.permute.xlu0 %1533
        %v1537 = vcombine.low %v927, %v1526
        %v1538 = vcombine.high %v927, %v1526
        %v1540 = vunpack.c.l.s4 1983009808
        %v1541 = vunpack.c.0.s8 %v1540
        %v1542 = vlaneseq
        %v1543 = vshrl.u32 %v1542, 7
        %v1544 = vsub.s32 %v1541, %v1543
        %v1545 = vrot.slane %v1537, %v1544
        %v1547 = vunpack.c.l.s4 1983009808
        %v1548 = vunpack.c.0.s8 %v1547
        %v1549 = vlaneseq
        %v1550 = vshrl.u32 %v1549, 7
        %v1551 = vsub.s32 %v1548, %v1550
        %v1552 = vrot.slane %v1538, %v1551
        %v1553 = vcombine.low %v1520, %v1532
        %v1554 = vcombine.high %v1520, %v1532
        %v1556 = vunpack.c.l.s4 1983009808
        %v1557 = vunpack.c.0.s8 %v1556
        %v1558 = vlaneseq
        %v1559 = vshrl.u32 %v1558, 7
        %v1560 = vsub.s32 %v1557, %v1559
        %v1561 = vrot.slane %v1553, %v1560
        %v1563 = vunpack.c.l.s4 1983009808
        %v1564 = vunpack.c.0.s8 %v1563
        %v1565 = vlaneseq
        %v1566 = vshrl.u32 %v1565, 7
        %v1567 = vsub.s32 %v1564, %v1566
        %v1568 = vrot.slane %v1554, %v1567
        %v1569 = vcombine.low %v1545, %v1561
        %v1570 = vcombine.high %v1545, %v1561
        %v1572 = vunpack.c.l.s4 1934713408
        %v1573 = vunpack.c.0.s8 %v1572
        %v1574 = vlaneseq
        %v1575 = vshrl.u32 %v1574, 7
        %v1576 = vsub.s32 %v1573, %v1575
        %v1577 = vrot.slane %v1569, %v1576
        %v1579 = vunpack.c.l.s4 1934713408
        %v1580 = vunpack.c.0.s8 %v1579
        %v1581 = vlaneseq
        %v1582 = vshrl.u32 %v1581, 7
        %v1583 = vsub.s32 %v1580, %v1582
        %v1584 = vrot.slane %v1570, %v1583
        %v1585 = vcombine.low %v1552, %v1568
        %v1586 = vcombine.high %v1552, %v1568
        %v1588 = vunpack.c.l.s4 1934713408
        %v1589 = vunpack.c.0.s8 %v1588
        %v1590 = vlaneseq
        %v1591 = vshrl.u32 %v1590, 7
        %v1592 = vsub.s32 %v1589, %v1591
        %v1593 = vrot.slane %v1585, %v1592
        %v1595 = vunpack.c.l.s4 1934713408
        %v1596 = vunpack.c.0.s8 %v1595
        %v1597 = vlaneseq
        %v1598 = vshrl.u32 %v1597, 7
        %v1599 = vsub.s32 %v1596, %v1598
        %v1600 = vrot.slane %v1586, %v1599
        %v1601 = vcombine.high %v1577, 0.0
        %v1602 = vcombine.high %v1584, 0.0
        %v1603 = vcombine.high %v1593, 0.0
        %v1604 = vcombine.high %v1600, 0.0
        %v1605 = vcombine.low %v930, %v1528
        %v1606 = vcombine.high %v930, %v1528
        %v1608 = vunpack.c.l.s4 1983009808
        %v1609 = vunpack.c.0.s8 %v1608
        %v1610 = vlaneseq
        %v1611 = vshrl.u32 %v1610, 7
        %v1612 = vsub.s32 %v1609, %v1611
        %v1613 = vrot.slane %v1605, %v1612
        %v1615 = vunpack.c.l.s4 1983009808
        %v1616 = vunpack.c.0.s8 %v1615
        %v1617 = vlaneseq
        %v1618 = vshrl.u32 %v1617, 7
        %v1619 = vsub.s32 %v1616, %v1618
        %v1620 = vrot.slane %v1606, %v1619
        %v1621 = vcombine.low %v1522, %v1534
        %v1622 = vcombine.high %v1522, %v1534
        %v1624 = vunpack.c.l.s4 1983009808
        %v1625 = vunpack.c.0.s8 %v1624
        %v1626 = vlaneseq
        %v1627 = vshrl.u32 %v1626, 7
        %v1628 = vsub.s32 %v1625, %v1627
        %v1629 = vrot.slane %v1621, %v1628
        %v1631 = vunpack.c.l.s4 1983009808
        %v1632 = vunpack.c.0.s8 %v1631
        %v1633 = vlaneseq
        %v1634 = vshrl.u32 %v1633, 7
        %v1635 = vsub.s32 %v1632, %v1634
        %v1636 = vrot.slane %v1622, %v1635
        %v1637 = vcombine.low %v1613, %v1629
        %v1638 = vcombine.high %v1613, %v1629
        %v1640 = vunpack.c.l.s4 1934713408
        %v1641 = vunpack.c.0.s8 %v1640
        %v1642 = vlaneseq
        %v1643 = vshrl.u32 %v1642, 7
        %v1644 = vsub.s32 %v1641, %v1643
        %v1645 = vrot.slane %v1637, %v1644
        %v1647 = vunpack.c.l.s4 1934713408
        %v1648 = vunpack.c.0.s8 %v1647
        %v1649 = vlaneseq
        %v1650 = vshrl.u32 %v1649, 7
        %v1651 = vsub.s32 %v1648, %v1650
        %v1652 = vrot.slane %v1638, %v1651
        %v1653 = vcombine.low %v1620, %v1636
        %v1654 = vcombine.high %v1620, %v1636
        %v1656 = vunpack.c.l.s4 1934713408
        %v1657 = vunpack.c.0.s8 %v1656
        %v1658 = vlaneseq
        %v1659 = vshrl.u32 %v1658, 7
        %v1660 = vsub.s32 %v1657, %v1659
        %v1661 = vrot.slane %v1653, %v1660
        %v1663 = vunpack.c.l.s4 1934713408
        %v1664 = vunpack.c.0.s8 %v1663
        %v1665 = vlaneseq
        %v1666 = vshrl.u32 %v1665, 7
        %v1667 = vsub.s32 %v1664, %v1666
        %v1668 = vrot.slane %v1654, %v1667
        %v1669 = vcombine.high %v1645, 0.0
        %v1670 = vcombine.high %v1652, 0.0
        %v1671 = vcombine.high %v1661, 0.0
        %v1672 = vcombine.high %v1668, 0.0
        %v1673 = vcombine.low %v1577, %v1584
        %v1675 = vunpack.c.l.s4 1983009808
        %v1676 = vunpack.c.0.s8 %v1675
        %v1677 = vlaneseq
        %v1678 = vshrl.u32 %v1677, 7
        %v1679 = vsub.s32 %v1676, %v1678
        %v1680 = vrot.slane %v1673, %v1679
        %v1681 = vcombine.low %v1601, %v1602
        %v1683 = vunpack.c.l.s4 1983009808
        %v1684 = vunpack.c.0.s8 %v1683
        %v1685 = vlaneseq
        %v1686 = vshrl.u32 %v1685, 7
        %v1687 = vsub.s32 %v1684, %v1686
        %v1688 = vrot.slane %v1681, %v1687
        %v1689 = vcombine.low %v1593, %v1600
        %v1691 = vunpack.c.l.s4 1983009808
        %v1692 = vunpack.c.0.s8 %v1691
        %v1693 = vlaneseq
        %v1694 = vshrl.u32 %v1693, 7
        %v1695 = vsub.s32 %v1692, %v1694
        %v1696 = vrot.slane %v1689, %v1695
        %v1697 = vcombine.low %v1603, %v1604
        %v1699 = vunpack.c.l.s4 1983009808
        %v1700 = vunpack.c.0.s8 %v1699
        %v1701 = vlaneseq
        %v1702 = vshrl.u32 %v1701, 7
        %v1703 = vsub.s32 %v1700, %v1702
        %v1704 = vrot.slane %v1697, %v1703
        %v1705 = vcombine.low %v1680, %v1688
        %v1706 = vcombine.high %v1680, %v1688
        %v1708 = vunpack.c.l.s4 1934713408
        %v1709 = vunpack.c.0.s8 %v1708
        %v1710 = vlaneseq
        %v1711 = vshrl.u32 %v1710, 7
        %v1712 = vsub.s32 %v1709, %v1711
        %v1713 = vrot.slane %v1705, %v1712
        %v1715 = vunpack.c.l.s4 1934713408
        %v1716 = vunpack.c.0.s8 %v1715
        %v1717 = vlaneseq
        %v1718 = vshrl.u32 %v1717, 7
        %v1719 = vsub.s32 %v1716, %v1718
        %v1720 = vrot.slane %v1706, %v1719
        %v1721 = vcombine.low %v1696, %v1704
        %v1722 = vcombine.high %v1696, %v1704
        %v1724 = vunpack.c.l.s4 1934713408
        %v1725 = vunpack.c.0.s8 %v1724
        %v1726 = vlaneseq
        %v1727 = vshrl.u32 %v1726, 7
        %v1728 = vsub.s32 %v1725, %v1727
        %v1729 = vrot.slane %v1721, %v1728
        %v1731 = vunpack.c.l.s4 1934713408
        %v1732 = vunpack.c.0.s8 %v1731
        %v1733 = vlaneseq
        %v1734 = vshrl.u32 %v1733, 7
        %v1735 = vsub.s32 %v1732, %v1734
        %v1736 = vrot.slane %v1722, %v1735
        %v1737 = vcombine.low %v1713, %v1729
        %v1738 = vcombine.high %v1713, %v1729
        %v1739 = vcombine.low %v1720, %v1736
        %v1740 = vcombine.high %v1720, %v1736
        %v1741 = vcombine.low %v1645, %v1652
        %v1743 = vunpack.c.l.s4 1983009808
        %v1744 = vunpack.c.0.s8 %v1743
        %v1745 = vlaneseq
        %v1746 = vshrl.u32 %v1745, 7
        %v1747 = vsub.s32 %v1744, %v1746
        %v1748 = vrot.slane %v1741, %v1747
        %v1749 = vcombine.low %v1669, %v1670
        %v1751 = vunpack.c.l.s4 1983009808
        %v1752 = vunpack.c.0.s8 %v1751
        %v1753 = vlaneseq
        %v1754 = vshrl.u32 %v1753, 7
        %v1755 = vsub.s32 %v1752, %v1754
        %v1756 = vrot.slane %v1749, %v1755
        %v1757 = vcombine.low %v1661, %v1668
        %v1759 = vunpack.c.l.s4 1983009808
        %v1760 = vunpack.c.0.s8 %v1759
        %v1761 = vlaneseq
        %v1762 = vshrl.u32 %v1761, 7
        %v1763 = vsub.s32 %v1760, %v1762
        %v1764 = vrot.slane %v1757, %v1763
        %v1765 = vcombine.low %v1671, %v1672
        %v1767 = vunpack.c.l.s4 1983009808
        %v1768 = vunpack.c.0.s8 %v1767
        %v1769 = vlaneseq
        %v1770 = vshrl.u32 %v1769, 7
        %v1771 = vsub.s32 %v1768, %v1770
        %v1772 = vrot.slane %v1765, %v1771
        %v1773 = vcombine.low %v1748, %v1756
        %v1774 = vcombine.high %v1748, %v1756
        %v1776 = vunpack.c.l.s4 1934713408
        %v1777 = vunpack.c.0.s8 %v1776
        %v1778 = vlaneseq
        %v1779 = vshrl.u32 %v1778, 7
        %v1780 = vsub.s32 %v1777, %v1779
        %v1781 = vrot.slane %v1773, %v1780
        %v1783 = vunpack.c.l.s4 1934713408
        %v1784 = vunpack.c.0.s8 %v1783
        %v1785 = vlaneseq
        %v1786 = vshrl.u32 %v1785, 7
        %v1787 = vsub.s32 %v1784, %v1786
        %v1788 = vrot.slane %v1774, %v1787
        %v1789 = vcombine.low %v1764, %v1772
        %v1790 = vcombine.high %v1764, %v1772
        %v1792 = vunpack.c.l.s4 1934713408
        %v1793 = vunpack.c.0.s8 %v1792
        %v1794 = vlaneseq
        %v1795 = vshrl.u32 %v1794, 7
        %v1796 = vsub.s32 %v1793, %v1795
        %v1797 = vrot.slane %v1789, %v1796
        %v1799 = vunpack.c.l.s4 1934713408
        %v1800 = vunpack.c.0.s8 %v1799
        %v1801 = vlaneseq
        %v1802 = vshrl.u32 %v1801, 7
        %v1803 = vsub.s32 %v1800, %v1802
        %v1804 = vrot.slane %v1790, %v1803
        %v1805 = vcombine.low %v1781, %v1797
        %v1806 = vcombine.high %v1781, %v1797
        %v1807 = vcombine.low %v1788, %v1804
        %v1808 = vcombine.high %v1788, %v1804
        %v1809 = vpack.c.bf16 %v1221, %v1153
        %v1810 = vpack.c.bf16 %v1222, %v1154
        %v1811 = vpack.c.bf16 %v1223, %v1155
        %v1812 = vpack.c.bf16 %v1224, %v1156
        %v1813 = vpack.c.bf16 %v1513, %v1445
        %v1814 = vpack.c.bf16 %v1514, %v1446
        %v1815 = vpack.c.bf16 %v1515, %v1447
        %v1816 = vpack.c.bf16 %v1516, %v1448
        %vm1817 = vcmask 261120
        %v1819 = vsel %vm1817, %v1809, 0
        %v1822 = vsel %vm1817, %v1813, 0
        %1824 = vmatprep.subr.bf16.mxu0 0
        %1825 = vmatpush1.bf16.xpose.msra.mxu0 %v1822
        %1826 = vmatprep.subr.bf16.mxu0 0
        %1827 = vmatpush1.bf16.xpose.msra.mxu0 0
        %1828 = vmatprep.subr.bf16.mxu0 0
        %1829 = vmatpush1.bf16.xpose.msra.mxu0 0
        %1830 = vmatprep.subr.bf16.mxu0 0
        %1831 = vmatpush1.bf16.xpose.msra.mxu0 0
        %1832 = vmatprep.subr.bf16.mxu0 0
        %1833 = vmatpush1.bf16.xpose.msra.mxu0 0
        %1834 = vmatprep.subr.bf16.mxu0 0
        %1835 = vmatpush1.bf16.xpose.msra.mxu0 0
        %1836 = vmatprep.subr.bf16.mxu0 0
        %1837 = vmatpush1.bf16.xpose.msra.mxu0 0
        %1838 = vmatprep.subr.bf16.mxu0 0
        %1839 = vmatpush1.bf16.xpose.msra.mxu0 0
        %1840 = vmatprep.subr.bf16.mxu0 0
        %1841 = vmatpush1.bf16.xpose.msra.mxu0 0
        %1842 = vmatprep.subr.bf16.mxu0 0
        %1843 = vmatpush1.bf16.xpose.msra.mxu0 0
        %1844 = vmatprep.subr.bf16.mxu0 0
        %1845 = vmatpush1.bf16.xpose.msra.mxu0 0
        %1846 = vmatprep.subr.bf16.mxu0 0
        %1847 = vmatpush1.bf16.xpose.msra.mxu0 0
        %1848 = vmatprep.subr.bf16.mxu0 0
        %1849 = vmatpush1.bf16.xpose.msra.mxu0 0
        %1850 = vmatprep.subr.bf16.mxu0 0
        %1851 = vmatpush1.bf16.xpose.msra.mxu0 0
        %1852 = vmatprep.subr.bf16.mxu0 0
        %1853 = vmatpush1.bf16.xpose.msra.mxu0 0
        %1854 = vmatprep.subr.bf16.mxu0 0
        %1855 = vmatpush1.bf16.xpose.msra.mxu0 0
        %1856 = vmatprep.mubr.bf16.mxu0 0
        %1857 = vmatmul.mubr.bf16.gmra.mrb[0].mxu0 %v1819
        %v1858 = vpop.f32.mrb[0].mxu0
        %v1859 = vadd.f32 0.0, %v1858
        %v1860 = vpop.f32.mrb[0].mxu0
        %v1861 = vpop.f32.mrb[0].mxu0
        %v1862 = vadd.f32 0.0, %v1861
        %v1863 = vpop.f32.mrb[0].mxu0
        %1864 = vdwg.mxu0
        %v1866 = vsel %vm1817, %v1810, 0
        %v1869 = vsel %vm1817, %v1814, 0
        %1871 = vmatprep.subr.bf16.mxu0 0
        %1872 = vmatpush1.bf16.xpose.msra.mxu0 %v1869
        %1873 = vmatprep.subr.bf16.mxu0 0
        %1874 = vmatpush1.bf16.xpose.msra.mxu0 0
        %1875 = vmatprep.subr.bf16.mxu0 0
        %1876 = vmatpush1.bf16.xpose.msra.mxu0 0
        %1877 = vmatprep.subr.bf16.mxu0 0
        %1878 = vmatpush1.bf16.xpose.msra.mxu0 0
        %1879 = vmatprep.subr.bf16.mxu0 0
        %1880 = vmatpush1.bf16.xpose.msra.mxu0 0
        %1881 = vmatprep.subr.bf16.mxu0 0
        %1882 = vmatpush1.bf16.xpose.msra.mxu0 0
        %1883 = vmatprep.subr.bf16.mxu0 0
        %1884 = vmatpush1.bf16.xpose.msra.mxu0 0
        %1885 = vmatprep.subr.bf16.mxu0 0
        %1886 = vmatpush1.bf16.xpose.msra.mxu0 0
        %1887 = vmatprep.subr.bf16.mxu0 0
        %1888 = vmatpush1.bf16.xpose.msra.mxu0 0
        %1889 = vmatprep.subr.bf16.mxu0 0
        %1890 = vmatpush1.bf16.xpose.msra.mxu0 0
        %1891 = vmatprep.subr.bf16.mxu0 0
        %1892 = vmatpush1.bf16.xpose.msra.mxu0 0
        %1893 = vmatprep.subr.bf16.mxu0 0
        %1894 = vmatpush1.bf16.xpose.msra.mxu0 0
        %1895 = vmatprep.subr.bf16.mxu0 0
        %1896 = vmatpush1.bf16.xpose.msra.mxu0 0
        %1897 = vmatprep.subr.bf16.mxu0 0
        %1898 = vmatpush1.bf16.xpose.msra.mxu0 0
        %1899 = vmatprep.subr.bf16.mxu0 0
        %1900 = vmatpush1.bf16.xpose.msra.mxu0 0
        %1901 = vmatprep.subr.bf16.mxu0 0
        %1902 = vmatpush1.bf16.xpose.msra.mxu0 0
        %1903 = vmatprep.mubr.bf16.mxu0 0
        %1904 = vmatmul.mubr.bf16.gmra.mrb[0].mxu0 %v1866
        %v1905 = vpop.f32.mrb[0].mxu0
        %v1906 = vadd.f32 0.0, %v1905
        %v1907 = vpop.f32.mrb[0].mxu0
        %v1908 = vpop.f32.mrb[0].mxu0
        %v1909 = vadd.f32 0.0, %v1908
        %v1910 = vpop.f32.mrb[0].mxu0
        %1911 = vdwg.mxu0
        %v1913 = vsel %vm1817, %v1811, 0
        %v1916 = vsel %vm1817, %v1815, 0
        %1918 = vmatprep.subr.bf16.mxu0 0
        %1919 = vmatpush1.bf16.xpose.msra.mxu0 %v1916
        %1920 = vmatprep.subr.bf16.mxu0 0
        %1921 = vmatpush1.bf16.xpose.msra.mxu0 0
        %1922 = vmatprep.subr.bf16.mxu0 0
        %1923 = vmatpush1.bf16.xpose.msra.mxu0 0
        %1924 = vmatprep.subr.bf16.mxu0 0
        %1925 = vmatpush1.bf16.xpose.msra.mxu0 0
        %1926 = vmatprep.subr.bf16.mxu0 0
        %1927 = vmatpush1.bf16.xpose.msra.mxu0 0
        %1928 = vmatprep.subr.bf16.mxu0 0
        %1929 = vmatpush1.bf16.xpose.msra.mxu0 0
        %1930 = vmatprep.subr.bf16.mxu0 0
        %1931 = vmatpush1.bf16.xpose.msra.mxu0 0
        %1932 = vmatprep.subr.bf16.mxu0 0
        %1933 = vmatpush1.bf16.xpose.msra.mxu0 0
        %1934 = vmatprep.subr.bf16.mxu0 0
        %1935 = vmatpush1.bf16.xpose.msra.mxu0 0
        %1936 = vmatprep.subr.bf16.mxu0 0
        %1937 = vmatpush1.bf16.xpose.msra.mxu0 0
        %1938 = vmatprep.subr.bf16.mxu0 0
        %1939 = vmatpush1.bf16.xpose.msra.mxu0 0
        %1940 = vmatprep.subr.bf16.mxu0 0
        %1941 = vmatpush1.bf16.xpose.msra.mxu0 0
        %1942 = vmatprep.subr.bf16.mxu0 0
        %1943 = vmatpush1.bf16.xpose.msra.mxu0 0
        %1944 = vmatprep.subr.bf16.mxu0 0
        %1945 = vmatpush1.bf16.xpose.msra.mxu0 0
        %1946 = vmatprep.subr.bf16.mxu0 0
        %1947 = vmatpush1.bf16.xpose.msra.mxu0 0
        %1948 = vmatprep.subr.bf16.mxu0 0
        %1949 = vmatpush1.bf16.xpose.msra.mxu0 0
        %1950 = vmatprep.mubr.bf16.mxu0 0
        %1951 = vmatmul.mubr.bf16.gmra.mrb[0].mxu0 %v1913
        %v1952 = vpop.f32.mrb[0].mxu0
        %v1953 = vadd.f32 0.0, %v1952
        %v1954 = vpop.f32.mrb[0].mxu0
        %v1955 = vpop.f32.mrb[0].mxu0
        %v1956 = vadd.f32 0.0, %v1955
        %v1957 = vpop.f32.mrb[0].mxu0
        %1958 = vdwg.mxu0
        %v1960 = vsel %vm1817, %v1812, 0
        %v1963 = vsel %vm1817, %v1816, 0
        %1965 = vmatprep.subr.bf16.mxu0 0
        %1966 = vmatpush1.bf16.xpose.msra.mxu0 %v1963
        %1967 = vmatprep.subr.bf16.mxu0 0
        %1968 = vmatpush1.bf16.xpose.msra.mxu0 0
        %1969 = vmatprep.subr.bf16.mxu0 0
        %1970 = vmatpush1.bf16.xpose.msra.mxu0 0
        %1971 = vmatprep.subr.bf16.mxu0 0
        %1972 = vmatpush1.bf16.xpose.msra.mxu0 0
        %1973 = vmatprep.subr.bf16.mxu0 0
        %1974 = vmatpush1.bf16.xpose.msra.mxu0 0
        %1975 = vmatprep.subr.bf16.mxu0 0
        %1976 = vmatpush1.bf16.xpose.msra.mxu0 0
        %1977 = vmatprep.subr.bf16.mxu0 0
        %1978 = vmatpush1.bf16.xpose.msra.mxu0 0
        %1979 = vmatprep.subr.bf16.mxu0 0
        %1980 = vmatpush1.bf16.xpose.msra.mxu0 0
        %1981 = vmatprep.subr.bf16.mxu0 0
        %1982 = vmatpush1.bf16.xpose.msra.mxu0 0
        %1983 = vmatprep.subr.bf16.mxu0 0
        %1984 = vmatpush1.bf16.xpose.msra.mxu0 0
        %1985 = vmatprep.subr.bf16.mxu0 0
        %1986 = vmatpush1.bf16.xpose.msra.mxu0 0
        %1987 = vmatprep.subr.bf16.mxu0 0
        %1988 = vmatpush1.bf16.xpose.msra.mxu0 0
        %1989 = vmatprep.subr.bf16.mxu0 0
        %1990 = vmatpush1.bf16.xpose.msra.mxu0 0
        %1991 = vmatprep.subr.bf16.mxu0 0
        %1992 = vmatpush1.bf16.xpose.msra.mxu0 0
        %1993 = vmatprep.subr.bf16.mxu0 0
        %1994 = vmatpush1.bf16.xpose.msra.mxu0 0
        %1995 = vmatprep.subr.bf16.mxu0 0
        %1996 = vmatpush1.bf16.xpose.msra.mxu0 0
        %1997 = vmatprep.mubr.bf16.mxu0 0
        %1998 = vmatmul.mubr.bf16.gmra.mrb[0].mxu0 %v1960
        %v1999 = vpop.f32.mrb[0].mxu0
        %v2000 = vadd.f32 0.0, %v1999
        %v2001 = vpop.f32.mrb[0].mxu0
        %v2002 = vpop.f32.mrb[0].mxu0
        %v2003 = vadd.f32 0.0, %v2002
        %v2004 = vpop.f32.mrb[0].mxu0
        %2005 = vdwg.mxu0
        %v2006 = vmul.f32 %v1859, 0.17677669
        %v2007 = vmul.f32 %v1862, 0.17677669
        %v2008 = vmul.f32 %v1906, 0.17677669
        %v2009 = vmul.f32 %v1909, 0.17677669
        %v2010 = vmul.f32 %v1953, 0.17677669
        %v2011 = vmul.f32 %v1956, 0.17677669
        %v2012 = vmul.f32 %v2000, 0.17677669
        %v2013 = vmul.f32 %v2003, 0.17677669
        %v2015 = vlaneseq
        %v2016 = vshrl.u32 %v2015, 7
        %v2017 = vsub.s32 0, %v2016
        %v2018 = vrot.slane %v670, %v2017
        %v2020 = vadd.f32 %v2006, %v2018
        %v2021 = vadd.f32 %v2007, %v2018
        %v2022 = vadd.f32 %v2008, %v2018
        %v2023 = vadd.f32 %v2009, %v2018
        %v2024 = vadd.f32 %v2010, %v2018
        %v2025 = vadd.f32 %v2011, %v2018
        %v2026 = vadd.f32 %v2012, %v2018
        %v2027 = vadd.f32 %v2013, %v2018
        %vm2028 = vcmask 130048
        %v2029 = vsel %vm2028, %v2020, -inf
        %2030 = vmax.xlane.f32.xlu0 %v2029
        %v2031 = vpop.xlane.xlu0 %2030
        %v2032 = vsel %vm2028, %v2021, -inf
        %2033 = vmax.xlane.f32.xlu0 %v2032
        %v2034 = vpop.xlane.xlu0 %2033
        %v2035 = vsel %vm2028, %v2022, -inf
        %2036 = vmax.xlane.f32.xlu0 %v2035
        %v2037 = vpop.xlane.xlu0 %2036
        %v2038 = vsel %vm2028, %v2023, -inf
        %2039 = vmax.xlane.f32.xlu0 %v2038
        %v2040 = vpop.xlane.xlu0 %2039
        %v2041 = vsel %vm2028, %v2024, -inf
        %2042 = vmax.xlane.f32.xlu0 %v2041
        %v2043 = vpop.xlane.xlu0 %2042
        %v2044 = vsel %vm2028, %v2025, -inf
        %2045 = vmax.xlane.f32.xlu0 %v2044
        %v2046 = vpop.xlane.xlu0 %2045
        %v2047 = vsel %vm2028, %v2026, -inf
        %2048 = vmax.xlane.f32.xlu0 %v2047
        %v2049 = vpop.xlane.xlu0 %2048
        %v2050 = vsel %vm2028, %v2027, -inf
        %2051 = vmax.xlane.f32.xlu0 %v2050
        %v2052 = vpop.xlane.xlu0 %2051
        %v2053 = vsub.f32 %v2020, %v2031
        %v2054 = vsub.f32 %v2021, %v2034
        %v2055 = vsub.f32 %v2022, %v2037
        %v2056 = vsub.f32 %v2023, %v2040
        %v2057 = vsub.f32 %v2024, %v2043
        %v2058 = vsub.f32 %v2025, %v2046
        %v2059 = vsub.f32 %v2026, %v2049
        %v2060 = vsub.f32 %v2027, %v2052
        %v2061 = vmul.f32 %v2053, 1.442695
        %v2062 = vpow.pop %v2061
        %v2063 = vmul.f32 %v2054, 1.442695
        %v2064 = vpow.pop %v2063
        %v2065 = vmul.f32 %v2055, 1.442695
        %v2066 = vpow.pop %v2065
        %v2067 = vmul.f32 %v2056, 1.442695
        %v2068 = vpow.pop %v2067
        %v2069 = vmul.f32 %v2057, 1.442695
        %v2070 = vpow.pop %v2069
        %v2071 = vmul.f32 %v2058, 1.442695
        %v2072 = vpow.pop %v2071
        %v2073 = vmul.f32 %v2059, 1.442695
        %v2074 = vpow.pop %v2073
        %v2075 = vmul.f32 %v2060, 1.442695
        %v2076 = vpow.pop %v2075
        %v2077 = vsel %vm2028, %v2062, 0.0
        %2078 = vadd.xlane.f32.xlu0 %v2077
        %v2079 = vpop.xlane.xlu0 %2078
        %v2080 = vsel %vm2028, %v2064, 0.0
        %2081 = vadd.xlane.f32.xlu0 %v2080
        %v2082 = vpop.xlane.xlu0 %2081
        %v2083 = vsel %vm2028, %v2066, 0.0
        %2084 = vadd.xlane.f32.xlu0 %v2083
        %v2085 = vpop.xlane.xlu0 %2084
        %v2086 = vsel %vm2028, %v2068, 0.0
        %2087 = vadd.xlane.f32.xlu0 %v2086
        %v2088 = vpop.xlane.xlu0 %2087
        %v2089 = vsel %vm2028, %v2070, 0.0
        %2090 = vadd.xlane.f32.xlu0 %v2089
        %v2091 = vpop.xlane.xlu0 %2090
        %v2092 = vsel %vm2028, %v2072, 0.0
        %2093 = vadd.xlane.f32.xlu0 %v2092
        %v2094 = vpop.xlane.xlu0 %2093
        %v2095 = vsel %vm2028, %v2074, 0.0
        %2096 = vadd.xlane.f32.xlu0 %v2095
        %v2097 = vpop.xlane.xlu0 %2096
        %v2098 = vsel %vm2028, %v2076, 0.0
        %2099 = vadd.xlane.f32.xlu0 %v2098
        %v2100 = vpop.xlane.xlu0 %2099
        %v2101 = vrcp.pop %v2079
        %v2102 = vmul.f32 %v2062, %v2101
        %v2103 = vrcp.pop %v2082
        %v2104 = vmul.f32 %v2064, %v2103
        %v2105 = vrcp.pop %v2085
        %v2106 = vmul.f32 %v2066, %v2105
        %v2107 = vrcp.pop %v2088
        %v2108 = vmul.f32 %v2068, %v2107
        %v2109 = vrcp.pop %v2091
        %v2110 = vmul.f32 %v2070, %v2109
        %v2111 = vrcp.pop %v2094
        %v2112 = vmul.f32 %v2072, %v2111
        %v2113 = vrcp.pop %v2097
        %v2114 = vmul.f32 %v2074, %v2113
        %v2115 = vrcp.pop %v2100
        %v2116 = vmul.f32 %v2076, %v2115
        %v2117 = vpack.c.bf16 %v2104, %v2102
        %v2118 = vpack.c.bf16 %v2108, %v2106
        %v2119 = vpack.c.bf16 %v2112, %v2110
        %v2120 = vpack.c.bf16 %v2116, %v2114
        %v2121 = vpack.c.bf16 %v1805, %v1737
        %v2122 = vpack.c.bf16 %v1806, %v1738
        %v2123 = vpack.c.bf16 %v1807, %v1739
        %v2124 = vpack.c.bf16 %v1808, %v1740
        %v2126 = vsel %vm2028, %v2117, 0
        %2128 = vmatprep.subr.bf16.mxu0 0
        %2129 = vmatpush1.bf16.msra.mxu0 %v2121
        %2130 = vmatprep.subr.bf16.mxu0 0
        %2131 = vmatpush1.bf16.msra.mxu0 0
        %2132 = vmatprep.subr.bf16.mxu0 0
        %2133 = vmatpush1.bf16.msra.mxu0 0
        %2134 = vmatprep.subr.bf16.mxu0 0
        %2135 = vmatpush1.bf16.msra.mxu0 0
        %2136 = vmatprep.subr.bf16.mxu0 0
        %2137 = vmatpush1.bf16.msra.mxu0 0
        %2138 = vmatprep.subr.bf16.mxu0 0
        %2139 = vmatpush1.bf16.msra.mxu0 0
        %2140 = vmatprep.subr.bf16.mxu0 0
        %2141 = vmatpush1.bf16.msra.mxu0 0
        %2142 = vmatprep.subr.bf16.mxu0 0
        %2143 = vmatpush1.bf16.msra.mxu0 0
        %2144 = vmatprep.subr.bf16.mxu0 0
        %2145 = vmatpush1.bf16.msra.mxu0 0
        %2146 = vmatprep.subr.bf16.mxu0 0
        %2147 = vmatpush1.bf16.msra.mxu0 0
        %2148 = vmatprep.subr.bf16.mxu0 0
        %2149 = vmatpush1.bf16.msra.mxu0 0
        %2150 = vmatprep.subr.bf16.mxu0 0
        %2151 = vmatpush1.bf16.msra.mxu0 0
        %2152 = vmatprep.subr.bf16.mxu0 0
        %2153 = vmatpush1.bf16.msra.mxu0 0
        %2154 = vmatprep.subr.bf16.mxu0 0
        %2155 = vmatpush1.bf16.msra.mxu0 0
        %2156 = vmatprep.subr.bf16.mxu0 0
        %2157 = vmatpush1.bf16.msra.mxu0 0
        %2158 = vmatprep.subr.bf16.mxu0 0
        %2159 = vmatpush1.bf16.msra.mxu0 0
        %2160 = vmatprep.mubr.bf16.mxu0 0
        %2161 = vmatmul.mubr.bf16.gmra.mrb[0].mxu0 %v2126
        %v2162 = vpop.f32.mrb[0].mxu0
        %v2163 = vadd.f32 0.0, %v2162
        %v2164 = vpop.f32.mrb[0].mxu0
        %v2165 = vpop.f32.mrb[0].mxu0
        %v2166 = vadd.f32 0.0, %v2165
        %v2167 = vpop.f32.mrb[0].mxu0
        %2168 = vdwg.mxu0
        %v2170 = vsel %vm2028, %v2118, 0
        %2172 = vmatprep.subr.bf16.mxu0 0
        %2173 = vmatpush1.bf16.msra.mxu0 %v2122
        %2174 = vmatprep.subr.bf16.mxu0 0
        %2175 = vmatpush1.bf16.msra.mxu0 0
        %2176 = vmatprep.subr.bf16.mxu0 0
        %2177 = vmatpush1.bf16.msra.mxu0 0
        %2178 = vmatprep.subr.bf16.mxu0 0
        %2179 = vmatpush1.bf16.msra.mxu0 0
        %2180 = vmatprep.subr.bf16.mxu0 0
        %2181 = vmatpush1.bf16.msra.mxu0 0
        %2182 = vmatprep.subr.bf16.mxu0 0
        %2183 = vmatpush1.bf16.msra.mxu0 0
        %2184 = vmatprep.subr.bf16.mxu0 0
        %2185 = vmatpush1.bf16.msra.mxu0 0
        %2186 = vmatprep.subr.bf16.mxu0 0
        %2187 = vmatpush1.bf16.msra.mxu0 0
        %2188 = vmatprep.subr.bf16.mxu0 0
        %2189 = vmatpush1.bf16.msra.mxu0 0
        %2190 = vmatprep.subr.bf16.mxu0 0
        %2191 = vmatpush1.bf16.msra.mxu0 0
        %2192 = vmatprep.subr.bf16.mxu0 0
        %2193 = vmatpush1.bf16.msra.mxu0 0
        %2194 = vmatprep.subr.bf16.mxu0 0
        %2195 = vmatpush1.bf16.msra.mxu0 0
        %2196 = vmatprep.subr.bf16.mxu0 0
        %2197 = vmatpush1.bf16.msra.mxu0 0
        %2198 = vmatprep.subr.bf16.mxu0 0
        %2199 = vmatpush1.bf16.msra.mxu0 0
        %2200 = vmatprep.subr.bf16.mxu0 0
        %2201 = vmatpush1.bf16.msra.mxu0 0
        %2202 = vmatprep.subr.bf16.mxu0 0
        %2203 = vmatpush1.bf16.msra.mxu0 0
        %2204 = vmatprep.mubr.bf16.mxu0 0
        %2205 = vmatmul.mubr.bf16.gmra.mrb[0].mxu0 %v2170
        %v2206 = vpop.f32.mrb[0].mxu0
        %v2207 = vadd.f32 0.0, %v2206
        %v2208 = vpop.f32.mrb[0].mxu0
        %v2209 = vpop.f32.mrb[0].mxu0
        %v2210 = vadd.f32 0.0, %v2209
        %v2211 = vpop.f32.mrb[0].mxu0
        %2212 = vdwg.mxu0
        %v2214 = vsel %vm2028, %v2119, 0
        %2216 = vmatprep.subr.bf16.mxu0 0
        %2217 = vmatpush1.bf16.msra.mxu0 %v2123
        %2218 = vmatprep.subr.bf16.mxu0 0
        %2219 = vmatpush1.bf16.msra.mxu0 0
        %2220 = vmatprep.subr.bf16.mxu0 0
        %2221 = vmatpush1.bf16.msra.mxu0 0
        %2222 = vmatprep.subr.bf16.mxu0 0
        %2223 = vmatpush1.bf16.msra.mxu0 0
        %2224 = vmatprep.subr.bf16.mxu0 0
        %2225 = vmatpush1.bf16.msra.mxu0 0
        %2226 = vmatprep.subr.bf16.mxu0 0
        %2227 = vmatpush1.bf16.msra.mxu0 0
        %2228 = vmatprep.subr.bf16.mxu0 0
        %2229 = vmatpush1.bf16.msra.mxu0 0
        %2230 = vmatprep.subr.bf16.mxu0 0
        %2231 = vmatpush1.bf16.msra.mxu0 0
        %2232 = vmatprep.subr.bf16.mxu0 0
        %2233 = vmatpush1.bf16.msra.mxu0 0
        %2234 = vmatprep.subr.bf16.mxu0 0
        %2235 = vmatpush1.bf16.msra.mxu0 0
        %2236 = vmatprep.subr.bf16.mxu0 0
        %2237 = vmatpush1.bf16.msra.mxu0 0
        %2238 = vmatprep.subr.bf16.mxu0 0
        %2239 = vmatpush1.bf16.msra.mxu0 0
        %2240 = vmatprep.subr.bf16.mxu0 0
        %2241 = vmatpush1.bf16.msra.mxu0 0
        %2242 = vmatprep.subr.bf16.mxu0 0
        %2243 = vmatpush1.bf16.msra.mxu0 0
        %2244 = vmatprep.subr.bf16.mxu0 0
        %2245 = vmatpush1.bf16.msra.mxu0 0
        %2246 = vmatprep.subr.bf16.mxu0 0
        %2247 = vmatpush1.bf16.msra.mxu0 0
        %2248 = vmatprep.mubr.bf16.mxu0 0
        %2249 = vmatmul.mubr.bf16.gmra.mrb[0].mxu0 %v2214
        %v2250 = vpop.f32.mrb[0].mxu0
        %v2251 = vadd.f32 0.0, %v2250
        %v2252 = vpop.f32.mrb[0].mxu0
        %v2253 = vpop.f32.mrb[0].mxu0
        %v2254 = vadd.f32 0.0, %v2253
        %v2255 = vpop.f32.mrb[0].mxu0
        %2256 = vdwg.mxu0
        %v2258 = vsel %vm2028, %v2120, 0
        %2260 = vmatprep.subr.bf16.mxu0 0
        %2261 = vmatpush1.bf16.msra.mxu0 %v2124
        %2262 = vmatprep.subr.bf16.mxu0 0
        %2263 = vmatpush1.bf16.msra.mxu0 0
        %2264 = vmatprep.subr.bf16.mxu0 0
        %2265 = vmatpush1.bf16.msra.mxu0 0
        %2266 = vmatprep.subr.bf16.mxu0 0
        %2267 = vmatpush1.bf16.msra.mxu0 0
        %2268 = vmatprep.subr.bf16.mxu0 0
        %2269 = vmatpush1.bf16.msra.mxu0 0
        %2270 = vmatprep.subr.bf16.mxu0 0
        %2271 = vmatpush1.bf16.msra.mxu0 0
        %2272 = vmatprep.subr.bf16.mxu0 0
        %2273 = vmatpush1.bf16.msra.mxu0 0
        %2274 = vmatprep.subr.bf16.mxu0 0
        %2275 = vmatpush1.bf16.msra.mxu0 0
        %2276 = vmatprep.subr.bf16.mxu0 0
        %2277 = vmatpush1.bf16.msra.mxu0 0
        %2278 = vmatprep.subr.bf16.mxu0 0
        %2279 = vmatpush1.bf16.msra.mxu0 0
        %2280 = vmatprep.subr.bf16.mxu0 0
        %2281 = vmatpush1.bf16.msra.mxu0 0
        %2282 = vmatprep.subr.bf16.mxu0 0
        %2283 = vmatpush1.bf16.msra.mxu0 0
        %2284 = vmatprep.subr.bf16.mxu0 0
        %2285 = vmatpush1.bf16.msra.mxu0 0
        %2286 = vmatprep.subr.bf16.mxu0 0
        %2287 = vmatpush1.bf16.msra.mxu0 0
        %2288 = vmatprep.subr.bf16.mxu0 0
        %2289 = vmatpush1.bf16.msra.mxu0 0
        %2290 = vmatprep.subr.bf16.mxu0 0
        %2291 = vmatpush1.bf16.msra.mxu0 0
        %2292 = vmatprep.mubr.bf16.mxu0 0
        %2293 = vmatmul.mubr.bf16.gmra.mrb[0].mxu0 %v2258
        %v2294 = vpop.f32.mrb[0].mxu0
        %v2295 = vadd.f32 0.0, %v2294
        %v2296 = vpop.f32.mrb[0].mxu0
        %v2297 = vpop.f32.mrb[0].mxu0
        %v2298 = vadd.f32 0.0, %v2297
        %v2299 = vpop.f32.mrb[0].mxu0
        %2300 = vdwg.mxu0
        %v2301 = vcombine.low %v2163, %v2251
        %v2302 = vcombine.high %v2163, %v2251
        %v2304 = vunpack.c.l.s4 1983009808
        %v2305 = vunpack.c.0.s8 %v2304
        %v2306 = vlaneseq
        %v2307 = vshrl.u32 %v2306, 7
        %v2308 = vsub.s32 %v2305, %v2307
        %v2309 = vrot.slane %v2301, %v2308
        %v2311 = vunpack.c.l.s4 1983009808
        %v2312 = vunpack.c.0.s8 %v2311
        %v2313 = vlaneseq
        %v2314 = vshrl.u32 %v2313, 7
        %v2315 = vsub.s32 %v2312, %v2314
        %v2316 = vrot.slane %v2302, %v2315
        %v2317 = vcombine.low %v2207, %v2295
        %v2318 = vcombine.high %v2207, %v2295
        %v2320 = vunpack.c.l.s4 1983009808
        %v2321 = vunpack.c.0.s8 %v2320
        %v2322 = vlaneseq
        %v2323 = vshrl.u32 %v2322, 7
        %v2324 = vsub.s32 %v2321, %v2323
        %v2325 = vrot.slane %v2317, %v2324
        %v2327 = vunpack.c.l.s4 1983009808
        %v2328 = vunpack.c.0.s8 %v2327
        %v2329 = vlaneseq
        %v2330 = vshrl.u32 %v2329, 7
        %v2331 = vsub.s32 %v2328, %v2330
        %v2332 = vrot.slane %v2318, %v2331
        %v2333 = vcombine.low %v2309, %v2325
        %v2334 = vcombine.high %v2309, %v2325
        %v2336 = vunpack.c.l.s4 1934713408
        %v2337 = vunpack.c.0.s8 %v2336
        %v2338 = vlaneseq
        %v2339 = vshrl.u32 %v2338, 7
        %v2340 = vsub.s32 %v2337, %v2339
        %v2341 = vrot.slane %v2333, %v2340
        %v2343 = vunpack.c.l.s4 1934713408
        %v2344 = vunpack.c.0.s8 %v2343
        %v2345 = vlaneseq
        %v2346 = vshrl.u32 %v2345, 7
        %v2347 = vsub.s32 %v2344, %v2346
        %v2348 = vrot.slane %v2334, %v2347
        %v2349 = vcombine.low %v2316, %v2332
        %v2350 = vcombine.high %v2316, %v2332
        %v2352 = vunpack.c.l.s4 1934713408
        %v2353 = vunpack.c.0.s8 %v2352
        %v2354 = vlaneseq
        %v2355 = vshrl.u32 %v2354, 7
        %v2356 = vsub.s32 %v2353, %v2355
        %v2357 = vrot.slane %v2349, %v2356
        %v2359 = vunpack.c.l.s4 1934713408
        %v2360 = vunpack.c.0.s8 %v2359
        %v2361 = vlaneseq
        %v2362 = vshrl.u32 %v2361, 7
        %v2363 = vsub.s32 %v2360, %v2362
        %v2364 = vrot.slane %v2350, %v2363
        %v2365 = vcombine.high %v2341, 0.0
        %v2366 = vcombine.high %v2348, 0.0
        %v2367 = vcombine.high %v2357, 0.0
        %v2368 = vcombine.high %v2364, 0.0
        %v2369 = vcombine.low %v2166, %v2254
        %v2370 = vcombine.high %v2166, %v2254
        %v2372 = vunpack.c.l.s4 1983009808
        %v2373 = vunpack.c.0.s8 %v2372
        %v2374 = vlaneseq
        %v2375 = vshrl.u32 %v2374, 7
        %v2376 = vsub.s32 %v2373, %v2375
        %v2377 = vrot.slane %v2369, %v2376
        %v2379 = vunpack.c.l.s4 1983009808
        %v2380 = vunpack.c.0.s8 %v2379
        %v2381 = vlaneseq
        %v2382 = vshrl.u32 %v2381, 7
        %v2383 = vsub.s32 %v2380, %v2382
        %v2384 = vrot.slane %v2370, %v2383
        %v2385 = vcombine.low %v2210, %v2298
        %v2386 = vcombine.high %v2210, %v2298
        %v2388 = vunpack.c.l.s4 1983009808
        %v2389 = vunpack.c.0.s8 %v2388
        %v2390 = vlaneseq
        %v2391 = vshrl.u32 %v2390, 7
        %v2392 = vsub.s32 %v2389, %v2391
        %v2393 = vrot.slane %v2385, %v2392
        %v2395 = vunpack.c.l.s4 1983009808
        %v2396 = vunpack.c.0.s8 %v2395
        %v2397 = vlaneseq
        %v2398 = vshrl.u32 %v2397, 7
        %v2399 = vsub.s32 %v2396, %v2398
        %v2400 = vrot.slane %v2386, %v2399
        %v2401 = vcombine.low %v2377, %v2393
        %v2402 = vcombine.high %v2377, %v2393
        %v2404 = vunpack.c.l.s4 1934713408
        %v2405 = vunpack.c.0.s8 %v2404
        %v2406 = vlaneseq
        %v2407 = vshrl.u32 %v2406, 7
        %v2408 = vsub.s32 %v2405, %v2407
        %v2409 = vrot.slane %v2401, %v2408
        %v2411 = vunpack.c.l.s4 1934713408
        %v2412 = vunpack.c.0.s8 %v2411
        %v2413 = vlaneseq
        %v2414 = vshrl.u32 %v2413, 7
        %v2415 = vsub.s32 %v2412, %v2414
        %v2416 = vrot.slane %v2402, %v2415
        %v2417 = vcombine.low %v2384, %v2400
        %v2418 = vcombine.high %v2384, %v2400
        %v2420 = vunpack.c.l.s4 1934713408
        %v2421 = vunpack.c.0.s8 %v2420
        %v2422 = vlaneseq
        %v2423 = vshrl.u32 %v2422, 7
        %v2424 = vsub.s32 %v2421, %v2423
        %v2425 = vrot.slane %v2417, %v2424
        %v2427 = vunpack.c.l.s4 1934713408
        %v2428 = vunpack.c.0.s8 %v2427
        %v2429 = vlaneseq
        %v2430 = vshrl.u32 %v2429, 7
        %v2431 = vsub.s32 %v2428, %v2430
        %v2432 = vrot.slane %v2418, %v2431
        %v2433 = vcombine.high %v2409, 0.0
        %v2434 = vcombine.high %v2416, 0.0
        %v2435 = vcombine.high %v2425, 0.0
        %v2436 = vcombine.high %v2432, 0.0
        %v2437 = vcombine.low %v2341, %v2348
        %v2439 = vunpack.c.l.s4 1983009808
        %v2440 = vunpack.c.0.s8 %v2439
        %v2441 = vlaneseq
        %v2442 = vshrl.u32 %v2441, 7
        %v2443 = vsub.s32 %v2440, %v2442
        %v2444 = vrot.slane %v2437, %v2443
        %v2445 = vcombine.low %v2365, %v2366
        %v2447 = vunpack.c.l.s4 1983009808
        %v2448 = vunpack.c.0.s8 %v2447
        %v2449 = vlaneseq
        %v2450 = vshrl.u32 %v2449, 7
        %v2451 = vsub.s32 %v2448, %v2450
        %v2452 = vrot.slane %v2445, %v2451
        %v2453 = vcombine.low %v2357, %v2364
        %v2455 = vunpack.c.l.s4 1983009808
        %v2456 = vunpack.c.0.s8 %v2455
        %v2457 = vlaneseq
        %v2458 = vshrl.u32 %v2457, 7
        %v2459 = vsub.s32 %v2456, %v2458
        %v2460 = vrot.slane %v2453, %v2459
        %v2461 = vcombine.low %v2367, %v2368
        %v2463 = vunpack.c.l.s4 1983009808
        %v2464 = vunpack.c.0.s8 %v2463
        %v2465 = vlaneseq
        %v2466 = vshrl.u32 %v2465, 7
        %v2467 = vsub.s32 %v2464, %v2466
        %v2468 = vrot.slane %v2461, %v2467
        %v2469 = vcombine.low %v2444, %v2452
        %v2470 = vcombine.high %v2444, %v2452
        %v2472 = vunpack.c.l.s4 1934713408
        %v2473 = vunpack.c.0.s8 %v2472
        %v2474 = vlaneseq
        %v2475 = vshrl.u32 %v2474, 7
        %v2476 = vsub.s32 %v2473, %v2475
        %v2477 = vrot.slane %v2469, %v2476
        %v2479 = vunpack.c.l.s4 1934713408
        %v2480 = vunpack.c.0.s8 %v2479
        %v2481 = vlaneseq
        %v2482 = vshrl.u32 %v2481, 7
        %v2483 = vsub.s32 %v2480, %v2482
        %v2484 = vrot.slane %v2470, %v2483
        %v2485 = vcombine.low %v2460, %v2468
        %v2486 = vcombine.high %v2460, %v2468
        %v2488 = vunpack.c.l.s4 1934713408
        %v2489 = vunpack.c.0.s8 %v2488
        %v2490 = vlaneseq
        %v2491 = vshrl.u32 %v2490, 7
        %v2492 = vsub.s32 %v2489, %v2491
        %v2493 = vrot.slane %v2485, %v2492
        %v2495 = vunpack.c.l.s4 1934713408
        %v2496 = vunpack.c.0.s8 %v2495
        %v2497 = vlaneseq
        %v2498 = vshrl.u32 %v2497, 7
        %v2499 = vsub.s32 %v2496, %v2498
        %v2500 = vrot.slane %v2486, %v2499
        %v2501 = vcombine.low %v2477, %v2493
        %v2502 = vcombine.high %v2477, %v2493
        %v2503 = vcombine.low %v2484, %v2500
        %v2504 = vcombine.high %v2484, %v2500
        %v2505 = vcombine.low %v2409, %v2416
        %v2507 = vunpack.c.l.s4 1983009808
        %v2508 = vunpack.c.0.s8 %v2507
        %v2509 = vlaneseq
        %v2510 = vshrl.u32 %v2509, 7
        %v2511 = vsub.s32 %v2508, %v2510
        %v2512 = vrot.slane %v2505, %v2511
        %v2513 = vcombine.low %v2433, %v2434
        %v2515 = vunpack.c.l.s4 1983009808
        %v2516 = vunpack.c.0.s8 %v2515
        %v2517 = vlaneseq
        %v2518 = vshrl.u32 %v2517, 7
        %v2519 = vsub.s32 %v2516, %v2518
        %v2520 = vrot.slane %v2513, %v2519
        %v2521 = vcombine.low %v2425, %v2432
        %v2523 = vunpack.c.l.s4 1983009808
        %v2524 = vunpack.c.0.s8 %v2523
        %v2525 = vlaneseq
        %v2526 = vshrl.u32 %v2525, 7
        %v2527 = vsub.s32 %v2524, %v2526
        %v2528 = vrot.slane %v2521, %v2527
        %v2529 = vcombine.low %v2435, %v2436
        %v2531 = vunpack.c.l.s4 1983009808
        %v2532 = vunpack.c.0.s8 %v2531
        %v2533 = vlaneseq
        %v2534 = vshrl.u32 %v2533, 7
        %v2535 = vsub.s32 %v2532, %v2534
        %v2536 = vrot.slane %v2529, %v2535
        %v2537 = vcombine.low %v2512, %v2520
        %v2538 = vcombine.high %v2512, %v2520
        %v2540 = vunpack.c.l.s4 1934713408
        %v2541 = vunpack.c.0.s8 %v2540
        %v2542 = vlaneseq
        %v2543 = vshrl.u32 %v2542, 7
        %v2544 = vsub.s32 %v2541, %v2543
        %v2545 = vrot.slane %v2537, %v2544
        %v2547 = vunpack.c.l.s4 1934713408
        %v2548 = vunpack.c.0.s8 %v2547
        %v2549 = vlaneseq
        %v2550 = vshrl.u32 %v2549, 7
        %v2551 = vsub.s32 %v2548, %v2550
        %v2552 = vrot.slane %v2538, %v2551
        %v2553 = vcombine.low %v2528, %v2536
        %v2554 = vcombine.high %v2528, %v2536
        %v2556 = vunpack.c.l.s4 1934713408
        %v2557 = vunpack.c.0.s8 %v2556
        %v2558 = vlaneseq
        %v2559 = vshrl.u32 %v2558, 7
        %v2560 = vsub.s32 %v2557, %v2559
        %v2561 = vrot.slane %v2553, %v2560
        %v2563 = vunpack.c.l.s4 1934713408
        %v2564 = vunpack.c.0.s8 %v2563
        %v2565 = vlaneseq
        %v2566 = vshrl.u32 %v2565, 7
        %v2567 = vsub.s32 %v2564, %v2566
        %v2568 = vrot.slane %v2554, %v2567
        %v2569 = vcombine.low %v2545, %v2561
        %v2570 = vcombine.high %v2545, %v2561
        %v2571 = vcombine.low %v2552, %v2568
        %v2572 = vcombine.high %v2552, %v2568
        %2575 = vrot.lane.b32.xlu0 %v2502, 32
        %v2576 = vpop.permute.xlu0 %2575
        %2577 = vrot.lane.b32.xlu0 %v2570, 32
        %v2578 = vpop.permute.xlu0 %2577
        %2583 = vrot.lane.b32.xlu0 %v2503, 64
        %v2584 = vpop.permute.xlu0 %2583
        %2585 = vrot.lane.b32.xlu0 %v2571, 64
        %v2586 = vpop.permute.xlu0 %2585
        %2591 = vrot.lane.b32.xlu0 %v2504, 96
        %v2592 = vpop.permute.xlu0 %2591
        %2593 = vrot.lane.b32.xlu0 %v2572, 96
        %v2594 = vpop.permute.xlu0 %2593
        %v2597 = vsel %vm1817, %v2501, %v2576
        %v2598 = vsel %vm1817, %v2569, %v2578
        %vm2599 = vcmask 523264
        %v2600 = vsel %vm2599, %v2597, %v2584
        %v2601 = vsel %vm2599, %v2598, %v2586
        %vm2602 = vcmask 785408
        %v2603 = vsel %vm2602, %v2600, %v2592
        %v2604 = vsel %vm2602, %v2601, %v2594
        %v2605 = vpack.c.bf16 %v2604, %v2603
        %v2606 = vld [vmem:[%s548] sm:$0xf]
        %v2607 = vld [vmem:[%s548 + $0x4] sm:$0xf]
        %v2608 = vld [vmem:[%s548 + $0x8] sm:$0xf]
        %v2609 = vld [vmem:[%s548 + $0xc] sm:$0xf]
        %v2610 = vld [vmem:[%s548 + $0x10] sm:$0xf]
        %v2611 = vld [vmem:[%s548 + $0x14] sm:$0xf]
        %v2612 = vld [vmem:[%s548 + $0x18] sm:$0xf]
        %v2613 = vld [vmem:[%s548 + $0x1c] sm:$0xf]
        %v2614 = vld [vmem:[%s548 + $0x20] sm:$0xf]
        %v2615 = vld [vmem:[%s548 + $0x24] sm:$0xf]
        %v2616 = vld [vmem:[%s548 + $0x28] sm:$0xf]
        %v2617 = vld [vmem:[%s548 + $0x2c] sm:$0xf]
        %v2618 = vld [vmem:[%s548 + $0x30] sm:$0xf]
        %v2619 = vld [vmem:[%s548 + $0x34] sm:$0xf]
        %v2620 = vld [vmem:[%s548 + $0x38] sm:$0xf]
        %v2621 = vld [vmem:[%s548 + $0x3c] sm:$0xf]
        %v2622 = vld [vmem:[%s584] sm:$0x1]
        %v2623 = vlaneseq
        %v2624 = vshrl.u32 %v2623, 7
        %v2625 = vsub.s32 0, %v2624
        %v2626 = vrot.slane %v2622, %v2625
        %v2643 = vunpack.c.l.b16 %v2606
        %v2644 = vunpack.c.l.b16 %v2607
        %v2645 = vunpack.c.l.b16 %v2608
        %v2646 = vunpack.c.l.b16 %v2609
        %v2647 = vunpack.c.l.b16 %v2610
        %v2648 = vunpack.c.l.b16 %v2611
        %v2649 = vunpack.c.l.b16 %v2612
        %v2650 = vunpack.c.l.b16 %v2613
        %v2651 = vunpack.c.l.b16 %v2614
        %v2652 = vunpack.c.l.b16 %v2615
        %v2653 = vunpack.c.l.b16 %v2616
        %v2654 = vunpack.c.l.b16 %v2617
        %v2655 = vunpack.c.l.b16 %v2618
        %v2656 = vunpack.c.l.b16 %v2619
        %v2657 = vunpack.c.l.b16 %v2620
        %v2658 = vunpack.c.l.b16 %v2621
        %v2659 = vpack.c.b16 %v2644, %v2643
        %v2660 = vpack.c.b16 %v2646, %v2645
        %v2661 = vpack.c.b16 %v2648, %v2647
        %v2662 = vpack.c.b16 %v2650, %v2649
        %v2663 = vpack.c.b16 %v2652, %v2651
        %v2664 = vpack.c.b16 %v2654, %v2653
        %v2665 = vpack.c.b16 %v2656, %v2655
        %v2666 = vpack.c.b16 %v2658, %v2657
        %2675 = vmatprep.subr.bf16.mxu0 0
        %2676 = vmatpush1.bf16.msra.mxu0 %v2659
        %2677 = vmatprep.subr.bf16.mxu0 0
        %2678 = vmatpush1.bf16.msra.mxu0 %v2660
        %2679 = vmatprep.subr.bf16.mxu0 0
        %2680 = vmatpush1.bf16.msra.mxu0 %v2661
        %2681 = vmatprep.subr.bf16.mxu0 0
        %2682 = vmatpush1.bf16.msra.mxu0 %v2662
        %2683 = vmatprep.subr.bf16.mxu0 0
        %2684 = vmatpush1.bf16.msra.mxu0 %v2663
        %2685 = vmatprep.subr.bf16.mxu0 0
        %2686 = vmatpush1.bf16.msra.mxu0 %v2664
        %2687 = vmatprep.subr.bf16.mxu0 0
        %2688 = vmatpush1.bf16.msra.mxu0 %v2665
        %2689 = vmatprep.subr.bf16.mxu0 0
        %2690 = vmatpush1.bf16.msra.mxu0 %v2666
        %2691 = vmatprep.subr.bf16.mxu0 0
        %2692 = vmatpush1.bf16.msra.mxu0 0
        %2693 = vmatprep.subr.bf16.mxu0 0
        %2694 = vmatpush1.bf16.msra.mxu0 0
        %2695 = vmatprep.subr.bf16.mxu0 0
        %2696 = vmatpush1.bf16.msra.mxu0 0
        %2697 = vmatprep.subr.bf16.mxu0 0
        %2698 = vmatpush1.bf16.msra.mxu0 0
        %2699 = vmatprep.subr.bf16.mxu0 0
        %2700 = vmatpush1.bf16.msra.mxu0 0
        %2701 = vmatprep.subr.bf16.mxu0 0
        %2702 = vmatpush1.bf16.msra.mxu0 0
        %2703 = vmatprep.subr.bf16.mxu0 0
        %2704 = vmatpush1.bf16.msra.mxu0 0
        %2705 = vmatprep.subr.bf16.mxu0 0
        %2706 = vmatpush1.bf16.msra.mxu0 0
        %2707 = vmatprep.mubr.bf16.mxu0 0
        %2708 = vmatmul.mubr.bf16.gmra.mrb[0].mxu0 %v2605
        %v2709 = vpop.f32.mrb[0].mxu0
        %v2710 = vadd.f32 %v2626, %v2709
        %v2711 = vpop.f32.mrb[0].mxu0
        %v2712 = vpop.f32.mrb[0].mxu0
        %v2713 = vadd.f32 %v2626, %v2712
        %v2714 = vpop.f32.mrb[0].mxu0
        %2715 = vdwg.mxu0
        %v2716 = vadd.f32 %v666, %v2710
        %v2717 = vadd.f32 %v667, %v2713
        %v2718 = vld [vmem:[%s584 + $0x1] sm:$0x1]
        %v2719 = vld [vmem:[%s584 + $0x2] sm:$0x1]
        %2720 = vadd.xlane.f32.xlu0 %v2716
        %v2721 = vpop.xlane.xlu0 %2720
        %2722 = vadd.xlane.f32.xlu0 %v2717
        %v2723 = vpop.xlane.xlu0 %2722
        %v2724 = vrcp.pop 128.0
        %v2725 = vmul.f32 %v2721, %v2724
        %v2726 = vmul.f32 %v2723, %v2724
        %v2727 = vsub.f32 %v2716, %v2725
        %v2728 = vsub.f32 %v2717, %v2726
        %v2729 = vmul.f32 %v2727, %v2727
        %v2730 = vmul.f32 %v2728, %v2728
        %2731 = vadd.xlane.f32.xlu0 %v2729
        %v2732 = vpop.xlane.xlu0 %2731
        %2733 = vadd.xlane.f32.xlu0 %v2730
        %v2734 = vpop.xlane.xlu0 %2733
        %v2735 = vmul.f32 %v2732, %v2724
        %v2736 = vmul.f32 %v2734, %v2724
        %v2737 = vadd.f32 %v2735, 1e-12
        %v2738 = vadd.f32 %v2736, 1e-12
        %v2739 = vrsqrt.pop %v2737
        %v2740 = vrsqrt.pop %v2738
        %v2741 = vmul.f32 %v2727, %v2739
        %v2742 = vmul.f32 %v2728, %v2740
        %v2743 = vlaneseq
        %v2744 = vshrl.u32 %v2743, 7
        %v2745 = vsub.s32 0, %v2744
        %v2746 = vrot.slane %v2718, %v2745
        %v2747 = vmul.f32 %v2741, %v2746
        %v2748 = vmul.f32 %v2742, %v2746
        %v2749 = vlaneseq
        %v2750 = vshrl.u32 %v2749, 7
        %v2751 = vsub.s32 0, %v2750
        %v2752 = vrot.slane %v2719, %v2751
        %v2753 = vadd.f32 %v2747, %v2752
        %v2754 = vadd.f32 %v2748, %v2752
        %v2755 = vpack.c.bf16 %v2754, %v2753
        %v2756 = vld [vmem:[%s557] sm:$0xff]
        %v2757 = vld [vmem:[%s557 + $0x8] sm:$0xff]
        %v2758 = vld [vmem:[%s557 + $0x10] sm:$0xff]
        %v2759 = vld [vmem:[%s557 + $0x18] sm:$0xff]
        %v2760 = vld [vmem:[%s557 + $0x20] sm:$0xff]
        %v2761 = vld [vmem:[%s557 + $0x28] sm:$0xff]
        %v2762 = vld [vmem:[%s557 + $0x30] sm:$0xff]
        %v2763 = vld [vmem:[%s557 + $0x38] sm:$0xff]
        %v2764 = vld [vmem:[%s557 + $0x40] sm:$0xff]
        %v2765 = vld [vmem:[%s557 + $0x48] sm:$0xff]
        %v2766 = vld [vmem:[%s557 + $0x50] sm:$0xff]
        %v2767 = vld [vmem:[%s557 + $0x58] sm:$0xff]
        %v2768 = vld [vmem:[%s557 + $0x60] sm:$0xff]
        %v2769 = vld [vmem:[%s557 + $0x68] sm:$0xff]
        %v2770 = vld [vmem:[%s557 + $0x70] sm:$0xff]
        %v2771 = vld [vmem:[%s557 + $0x78] sm:$0xff]
        %v2772 = vld [vmem:[%s566] sm:$0x3]
        %v2774 = vlaneseq
        %v2775 = vshrl.u32 %v2774, 7
        %v2776 = vsub.s32 0, %v2775
        %v2777 = vrot.slane %v2772, %v2776
        %v2778 = vlaneseq
        %v2779 = vshrl.u32 %v2778, 7
        %v2780 = vsub.s32 1, %v2779
        %v2781 = vrot.slane %v2772, %v2780
        %v2800 = vunpack.c.l.b16 %v2756
        %v2801 = vunpack.c.h.b16 %v2756
        %v2802 = vunpack.c.l.b16 %v2757
        %v2803 = vunpack.c.h.b16 %v2757
        %v2804 = vunpack.c.l.b16 %v2758
        %v2805 = vunpack.c.h.b16 %v2758
        %v2806 = vunpack.c.l.b16 %v2759
        %v2807 = vunpack.c.h.b16 %v2759
        %v2808 = vunpack.c.l.b16 %v2760
        %v2809 = vunpack.c.h.b16 %v2760
        %v2810 = vunpack.c.l.b16 %v2761
        %v2811 = vunpack.c.h.b16 %v2761
        %v2812 = vunpack.c.l.b16 %v2762
        %v2813 = vunpack.c.h.b16 %v2762
        %v2814 = vunpack.c.l.b16 %v2763
        %v2815 = vunpack.c.h.b16 %v2763
        %v2816 = vunpack.c.l.b16 %v2764
        %v2817 = vunpack.c.h.b16 %v2764
        %v2818 = vunpack.c.l.b16 %v2765
        %v2819 = vunpack.c.h.b16 %v2765
        %v2820 = vunpack.c.l.b16 %v2766
        %v2821 = vunpack.c.h.b16 %v2766
        %v2822 = vunpack.c.l.b16 %v2767
        %v2823 = vunpack.c.h.b16 %v2767
        %v2824 = vunpack.c.l.b16 %v2768
        %v2825 = vunpack.c.h.b16 %v2768
        %v2826 = vunpack.c.l.b16 %v2769
        %v2827 = vunpack.c.h.b16 %v2769
        %v2828 = vunpack.c.l.b16 %v2770
        %v2829 = vunpack.c.h.b16 %v2770
        %v2830 = vunpack.c.l.b16 %v2771
        %v2831 = vunpack.c.h.b16 %v2771
        %v2832 = vpack.c.b16 %v2802, %v2800
        %v2833 = vpack.c.b16 %v2803, %v2801
        %v2834 = vpack.c.b16 %v2806, %v2804
        %v2835 = vpack.c.b16 %v2807, %v2805
        %v2836 = vpack.c.b16 %v2810, %v2808
        %v2837 = vpack.c.b16 %v2811, %v2809
        %v2838 = vpack.c.b16 %v2814, %v2812
        %v2839 = vpack.c.b16 %v2815, %v2813
        %v2840 = vpack.c.b16 %v2818, %v2816
        %v2841 = vpack.c.b16 %v2819, %v2817
        %v2842 = vpack.c.b16 %v2822, %v2820
        %v2843 = vpack.c.b16 %v2823, %v2821
        %v2844 = vpack.c.b16 %v2826, %v2824
        %v2845 = vpack.c.b16 %v2827, %v2825
        %v2846 = vpack.c.b16 %v2830, %v2828
        %v2847 = vpack.c.b16 %v2831, %v2829
        %2864 = vmatprep.subr.bf16.mxu0 %v2833
        %2865 = vmatpush1.bf16.msra.mxu0 %v2832
        %2866 = vmatprep.subr.bf16.mxu0 %v2835
        %2867 = vmatpush1.bf16.msra.mxu0 %v2834
        %2868 = vmatprep.subr.bf16.mxu0 %v2837
        %2869 = vmatpush1.bf16.msra.mxu0 %v2836
        %2870 = vmatprep.subr.bf16.mxu0 %v2839
        %2871 = vmatpush1.bf16.msra.mxu0 %v2838
        %2872 = vmatprep.subr.bf16.mxu0 %v2841
        %2873 = vmatpush1.bf16.msra.mxu0 %v2840
        %2874 = vmatprep.subr.bf16.mxu0 %v2843
        %2875 = vmatpush1.bf16.msra.mxu0 %v2842
        %2876 = vmatprep.subr.bf16.mxu0 %v2845
        %2877 = vmatpush1.bf16.msra.mxu0 %v2844
        %2878 = vmatprep.subr.bf16.mxu0 %v2847
        %2879 = vmatpush1.bf16.msra.mxu0 %v2846
        %2880 = vmatprep.subr.bf16.mxu0 0
        %2881 = vmatpush1.bf16.msra.mxu0 0
        %2882 = vmatprep.subr.bf16.mxu0 0
        %2883 = vmatpush1.bf16.msra.mxu0 0
        %2884 = vmatprep.subr.bf16.mxu0 0
        %2885 = vmatpush1.bf16.msra.mxu0 0
        %2886 = vmatprep.subr.bf16.mxu0 0
        %2887 = vmatpush1.bf16.msra.mxu0 0
        %2888 = vmatprep.subr.bf16.mxu0 0
        %2889 = vmatpush1.bf16.msra.mxu0 0
        %2890 = vmatprep.subr.bf16.mxu0 0
        %2891 = vmatpush1.bf16.msra.mxu0 0
        %2892 = vmatprep.subr.bf16.mxu0 0
        %2893 = vmatpush1.bf16.msra.mxu0 0
        %2894 = vmatprep.subr.bf16.mxu0 0
        %2895 = vmatpush1.bf16.msra.mxu0 0
        %2896 = vmatprep.mubr.bf16.mxu0 0
        %2897 = vmatmul.mubr.bf16.gmra.mrb[0].mxu0 %v2755
        %v2898 = vpop.f32.mrb[0].mxu0
        %v2899 = vadd.f32 %v2777, %v2898
        %v2900 = vpop.f32.mrb[0].mxu0
        %v2901 = vadd.f32 %v2781, %v2900
        %v2902 = vpop.f32.mrb[0].mxu0
        %v2903 = vadd.f32 %v2777, %v2902
        %v2904 = vpop.f32.mrb[0].mxu0
        %v2905 = vadd.f32 %v2781, %v2904
        %2906 = vdwg.mxu0
        %v2907 = vmul.f32 %v2899, 0.5
        %v2908 = vmul.f32 %v2901, 0.5
        %v2909 = vmul.f32 %v2903, 0.5
        %v2910 = vmul.f32 %v2905, 0.5
        %v2911 = vmul.f32 %v2899, 0.044715
        %v2912 = vmul.f32 %v2901, 0.044715
        %v2913 = vmul.f32 %v2903, 0.044715
        %v2914 = vmul.f32 %v2905, 0.044715
        %v2915 = vmul.f32 %v2911, %v2899
        %v2916 = vmul.f32 %v2912, %v2901
        %v2917 = vmul.f32 %v2913, %v2903
        %v2918 = vmul.f32 %v2914, %v2905
        %v2919 = vmul.f32 %v2915, %v2899
        %v2920 = vmul.f32 %v2916, %v2901
        %v2921 = vmul.f32 %v2917, %v2903
        %v2922 = vmul.f32 %v2918, %v2905
        %v2923 = vadd.f32 %v2899, %v2919
        %v2924 = vadd.f32 %v2901, %v2920
        %v2925 = vadd.f32 %v2903, %v2921
        %v2926 = vadd.f32 %v2905, %v2922
        %v2927 = vmul.f32 %v2923, 0.7978846
        %v2928 = vmul.f32 %v2924, 0.7978846
        %v2929 = vmul.f32 %v2925, 0.7978846
        %v2930 = vmul.f32 %v2926, 0.7978846
        %v2931 = vtanh.pop %v2927
        %v2932 = vtanh.pop %v2928
        %v2933 = vtanh.pop %v2929
        %v2934 = vtanh.pop %v2930
        %v2935 = vadd.f32 %v2931, 1.0
        %v2936 = vadd.f32 %v2932, 1.0
        %v2937 = vadd.f32 %v2933, 1.0
        %v2938 = vadd.f32 %v2934, 1.0
        %v2939 = vmul.f32 %v2907, %v2935
        %v2940 = vmul.f32 %v2908, %v2936
        %v2941 = vmul.f32 %v2909, %v2937
        %v2942 = vmul.f32 %v2910, %v2938
        %v2943 = vpack.c.bf16 %v2941, %v2939
        %v2944 = vpack.c.bf16 %v2942, %v2940
        %v2945 = vld [vmem:[%s575] sm:$0xf]
        %v2946 = vld [vmem:[%s575 + $0x4] sm:$0xf]
        %v2947 = vld [vmem:[%s575 + $0x8] sm:$0xf]
        %v2948 = vld [vmem:[%s575 + $0xc] sm:$0xf]
        %v2949 = vld [vmem:[%s575 + $0x10] sm:$0xf]
        %v2950 = vld [vmem:[%s575 + $0x14] sm:$0xf]
        %v2951 = vld [vmem:[%s575 + $0x18] sm:$0xf]
        %v2952 = vld [vmem:[%s575 + $0x1c] sm:$0xf]
        %v2953 = vld [vmem:[%s575 + $0x20] sm:$0xf]
        %v2954 = vld [vmem:[%s575 + $0x24] sm:$0xf]
        %v2955 = vld [vmem:[%s575 + $0x28] sm:$0xf]
        %v2956 = vld [vmem:[%s575 + $0x2c] sm:$0xf]
        %v2957 = vld [vmem:[%s575 + $0x30] sm:$0xf]
        %v2958 = vld [vmem:[%s575 + $0x34] sm:$0xf]
        %v2959 = vld [vmem:[%s575 + $0x38] sm:$0xf]
        %v2960 = vld [vmem:[%s575 + $0x3c] sm:$0xf]
        %v2961 = vld [vmem:[%s575 + $0x40] sm:$0xf]
        %v2962 = vld [vmem:[%s575 + $0x44] sm:$0xf]
        %v2963 = vld [vmem:[%s575 + $0x48] sm:$0xf]
        %v2964 = vld [vmem:[%s575 + $0x4c] sm:$0xf]
        %v2965 = vld [vmem:[%s575 + $0x50] sm:$0xf]
        %v2966 = vld [vmem:[%s575 + $0x54] sm:$0xf]
        %v2967 = vld [vmem:[%s575 + $0x58] sm:$0xf]
        %v2968 = vld [vmem:[%s575 + $0x5c] sm:$0xf]
        %v2969 = vld [vmem:[%s575 + $0x60] sm:$0xf]
        %v2970 = vld [vmem:[%s575 + $0x64] sm:$0xf]
        %v2971 = vld [vmem:[%s575 + $0x68] sm:$0xf]
        %v2972 = vld [vmem:[%s575 + $0x6c] sm:$0xf]
        %v2973 = vld [vmem:[%s575 + $0x70] sm:$0xf]
        %v2974 = vld [vmem:[%s575 + $0x74] sm:$0xf]
        %v2975 = vld [vmem:[%s575 + $0x78] sm:$0xf]
        %v2976 = vld [vmem:[%s575 + $0x7c] sm:$0xf]
        %v2977 = vld [vmem:[%s584 + $0x3] sm:$0x1]
        %v2978 = vlaneseq
        %v2979 = vshrl.u32 %v2978, 7
        %v2980 = vsub.s32 0, %v2979
        %v2981 = vrot.slane %v2977, %v2980
        %v3014 = vunpack.c.l.b16 %v2945
        %v3015 = vunpack.c.l.b16 %v2946
        %v3016 = vunpack.c.l.b16 %v2947
        %v3017 = vunpack.c.l.b16 %v2948
        %v3018 = vunpack.c.l.b16 %v2949
        %v3019 = vunpack.c.l.b16 %v2950
        %v3020 = vunpack.c.l.b16 %v2951
        %v3021 = vunpack.c.l.b16 %v2952
        %v3022 = vunpack.c.l.b16 %v2953
        %v3023 = vunpack.c.l.b16 %v2954
        %v3024 = vunpack.c.l.b16 %v2955
        %v3025 = vunpack.c.l.b16 %v2956
        %v3026 = vunpack.c.l.b16 %v2957
        %v3027 = vunpack.c.l.b16 %v2958
        %v3028 = vunpack.c.l.b16 %v2959
        %v3029 = vunpack.c.l.b16 %v2960
        %v3030 = vunpack.c.l.b16 %v2961
        %v3031 = vunpack.c.l.b16 %v2962
        %v3032 = vunpack.c.l.b16 %v2963
        %v3033 = vunpack.c.l.b16 %v2964
        %v3034 = vunpack.c.l.b16 %v2965
        %v3035 = vunpack.c.l.b16 %v2966
        %v3036 = vunpack.c.l.b16 %v2967
        %v3037 = vunpack.c.l.b16 %v2968
        %v3038 = vunpack.c.l.b16 %v2969
        %v3039 = vunpack.c.l.b16 %v2970
        %v3040 = vunpack.c.l.b16 %v2971
        %v3041 = vunpack.c.l.b16 %v2972
        %v3042 = vunpack.c.l.b16 %v2973
        %v3043 = vunpack.c.l.b16 %v2974
        %v3044 = vunpack.c.l.b16 %v2975
        %v3045 = vunpack.c.l.b16 %v2976
        %v3046 = vpack.c.b16 %v3015, %v3014
        %v3047 = vpack.c.b16 %v3017, %v3016
        %v3048 = vpack.c.b16 %v3019, %v3018
        %v3049 = vpack.c.b16 %v3021, %v3020
        %v3050 = vpack.c.b16 %v3023, %v3022
        %v3051 = vpack.c.b16 %v3025, %v3024
        %v3052 = vpack.c.b16 %v3027, %v3026
        %v3053 = vpack.c.b16 %v3029, %v3028
        %v3054 = vpack.c.b16 %v3031, %v3030
        %v3055 = vpack.c.b16 %v3033, %v3032
        %v3056 = vpack.c.b16 %v3035, %v3034
        %v3057 = vpack.c.b16 %v3037, %v3036
        %v3058 = vpack.c.b16 %v3039, %v3038
        %v3059 = vpack.c.b16 %v3041, %v3040
        %v3060 = vpack.c.b16 %v3043, %v3042
        %v3061 = vpack.c.b16 %v3045, %v3044
        %3078 = vmatprep.subr.bf16.mxu0 0
        %3079 = vmatpush1.bf16.msra.mxu0 %v3046
        %3080 = vmatprep.subr.bf16.mxu0 0
        %3081 = vmatpush1.bf16.msra.mxu0 %v3047
        %3082 = vmatprep.subr.bf16.mxu0 0
        %3083 = vmatpush1.bf16.msra.mxu0 %v3048
        %3084 = vmatprep.subr.bf16.mxu0 0
        %3085 = vmatpush1.bf16.msra.mxu0 %v3049
        %3086 = vmatprep.subr.bf16.mxu0 0
        %3087 = vmatpush1.bf16.msra.mxu0 %v3050
        %3088 = vmatprep.subr.bf16.mxu0 0
        %3089 = vmatpush1.bf16.msra.mxu0 %v3051
        %3090 = vmatprep.subr.bf16.mxu0 0
        %3091 = vmatpush1.bf16.msra.mxu0 %v3052
        %3092 = vmatprep.subr.bf16.mxu0 0
        %3093 = vmatpush1.bf16.msra.mxu0 %v3053
        %3094 = vmatprep.subr.bf16.mxu0 0
        %3095 = vmatpush1.bf16.msra.mxu0 %v3054
        %3096 = vmatprep.subr.bf16.mxu0 0
        %3097 = vmatpush1.bf16.msra.mxu0 %v3055
        %3098 = vmatprep.subr.bf16.mxu0 0
        %3099 = vmatpush1.bf16.msra.mxu0 %v3056
        %3100 = vmatprep.subr.bf16.mxu0 0
        %3101 = vmatpush1.bf16.msra.mxu0 %v3057
        %3102 = vmatprep.subr.bf16.mxu0 0
        %3103 = vmatpush1.bf16.msra.mxu0 %v3058
        %3104 = vmatprep.subr.bf16.mxu0 0
        %3105 = vmatpush1.bf16.msra.mxu0 %v3059
        %3106 = vmatprep.subr.bf16.mxu0 0
        %3107 = vmatpush1.bf16.msra.mxu0 %v3060
        %3108 = vmatprep.subr.bf16.mxu0 0
        %3109 = vmatpush1.bf16.msra.mxu0 %v3061
        %3110 = vmatprep.mubr.bf16.mxu0 %v2944
        %3111 = vmatmul.mubr.bf16.gmra.mrb[0].mxu0 %v2943
        %v3112 = vpop.f32.mrb[0].mxu0
        %v3113 = vadd.f32 %v2981, %v3112
        %v3114 = vpop.f32.mrb[0].mxu0
        %v3115 = vpop.f32.mrb[0].mxu0
        %v3116 = vadd.f32 %v2981, %v3115
        %v3117 = vpop.f32.mrb[0].mxu0
        %3118 = vdwg.mxu0
        %v3119 = vadd.f32 %v2753, %v3113
        %v3120 = vadd.f32 %v2754, %v3116
        %v3121 = vld [vmem:[%s584 + $0x4] sm:$0x1]
        %v3122 = vld [vmem:[%s584 + $0x5] sm:$0x1]
        %3123 = vadd.xlane.f32.xlu0 %v3119
        %v3124 = vpop.xlane.xlu0 %3123
        %3125 = vadd.xlane.f32.xlu0 %v3120
        %v3126 = vpop.xlane.xlu0 %3125
        %v3127 = vmul.f32 %v3124, %v2724
        %v3128 = vmul.f32 %v3126, %v2724
        %v3129 = vsub.f32 %v3119, %v3127
        %v3130 = vsub.f32 %v3120, %v3128
        %v3131 = vmul.f32 %v3129, %v3129
        %v3132 = vmul.f32 %v3130, %v3130
        %3133 = vadd.xlane.f32.xlu0 %v3131
        %v3134 = vpop.xlane.xlu0 %3133
        %3135 = vadd.xlane.f32.xlu0 %v3132
        %v3136 = vpop.xlane.xlu0 %3135
        %v3137 = vmul.f32 %v3134, %v2724
        %v3138 = vmul.f32 %v3136, %v2724
        %v3139 = vadd.f32 %v3137, 1e-12
        %v3140 = vadd.f32 %v3138, 1e-12
        %v3141 = vrsqrt.pop %v3139
        %v3142 = vrsqrt.pop %v3140
        %v3143 = vmul.f32 %v3129, %v3141
        %v3144 = vmul.f32 %v3130, %v3142
        %v3145 = vlaneseq
        %v3146 = vshrl.u32 %v3145, 7
        %v3147 = vsub.s32 0, %v3146
        %v3148 = vrot.slane %v3121, %v3147
        %v3149 = vmul.f32 %v3143, %v3148
        %v3150 = vmul.f32 %v3144, %v3148
        %v3151 = vlaneseq
        %v3152 = vshrl.u32 %v3151, 7
        %v3153 = vsub.s32 0, %v3152
        %v3154 = vrot.slane %v3122, %v3153
        %v3155 = vadd.f32 %v3149, %v3154
        %v3156 = vadd.f32 %v3150, %v3154
        %3157 = vst [vmem:[#allocation2] sm:$0xff] %v3155
        %3158 = vst [vmem:[#allocation2 + $0x8] sm:$0xff] %v3156
        %p3159 = scmp.eq.s32.totalorder %s43, 1
        // Predicated region
        $region97: #{sentence_transformer_forward.1} parent=55 // pred_check
          %p3160 = pneg %p3159
        $region98: #{sentence_transformer_forward.1} parent=55 // pred_check_branch
          %3162 = sbr.rel (%p3160) target = $region100
        $region99: #{sentence_transformer_forward.1} parent=55 // pred_region
          %v3164 = vsel %vm2028, %v668, 0
          %3166 = vmatprep.subr.mxu0 0.0
          %3167 = vmatpush1.msra.mxu0 %v3155
          %3168 = vmatprep.subr.mxu0 0.0
          %3169 = vmatpush1.msra.mxu0 %v3156
          %3170 = vmatprep.subr.mxu0 0.0
          %3171 = vmatpush1.msra.mxu0 0.0
          %3172 = vmatprep.subr.mxu0 0.0
          %3173 = vmatpush1.msra.mxu0 0.0
          %3174 = vmatprep.subr.mxu0 0.0
          %3175 = vmatpush1.msra.mxu0 0.0
          %3176 = vmatprep.subr.mxu0 0.0
          %3177 = vmatpush1.msra.mxu0 0.0
          %3178 = vmatprep.subr.mxu0 0.0
          %3179 = vmatpush1.msra.mxu0 0.0
          %3180 = vmatprep.subr.mxu0 0.0
          %3181 = vmatpush1.msra.mxu0 0.0
          %3182 = vmatprep.subr.mxu0 0.0
          %3183 = vmatpush1.msra.mxu0 0.0
          %3184 = vmatprep.subr.mxu0 0.0
          %3185 = vmatpush1.msra.mxu0 0.0
          %3186 = vmatprep.subr.mxu0 0.0
          %3187 = vmatpush1.msra.mxu0 0.0
          %3188 = vmatprep.subr.mxu0 0.0
          %3189 = vmatpush1.msra.mxu0 0.0
          %3190 = vmatprep.subr.mxu0 0.0
          %3191 = vmatpush1.msra.mxu0 0.0
          %3192 = vmatprep.subr.mxu0 0.0
          %3193 = vmatpush1.msra.mxu0 0.0
          %3194 = vmatprep.subr.mxu0 0.0
          %3195 = vmatpush1.msra.mxu0 0.0
          %3196 = vmatprep.subr.mxu0 0.0
          %3197 = vmatpush1.msra.mxu0 0.0
          %3198 = vmatprep.subr.mxu0 0.0
          %3199 = vmatpush1.msra.mxu0 0.0
          %3200 = vmatprep.subr.mxu0 0.0
          %3201 = vmatpush1.msra.mxu0 0.0
          %3202 = vmatprep.subr.mxu0 0.0
          %3203 = vmatpush1.msra.mxu0 0.0
          %3204 = vmatprep.subr.mxu0 0.0
          %3205 = vmatpush1.msra.mxu0 0.0
          %3206 = vmatprep.subr.mxu0 0.0
          %3207 = vmatpush1.msra.mxu0 0.0
          %3208 = vmatprep.subr.mxu0 0.0
          %3209 = vmatpush1.msra.mxu0 0.0
          %3210 = vmatprep.subr.mxu0 0.0
          %3211 = vmatpush1.msra.mxu0 0.0
          %3212 = vmatprep.subr.mxu0 0.0
          %3213 = vmatpush1.msra.mxu0 0.0
          %3214 = vmatprep.subr.mxu0 0.0
          %3215 = vmatpush1.msra.mxu0 0.0
          %3216 = vmatprep.subr.mxu0 0.0
          %3217 = vmatpush1.msra.mxu0 0.0
          %3218 = vmatprep.subr.mxu0 0.0
          %3219 = vmatpush1.msra.mxu0 0.0
          %3220 = vmatprep.subr.mxu0 0.0
          %3221 = vmatpush1.msra.mxu0 0.0
          %3222 = vmatprep.subr.mxu0 0.0
          %3223 = vmatpush1.msra.mxu0 0.0
          %3224 = vmatprep.subr.mxu0 0.0
          %3225 = vmatpush1.msra.mxu0 0.0
          %3226 = vmatprep.subr.mxu0 0.0
          %3227 = vmatpush1.msra.mxu0 0.0
          %3228 = vmatprep.subr.mxu0 0.0
          %3229 = vmatpush1.msra.mxu0 0.0
          %3230 = vmatprep.mubr.f32.mxu0 0.0
          %3231 = vmatmul.mubr.f32.gmra.mrb[0].mxu0 %v3164
          %v3232 = vpop.f32.mrb[0].mxu0
          %v3233 = vadd.f32 0.0, %v3232
          %v3234 = vpop.f32.mrb[0].mxu0
          %3235 = vdwg.mxu0
          %vm3236 = vcmask 122880
          %v3237 = vsel %vm3236, %v668, 0.0
          %3238 = vadd.xlane.f32.xlu0 %v3237
          %v3239 = vpop.xlane.xlu0 %3238
          %v3240 = vmax.f32 %v3239, 1e-09
          %v3241 = vrcp.pop %v3240
          %v3242 = vmul.f32 %v3233, %v3241
          %v3243 = vmul.f32 %v3242, %v3242
          %vm3244 = vcmask 1040384
          %v3245 = vsel %vm3244, %v3243, 0.0
          %3246 = vadd.xlane.f32.xlu0 %v3245
          %v3247 = vpop.xlane.xlu0 %3246
          %v3248 = vmax.f32 %v3247, 1e-24
          %v3249 = vrsqrt.pop %v3248
          %v3250 = vmul.f32 %v3242, %v3249
          %3251 = vst [vmem:[%s656] sm:$0x1] %v3250
        $region100: #{sentence_transformer_forward.1} parent=55 // pred_fallthru
          _
        %s3252 = sand.u32 %s292, 1
        %s3253 = scalar_lea.sflag [#allocation5], %s3252
        %s3254 = sand.u32 %s292, 1
        %s3255 = scalar_lea.vmem [#allocation18], %s3254
        // Predicated region
        $region101: #{sentence_transformer_forward.1} parent=55 // pred_check
          %p3256 = pneg %p302
        $region102: #{sentence_transformer_forward.1} parent=55 // pred_check_branch
          %3258 = sbr.rel (%p3256) target = $region104
        $region103: #{sentence_transformer_forward.1} parent=55 // pred_region
          %s3260 = ssub.s32 16, 16
          %3261 = vsyncadd %s3253, %s3260
          %s3262 = smul.addr %s42, 16
          %s3263 = scalar_lea.hbm %s9, %s3262
          %s3265 = sshll.u32 %s3255, 4
          %s3266 = int_to_ptr.vmem [resolvable:$true] %s3265
          %3268 = dma.vmem_to_hbm [thread:$0]  %s3266, 16, %s3263, %s3253
        $region104: #{sentence_transformer_forward.1} parent=55 // pred_fallthru
          _
      $region56: #{sentence_transformer_forward.1} parent=5 // pred_fallthru
        _
      %p3269 = scmp.le.s32.totalorder 2, %s33
      // Predicated region
      $region105: #{sentence_transformer_forward.1} parent=5 // pred_check
        %p3270 = pneg %p3269
      $region106: #{sentence_transformer_forward.1} parent=5 // pred_check_branch
        %3272 = sbr.rel (%p3270) target = $region108
      $region107: #{sentence_transformer_forward.1} parent=5 // pred_region
        %s3273 = ssub.s32 %s33, 2
        // Predicated region
        $region109: #{sentence_transformer_forward.1} parent=107 // pred_check
          %p3274 = pneg %p308
        $region110: #{sentence_transformer_forward.1} parent=107 // pred_check_branch
          %3276 = sbr.rel (%p3274) target = $region112
        $region111: #{sentence_transformer_forward.1} parent=107 // pred_region
          %s3277 = sand.u32 %s293, 1
          %s3278 = scalar_lea.sflag [#allocation5], %s3277
          %s3279 = sand.u32 %s293, 1
          %s3280 = scalar_lea.vmem [#allocation18], %s3279
          %3281 = dma.done %s3278, 16
        $region112: #{sentence_transformer_forward.1} parent=107 // pred_fallthru
          _
      $region108: #{sentence_transformer_forward.1} parent=5 // pred_fallthru
        _
    $region6: #{sentence_transformer_forward.1} parent=1 // loop_footer
      %s37 = sadd.s32 1, %s33
    $region7: #{sentence_transformer_forward.1} parent=1 // loop_footer_branch
      %32 = sbr.rel target = $region3
    $region8: #{sentence_transformer_forward.1} parent=1 // loop_exit
      _
    %3282 = vsyncpa [#allocation4], 1
    %s3283 = scalar_lea.sflag [#allocation4], 1
    %3284 = vsyncpa %s3283, 1
    %3285 = vsyncpa [#allocation7], 1
    %s3286 = scalar_lea.sflag [#allocation7], 1
    %3287 = vsyncpa %s3286, 1
    %3288 = vsyncpa [#allocation10], 1
    %s3289 = scalar_lea.sflag [#allocation10], 1
    %3290 = vsyncpa %s3289, 1
    %3291 = vsyncpa [#allocation13], 1
    %s3292 = scalar_lea.sflag [#allocation13], 1
    %3293 = vsyncpa %s3292, 1
    %3294 = vsyncpa [#allocation16], 1
    %s3295 = scalar_lea.sflag [#allocation16], 1
    %3296 = vsyncpa %s3295, 1
    %3297 = vsyncpa [#allocation5], 1
    %s3298 = scalar_lea.sflag [#allocation5], 1
    %3299 = vsyncpa %s3298, 1

</llo_original>
